<compile_context>
chip_gen: v7x
topology: tpu7x:2x2x1
jax: 0.10.0
libtpu: 0.0.40
codegen_flags: <defaults>
</compile_context>

<pallas_src>
import jax
import jax.numpy as jnp
from jax import lax
from jax.experimental import pallas as pl
from jax.experimental.pallas import tpu as pltpu


# ---------------------------------------------------------------------------
# Config (mirrors my_config, with small batch/seq for the demo)
# ---------------------------------------------------------------------------
EMBEDDING_SIZE = 256
HIDDEN_SIZE = 128
NUM_LAYERS = 2          # fused kernel below hard-codes the 2-layer structure
OUTPUT_SIZE = 2

BATCH = 4
SEQ_LEN = 8


# ---------------------------------------------------------------------------
# Fused 2-layer LSTM kernel (wavefront). Gate order matches PyTorch: [i, f, g, o].
# The i/f/o columns of all gate weights/biases arrive pre-scaled by 0.5 so that
# sigmoid(z) = 0.5 * tanh(0.5 z) + 0.5 needs only ONE slab tanh per layer-step.
# ---------------------------------------------------------------------------
def _make_fused_lstm_kernel(T, Bp, H):
    BF16 = jnp.bfloat16

    def gates_to_hc(g, c):
        y = jnp.tanh(g)                              # one EUP push over the whole slab
        i = 0.5 * y[:, 0 * H:1 * H] + 0.5            # sigmoid of the unscaled preact
        f = 0.5 * y[:, 1 * H:2 * H] + 0.5
        gg = y[:, 2 * H:3 * H]                       # g column was NOT pre-scaled
        o = 0.5 * y[:, 3 * H:4 * H] + 0.5
        c_new = f * c + i * gg
        h_new = o * jnp.tanh(c_new)
        return h_new, c_new

    def kernel(x_ref,               # (T*Bp, E)  bf16  time-major, batch-padded
               w0ih_ref,            # (E, 4H)    bf16  layer-0 W_ih^T (gate-prescaled)
               b0_ref,              # (1, 4H)    f32   layer-0 bias   (gate-prescaled)
               w01_hbm,             # (H, 8H)    bf16  [W0hh^T | W1ih^T]   (pl.ANY)
               w1hh_hbm,            # (H, 4H)    bf16  layer-1 W_hh^T      (pl.ANY)
               b1_hbm,              # (1, 4H)    f32   layer-1 bias        (pl.ANY)
               h0_hbm, c0_hbm,      # (2, Bp, H) f32   initial states      (pl.ANY)
               hn_ref,              # (2, Bp, H) f32   output h_n
               xproj_sc,            # (T*Bp, 4H) f32   scratch
               w01_vm, w1hh_vm, b1_vm, h0_vm, c0_vm,  # VMEM landing buffers
               dma_sem):
        # Kick off HBM->VMEM copies of everything the recurrence (but not the prologue
        # matmul) needs; they overlap with the hoisted input projection below.
        copies = (
            pltpu.make_async_copy(w01_hbm, w01_vm, dma_sem.at[0]),
            pltpu.make_async_copy(w1hh_hbm, w1hh_vm, dma_sem.at[1]),
            pltpu.make_async_copy(b1_hbm, b1_vm, dma_sem.at[2]),
            pltpu.make_async_copy(h0_hbm, h0_vm, dma_sem.at[3]),
            pltpu.make_async_copy(c0_hbm, c0_vm, dma_sem.at[4]),
        )
        for cp in copies:
            cp.start()

        # Prologue: layer-0 input projection for ALL timesteps in one MXU call
        # (bf16 operands, f32 accumulation); bias folded in here, off the serial path.
        xproj_sc[...] = (
            jnp.dot(x_ref[...], w0ih_ref[...], preferred_element_type=jnp.float32)
            + b0_ref[...]
        )

        for cp in copies:
            cp.wait()

        # Loop-invariant bias broadcast hoisted out of the unrolled recurrence.
        b1 = jnp.broadcast_to(b1_vm[...], (Bp, 4 * H))

        # ---- Wavefront prologue: layer-0 step 0 ----
        d = jnp.dot(h0_vm[0].astype(BF16), w01_vm[...],
                    preferred_element_type=jnp.float32)
        g0 = xproj_sc[pl.ds(0, Bp), :] + d[:, :4 * H]
        h0, c0 = gates_to_hc(g0, c0_vm[0])

        # ---- Steady state: iteration t does layer-0 step t AND layer-1 step t-1 ----
        # Both matmuls and both gate blocks are mutually independent within an iteration.
        def step(t, carry):
            h0, c0, h1, c1 = carry
            # One dot serves both layers: cols [:4H] = h0 @ W0hh (L0 recurrence),
            # cols [4H:] = h0 @ W1ih (L1 input term). Independent of the W1hh dot.
            d01 = jnp.dot(h0.astype(BF16), w01_vm[...],
                          preferred_element_type=jnp.float32)
            d1h = jnp.dot(h1.astype(BF16), w1hh_vm[...],
                          preferred_element_type=jnp.float32)
            g0 = xproj_sc[pl.ds(pl.multiple_of(t * Bp, Bp), Bp), :] + d01[:, :4 * H]
            g1 = d01[:, 4 * H:] + d1h + b1
            h0n, c0n = gates_to_hc(g0, c0)   # layer 0, step t
            h1n, c1n = gates_to_hc(g1, c1)   # layer 1, step t-1
            return (h0n, c0n, h1n, c1n)

        h0, c0, h1, c1 = lax.fori_loop(
            1, T, step, (h0, c0, h0_vm[1], c0_vm[1]), unroll=True)

        # ---- Wavefront epilogue: layer-1 step T-1 ----
        d01 = jnp.dot(h0.astype(BF16), w01_vm[...],
                      preferred_element_type=jnp.float32)
        d1h = jnp.dot(h1.astype(BF16), w1hh_vm[...],
                      preferred_element_type=jnp.float32)
        h1, c1 = gates_to_hc(d01[:, 4 * H:] + d1h + b1, c1)

        # h_n written exactly once (lane-dense (2, Bp, 128) f32 store).
        hn_ref[0] = h0
        hn_ref[1] = h1

    return kernel


def fused_lstm_pallas(x2d, w0ih, b0, w01, w1hh, b1, h0_all, c0_all, *, T, Bp, H):
    vmem = pl.BlockSpec(memory_space=pltpu.MemorySpace.VMEM)
    hbm = pl.BlockSpec(memory_space=pl.ANY)
    kernel = _make_fused_lstm_kernel(T, Bp, H)
    return pl.pallas_call(
        kernel,
        out_shape=jax.ShapeDtypeStruct((2, Bp, H), jnp.float32),
        in_specs=[vmem, vmem, vmem,              # prologue operands: auto-DMA'd to VMEM
                  hbm, hbm, hbm, hbm, hbm],      # loop-only operands: manual overlapped DMA
        out_specs=vmem,
        scratch_shapes=[
            pltpu.VMEM((T * Bp, 4 * H), jnp.float32),   # xproj
            pltpu.VMEM((H, 8 * H), jnp.bfloat16),       # [W0hh^T | W1ih^T]
            pltpu.VMEM((H, 4 * H), jnp.bfloat16),       # W1hh^T
            pltpu.VMEM((1, 4 * H), jnp.float32),        # b1
            pltpu.VMEM((2, Bp, H), jnp.float32),        # h_0
            pltpu.VMEM((2, Bp, H), jnp.float32),        # c_0
            pltpu.SemaphoreType.DMA((5,)),
        ],
        # NOTE(v7x): single grid-less invocation -> one TensorCore; at this batch (Bp=16)
        # that is the right call. Add a parallel batch grid axis when batch grows.
    )(x2d, w0ih, b0, w01, w1hh, b1, h0_all, c0_all)


# ---------------------------------------------------------------------------
# stateRefactor.forward equivalent
# ---------------------------------------------------------------------------
@jax.jit
def state_refactor_forward(x_bte, kparams, h0_all, c0_all):
    """x_bte: [B, T, E] float32 (batch_first, like PyTorch). Returns h_n [L, B, H]."""
    B, T, E = x_bte.shape
    H = HIDDEN_SIZE
    Bp = ((B + 15) // 16) * 16       # full packed bf16 sublane tile for the MXU LHS
    pad = Bp - B

    x = jnp.transpose(x_bte, (1, 0, 2))                    # time-major [T, B, E]
    x = jnp.pad(x, ((0, 0), (0, pad), (0, 0)))             # [T, Bp, E]
    x2d = x.reshape(T * Bp, E).astype(jnp.bfloat16)

    h0p = jnp.pad(h0_all, ((0, 0), (0, pad), (0, 0)))      # [2, Bp, H]
    c0p = jnp.pad(c0_all, ((0, 0), (0, pad), (0, 0)))

    hn = fused_lstm_pallas(
        x2d, kparams["w0ih"], kparams["b0"],
        kparams["w01"], kparams["w1hh"], kparams["b1"],
        h0p, c0p, T=T, Bp=Bp, H=H)

    h_n = hn[:, :B, :]                                     # [num_layers, B, H]

    # pred = linear(output)[:, -1, :] -- output[:, -1, :] == h_n of the top layer;
    # computed for fidelity, then discarded exactly like the PyTorch forward (DCE'd).
    pred = h_n[1] @ kparams["lin_w_t"] + kparams["lin_b"]
    del pred

    return h_n


# ---------------------------------------------------------------------------
# Parameters: canonical (f32, transposed so the kernel does x @ W) + one-time
# kernel-layout preparation (gate pre-scale fold, bf16 cast, column stacking).
# ---------------------------------------------------------------------------
def init_params(key):
    H, E = HIDDEN_SIZE, EMBEDDING_SIZE
    bound = 1.0 / jnp.sqrt(H)
    p = {}
    key, k1, k2, k3, k4 = jax.random.split(key, 5)
    p["l0_wih_t"] = jax.random.uniform(k1, (E, 4 * H), jnp.float32, -bound, bound)
    p["l0_whh_t"] = jax.random.uniform(k2, (H, 4 * H), jnp.float32, -bound, bound)
    p["l0_b"] = (jax.random.uniform(k3, (4 * H,), jnp.float32, -bound, bound)
                 + jax.random.uniform(k4, (4 * H,), jnp.float32, -bound, bound)
                 ).reshape(1, 4 * H)
    key, k1, k2, k3, k4 = jax.random.split(key, 5)
    p["l1_wih_t"] = jax.random.uniform(k1, (H, 4 * H), jnp.float32, -bound, bound)
    p["l1_whh_t"] = jax.random.uniform(k2, (H, 4 * H), jnp.float32, -bound, bound)
    p["l1_b"] = (jax.random.uniform(k3, (4 * H,), jnp.float32, -bound, bound)
                 + jax.random.uniform(k4, (4 * H,), jnp.float32, -bound, bound)
                 ).reshape(1, 4 * H)
    key, k5, k6 = jax.random.split(key, 3)
    p["lin_w_t"] = jax.random.uniform(k5, (H, OUTPUT_SIZE), jnp.float32, -bound, bound)
    p["lin_b"] = jax.random.uniform(k6, (OUTPUT_SIZE,), jnp.float32, -bound, bound)
    return p


def prepare_kernel_params(params):
    """One-time (checkpoint-load-time) weight layout prep for the kernel:
       * fold the 0.5 sigmoid-as-tanh pre-scale into the i/f/o gate columns (exact, pow2),
       * cast MXU operands to bf16 (f32 accumulation stays inside the kernel),
       * stack [W0hh^T | W1ih^T] column-wise so one per-step dot feeds both layers."""
    H = HIDDEN_SIZE
    scale = jnp.concatenate(
        [jnp.full((1, H), 0.5, jnp.float32), jnp.full((1, H), 0.5, jnp.float32),
         jnp.ones((1, H), jnp.float32), jnp.full((1, H), 0.5, jnp.float32)], axis=1)
    return {
        "w0ih": (params["l0_wih_t"] * scale).astype(jnp.bfloat16),
        "b0": params["l0_b"] * scale,
        "w01": jnp.concatenate([params["l0_whh_t"] * scale,
                                params["l1_wih_t"] * scale],
                               axis=1).astype(jnp.bfloat16),
        "w1hh": (params["l1_whh_t"] * scale).astype(jnp.bfloat16),
        "b1": params["l1_b"] * scale,
        "lin_w_t": params["lin_w_t"],
        "lin_b": params["lin_b"],
    }


# ---------------------------------------------------------------------------
# Pure-JAX reference (lax.scan). With dot_dtype=bfloat16 it mirrors the kernel's
# numerics (bf16 MXU operands, f32 accumulation & f32 gate math).
# ---------------------------------------------------------------------------
def reference_forward(x_bte, params, h0_all, c0_all, dot_dtype=jnp.float32):
    H = HIDDEN_SIZE
    f32 = jnp.float32
    cast = lambda a: a.astype(dot_dtype)
    x = jnp.transpose(x_bte, (1, 0, 2))                    # [T, B, E]

    w0ih, w0hh = cast(params["l0_wih_t"]), cast(params["l0_whh_t"])
    w1ih, w1hh = cast(params["l1_wih_t"]), cast(params["l1_whh_t"])

    def gates_to_hc(g, c):
        i = jax.nn.sigmoid(g[:, 0 * H:1 * H])
        f = jax.nn.sigmoid(g[:, 1 * H:2 * H])
        gg = jnp.tanh(g[:, 2 * H:3 * H])
        o = jax.nn.sigmoid(g[:, 3 * H:4 * H])
        c_new = f * c + i * gg
        return o * jnp.tanh(c_new), c_new

    def step(carry, x_t):
        h0, c0, h1, c1 = carry
        g0 = (jnp.dot(cast(x_t), w0ih, preferred_element_type=f32)
              + jnp.dot(cast(h0), w0hh, preferred_element_type=f32)
              + params["l0_b"])
        h0, c0 = gates_to_hc(g0, c0)
        g1 = (jnp.dot(cast(h0), w1ih, preferred_element_type=f32)
              + jnp.dot(cast(h1), w1hh, preferred_element_type=f32)
              + params["l1_b"])
        h1, c1 = gates_to_hc(g1, c1)
        return (h0, c0, h1, c1), None

    (h0, c0, h1, c1), _ = lax.scan(
        step, (h0_all[0], c0_all[0], h0_all[1], c0_all[1]), x)
    return jnp.stack([h0, h1], axis=0)


if __name__ == "__main__":
    key = jax.random.PRNGKey(0)
    k_param, k_x, k_h, k_c = jax.random.split(key, 4)

    params = init_params(k_param)
    kparams = prepare_kernel_params(params)     # one-time layout/dtype prep

    # input_seq is fed straight into the LSTM -> it is [B, T, E] float.
    x = jax.random.normal(k_x, (BATCH, SEQ_LEN, EMBEDDING_SIZE), jnp.float32)
    # h_0 / c_0 = torch.randn(num_layers, batch, hidden) -> deterministic normals here.
    h0 = jax.random.normal(k_h, (NUM_LAYERS, BATCH, HIDDEN_SIZE), jnp.float32)
    c0 = jax.random.normal(k_c, (NUM_LAYERS, BATCH, HIDDEN_SIZE), jnp.float32)

    h_n = state_refactor_forward(x, kparams, h0, c0)
    h_n = jax.block_until_ready(h_n)
    assert h_n.shape == (NUM_LAYERS, BATCH, HIDDEN_SIZE)

    # Correctness: compare against a pure-JAX reference that uses the same bf16
    # MXU-operand numerics as the kernel (everything else f32).
    h_n_ref = reference_forward(x, params, h0, c0, dot_dtype=jnp.bfloat16)
    assert jnp.allclose(h_n, h_n_ref, atol=2e-3, rtol=2e-3), "mismatch vs reference"

    print("KERNEL_OK")
</pallas_src>

<mosaic_0001>
module attributes {stable_mosaic.version = 11 : i64} {
  func.func @kernel(%arg0: memref<128x256xbf16, #tpu.memory_space<vmem>>, %arg1: memref<256x512xbf16, #tpu.memory_space<vmem>>, %arg2: memref<1x512xf32, #tpu.memory_space<vmem>>, %arg3: memref<128x1024xbf16, #tpu.memory_space<any>>, %arg4: memref<128x512xbf16, #tpu.memory_space<any>>, %arg5: memref<1x512xf32, #tpu.memory_space<any>>, %arg6: memref<2x16x128xf32, #tpu.memory_space<any>>, %arg7: memref<2x16x128xf32, #tpu.memory_space<any>>, %arg8: memref<2x16x128xf32, #tpu.memory_space<vmem>>, %arg9: memref<128x512xf32, #tpu.memory_space<vmem>>, %arg10: memref<128x1024xbf16, #tpu.memory_space<vmem>>, %arg11: memref<128x512xbf16, #tpu.memory_space<vmem>>, %arg12: memref<1x512xf32, #tpu.memory_space<vmem>>, %arg13: memref<2x16x128xf32, #tpu.memory_space<vmem>>, %arg14: memref<2x16x128xf32, #tpu.memory_space<vmem>>, %arg15: memref<5x!tpu.dma_semaphore, #tpu.memory_space<semaphore_mem>>) attributes {dimension_semantics = [], scalar_prefetch = 0 : i64, scratch_operands = 7 : i64, tpu.core_type = #tpu.core_type<tc>} {
    %c0_i32 = arith.constant 0 : i32
    %0 = tpu.memref_slice %arg15[%c0_i32] : memref<5x!tpu.dma_semaphore, #tpu.memory_space<semaphore_mem>> -> memref<1x!tpu.dma_semaphore, #tpu.memory_space<semaphore_mem>>
    %1 = tpu.memref_squeeze %0 : memref<1x!tpu.dma_semaphore, #tpu.memory_space<semaphore_mem>> -> memref<!tpu.dma_semaphore, #tpu.memory_space<semaphore_mem>>
    tpu.enqueue_dma source(%arg3 : memref<128x1024xbf16, #tpu.memory_space<any>>) target(%arg10 : memref<128x1024xbf16, #tpu.memory_space<vmem>>) target_semaphore(%1 : memref<!tpu.dma_semaphore, #tpu.memory_space<semaphore_mem>>)
    %c1_i32 = arith.constant 1 : i32
    %2 = tpu.memref_slice %arg15[%c1_i32] : memref<5x!tpu.dma_semaphore, #tpu.memory_space<semaphore_mem>> -> memref<1x!tpu.dma_semaphore, #tpu.memory_space<semaphore_mem>>
    %3 = tpu.memref_squeeze %2 : memref<1x!tpu.dma_semaphore, #tpu.memory_space<semaphore_mem>> -> memref<!tpu.dma_semaphore, #tpu.memory_space<semaphore_mem>>
    tpu.enqueue_dma source(%arg4 : memref<128x512xbf16, #tpu.memory_space<any>>) target(%arg11 : memref<128x512xbf16, #tpu.memory_space<vmem>>) target_semaphore(%3 : memref<!tpu.dma_semaphore, #tpu.memory_space<semaphore_mem>>)
    %c2_i32 = arith.constant 2 : i32
    %4 = tpu.memref_slice %arg15[%c2_i32] : memref<5x!tpu.dma_semaphore, #tpu.memory_space<semaphore_mem>> -> memref<1x!tpu.dma_semaphore, #tpu.memory_space<semaphore_mem>>
    %5 = tpu.memref_squeeze %4 : memref<1x!tpu.dma_semaphore, #tpu.memory_space<semaphore_mem>> -> memref<!tpu.dma_semaphore, #tpu.memory_space<semaphore_mem>>
    tpu.enqueue_dma source(%arg5 : memref<1x512xf32, #tpu.memory_space<any>>) target(%arg12 : memref<1x512xf32, #tpu.memory_space<vmem>>) target_semaphore(%5 : memref<!tpu.dma_semaphore, #tpu.memory_space<semaphore_mem>>)
    %c3_i32 = arith.constant 3 : i32
    %6 = tpu.memref_slice %arg15[%c3_i32] : memref<5x!tpu.dma_semaphore, #tpu.memory_space<semaphore_mem>> -> memref<1x!tpu.dma_semaphore, #tpu.memory_space<semaphore_mem>>
    %7 = tpu.memref_squeeze %6 : memref<1x!tpu.dma_semaphore, #tpu.memory_space<semaphore_mem>> -> memref<!tpu.dma_semaphore, #tpu.memory_space<semaphore_mem>>
    tpu.enqueue_dma source(%arg6 : memref<2x16x128xf32, #tpu.memory_space<any>>) target(%arg13 : memref<2x16x128xf32, #tpu.memory_space<vmem>>) target_semaphore(%7 : memref<!tpu.dma_semaphore, #tpu.memory_space<semaphore_mem>>)
    %c4_i32 = arith.constant 4 : i32
    %8 = tpu.memref_slice %arg15[%c4_i32] : memref<5x!tpu.dma_semaphore, #tpu.memory_space<semaphore_mem>> -> memref<1x!tpu.dma_semaphore, #tpu.memory_space<semaphore_mem>>
    %9 = tpu.memref_squeeze %8 : memref<1x!tpu.dma_semaphore, #tpu.memory_space<semaphore_mem>> -> memref<!tpu.dma_semaphore, #tpu.memory_space<semaphore_mem>>
    tpu.enqueue_dma source(%arg7 : memref<2x16x128xf32, #tpu.memory_space<any>>) target(%arg14 : memref<2x16x128xf32, #tpu.memory_space<vmem>>) target_semaphore(%9 : memref<!tpu.dma_semaphore, #tpu.memory_space<semaphore_mem>>)
    %c0 = arith.constant 0 : index
    %c0_0 = arith.constant 0 : index
    %10 = vector.load %arg0[%c0, %c0_0] : memref<128x256xbf16, #tpu.memory_space<vmem>>, vector<128x256xbf16>
    %c0_1 = arith.constant 0 : index
    %c0_2 = arith.constant 0 : index
    %11 = vector.load %arg1[%c0_1, %c0_2] : memref<256x512xbf16, #tpu.memory_space<vmem>>, vector<256x512xbf16>
    %cst = arith.constant dense<0.000000e+00> : vector<128x512xf32>
    %12 = tpu.matmul %10, %11, %cst {dimension_numbers = #tpu.dot_dimension_numbers<[1], [0], [0], [1], [0, 0, 1, 1], [], []>} : vector<128x256xbf16>, vector<256x512xbf16>, vector<128x512xf32> -> vector<128x512xf32>
    %c0_3 = arith.constant 0 : index
    %c0_4 = arith.constant 0 : index
    %13 = vector.load %arg2[%c0_3, %c0_4] : memref<1x512xf32, #tpu.memory_space<vmem>>, vector<1x512xf32>
    %14 = vector.broadcast %13 : vector<1x512xf32> to vector<128x512xf32>
    %15 = arith.addf %12, %14 : vector<128x512xf32>
    %c0_5 = arith.constant 0 : index
    %c0_6 = arith.constant 0 : index
    %16 = vector.load %arg9[%c0_5, %c0_6] : memref<128x512xf32, #tpu.memory_space<vmem>>, vector<128x512xf32>
    tpu.vector_store %arg9[%c0_5, %c0_6], %15 {strides = array<i32>} : memref<128x512xf32, #tpu.memory_space<vmem>>, vector<128x512xf32>,
    %c0_i32_7 = arith.constant 0 : i32
    %17 = tpu.memref_slice %arg15[%c0_i32_7] : memref<5x!tpu.dma_semaphore, #tpu.memory_space<semaphore_mem>> -> memref<1x!tpu.dma_semaphore, #tpu.memory_space<semaphore_mem>>
    %18 = tpu.memref_squeeze %17 : memref<1x!tpu.dma_semaphore, #tpu.memory_space<semaphore_mem>> -> memref<!tpu.dma_semaphore, #tpu.memory_space<semaphore_mem>>
    tpu.wait_dma2 semaphore(%18 : memref<!tpu.dma_semaphore, #tpu.memory_space<semaphore_mem>>) src(%arg3 : memref<128x1024xbf16, #tpu.memory_space<any>>) dst(%arg10 : memref<128x1024xbf16, #tpu.memory_space<vmem>>)
    %c1_i32_8 = arith.constant 1 : i32
    %19 = tpu.memref_slice %arg15[%c1_i32_8] : memref<5x!tpu.dma_semaphore, #tpu.memory_space<semaphore_mem>> -> memref<1x!tpu.dma_semaphore, #tpu.memory_space<semaphore_mem>>
    %20 = tpu.memref_squeeze %19 : memref<1x!tpu.dma_semaphore, #tpu.memory_space<semaphore_mem>> -> memref<!tpu.dma_semaphore, #tpu.memory_space<semaphore_mem>>
    tpu.wait_dma2 semaphore(%20 : memref<!tpu.dma_semaphore, #tpu.memory_space<semaphore_mem>>) src(%arg4 : memref<128x512xbf16, #tpu.memory_space<any>>) dst(%arg11 : memref<128x512xbf16, #tpu.memory_space<vmem>>)
    %c2_i32_9 = arith.constant 2 : i32
    %21 = tpu.memref_slice %arg15[%c2_i32_9] : memref<5x!tpu.dma_semaphore, #tpu.memory_space<semaphore_mem>> -> memref<1x!tpu.dma_semaphore, #tpu.memory_space<semaphore_mem>>
    %22 = tpu.memref_squeeze %21 : memref<1x!tpu.dma_semaphore, #tpu.memory_space<semaphore_mem>> -> memref<!tpu.dma_semaphore, #tpu.memory_space<semaphore_mem>>
    tpu.wait_dma2 semaphore(%22 : memref<!tpu.dma_semaphore, #tpu.memory_space<semaphore_mem>>) src(%arg5 : memref<1x512xf32, #tpu.memory_space<any>>) dst(%arg12 : memref<1x512xf32, #tpu.memory_space<vmem>>)
    %c3_i32_10 = arith.constant 3 : i32
    %23 = tpu.memref_slice %arg15[%c3_i32_10] : memref<5x!tpu.dma_semaphore, #tpu.memory_space<semaphore_mem>> -> memref<1x!tpu.dma_semaphore, #tpu.memory_space<semaphore_mem>>
    %24 = tpu.memref_squeeze %23 : memref<1x!tpu.dma_semaphore, #tpu.memory_space<semaphore_mem>> -> memref<!tpu.dma_semaphore, #tpu.memory_space<semaphore_mem>>
    tpu.wait_dma2 semaphore(%24 : memref<!tpu.dma_semaphore, #tpu.memory_space<semaphore_mem>>) src(%arg6 : memref<2x16x128xf32, #tpu.memory_space<any>>) dst(%arg13 : memref<2x16x128xf32, #tpu.memory_space<vmem>>)
    %c4_i32_11 = arith.constant 4 : i32
    %25 = tpu.memref_slice %arg15[%c4_i32_11] : memref<5x!tpu.dma_semaphore, #tpu.memory_space<semaphore_mem>> -> memref<1x!tpu.dma_semaphore, #tpu.memory_space<semaphore_mem>>
    %26 = tpu.memref_squeeze %25 : memref<1x!tpu.dma_semaphore, #tpu.memory_space<semaphore_mem>> -> memref<!tpu.dma_semaphore, #tpu.memory_space<semaphore_mem>>
    tpu.wait_dma2 semaphore(%26 : memref<!tpu.dma_semaphore, #tpu.memory_space<semaphore_mem>>) src(%arg7 : memref<2x16x128xf32, #tpu.memory_space<any>>) dst(%arg14 : memref<2x16x128xf32, #tpu.memory_space<vmem>>)
    %c0_12 = arith.constant 0 : index
    %c0_13 = arith.constant 0 : index
    %27 = vector.load %arg12[%c0_12, %c0_13] : memref<1x512xf32, #tpu.memory_space<vmem>>, vector<1x512xf32>
    %28 = vector.shape_cast %27 : vector<1x512xf32> to vector<1x512xf32>
    %29 = vector.broadcast %28 : vector<1x512xf32> to vector<16x512xf32>
    %c0_14 = arith.constant 0 : index
    %c0_15 = arith.constant 0 : index
    %c0_16 = arith.constant 0 : index
    %30 = vector.load %arg13[%c0_14, %c0_15, %c0_16] : memref<2x16x128xf32, #tpu.memory_space<vmem>>, vector<1x16x128xf32>
    %31 = vector.shape_cast %30 : vector<1x16x128xf32> to vector<16x128xf32>
    %32 = arith.truncf %31 : vector<16x128xf32> to vector<16x128xbf16>
    %c0_17 = arith.constant 0 : index
    %c0_18 = arith.constant 0 : index
    %33 = vector.load %arg10[%c0_17, %c0_18] : memref<128x1024xbf16, #tpu.memory_space<vmem>>, vector<128x1024xbf16>
    %cst_19 = arith.constant dense<0.000000e+00> : vector<16x1024xf32>
    %34 = tpu.matmul %32, %33, %cst_19 {dimension_numbers = #tpu.dot_dimension_numbers<[1], [0], [0], [1], [0, 0, 1, 1], [], []>} : vector<16x128xbf16>, vector<128x1024xbf16>, vector<16x1024xf32> -> vector<16x1024xf32>
    %c0_20 = arith.constant 0 : index
    %c0_21 = arith.constant 0 : index
    %35 = vector.load %arg9[%c0_20, %c0_21] : memref<128x512xf32, #tpu.memory_space<vmem>>, vector<16x512xf32>
    %36 = vector.extract_strided_slice %34 {offsets = [0, 0], sizes = [16, 512], strides = [1, 1]} : vector<16x1024xf32> to vector<16x512xf32>
    %37 = arith.addf %35, %36 : vector<16x512xf32>
    %c0_22 = arith.constant 0 : index
    %c0_23 = arith.constant 0 : index
    %c0_24 = arith.constant 0 : index
    %38 = vector.load %arg14[%c0_22, %c0_23, %c0_24] : memref<2x16x128xf32, #tpu.memory_space<vmem>>, vector<1x16x128xf32>
    %39 = vector.shape_cast %38 : vector<1x16x128xf32> to vector<16x128xf32>
    %40 = math.tanh %37 : vector<16x512xf32>
    %41 = vector.extract_strided_slice %40 {offsets = [0, 0], sizes = [16, 128], strides = [1, 1]} : vector<16x512xf32> to vector<16x128xf32>
    %cst_25 = arith.constant 5.000000e-01 : f32
    %42 = vector.broadcast %cst_25 : f32 to vector<16x128xf32>
    %43 = arith.mulf %42, %41 : vector<16x128xf32>
    %cst_26 = arith.constant 5.000000e-01 : f32
    %44 = vector.broadcast %cst_26 : f32 to vector<16x128xf32>
    %45 = arith.addf %43, %44 : vector<16x128xf32>
    %46 = vector.extract_strided_slice %40 {offsets = [0, 128], sizes = [16, 128], strides = [1, 1]} : vector<16x512xf32> to vector<16x128xf32>
    %cst_27 = arith.constant 5.000000e-01 : f32
    %47 = vector.broadcast %cst_27 : f32 to vector<16x128xf32>
    %48 = arith.mulf %47, %46 : vector<16x128xf32>
    %cst_28 = arith.constant 5.000000e-01 : f32
    %49 = vector.broadcast %cst_28 : f32 to vector<16x128xf32>
    %50 = arith.addf %48, %49 : vector<16x128xf32>
    %51 = vector.extract_strided_slice %40 {offsets = [0, 256], sizes = [16, 128], strides = [1, 1]} : vector<16x512xf32> to vector<16x128xf32>
    %52 = vector.extract_strided_slice %40 {offsets = [0, 384], sizes = [16, 128], strides = [1, 1]} : vector<16x512xf32> to vector<16x128xf32>
    %cst_29 = arith.constant 5.000000e-01 : f32
    %53 = vector.broadcast %cst_29 : f32 to vector<16x128xf32>
    %54 = arith.mulf %53, %52 : vector<16x128xf32>
    %cst_30 = arith.constant 5.000000e-01 : f32
    %55 = vector.broadcast %cst_30 : f32 to vector<16x128xf32>
    %56 = arith.addf %54, %55 : vector<16x128xf32>
    %57 = arith.mulf %50, %39 : vector<16x128xf32>
    %58 = arith.mulf %45, %51 : vector<16x128xf32>
    %59 = arith.addf %57, %58 : vector<16x128xf32>
    %60 = math.tanh %59 : vector<16x128xf32>
    %61 = arith.mulf %56, %60 : vector<16x128xf32>
    %c1 = arith.constant 1 : index
    %c0_31 = arith.constant 0 : index
    %c0_32 = arith.constant 0 : index
    %62 = vector.load %arg13[%c1, %c0_31, %c0_32] : memref<2x16x128xf32, #tpu.memory_space<vmem>>, vector<1x16x128xf32>
    %63 = vector.shape_cast %62 : vector<1x16x128xf32> to vector<16x128xf32>
    %c1_33 = arith.constant 1 : index
    %c0_34 = arith.constant 0 : index
    %c0_35 = arith.constant 0 : index
    %64 = vector.load %arg14[%c1_33, %c0_34, %c0_35] : memref<2x16x128xf32, #tpu.memory_space<vmem>>, vector<1x16x128xf32>
    %65 = vector.shape_cast %64 : vector<1x16x128xf32> to vector<16x128xf32>
    %c1_i32_36 = arith.constant 1 : i32
    %66 = arith.truncf %61 : vector<16x128xf32> to vector<16x128xbf16>
    %c0_37 = arith.constant 0 : index
    %c0_38 = arith.constant 0 : index
    %67 = vector.load %arg10[%c0_37, %c0_38] : memref<128x1024xbf16, #tpu.memory_space<vmem>>, vector<128x1024xbf16>
    %cst_39 = arith.constant dense<0.000000e+00> : vector<16x1024xf32>
    %68 = tpu.matmul %66, %67, %cst_39 {dimension_numbers = #tpu.dot_dimension_numbers<[1], [0], [0], [1], [0, 0, 1, 1], [], []>} : vector<16x128xbf16>, vector<128x1024xbf16>, vector<16x1024xf32> -> vector<16x1024xf32>
    %69 = arith.truncf %63 : vector<16x128xf32> to vector<16x128xbf16>
    %c0_40 = arith.constant 0 : index
    %c0_41 = arith.constant 0 : index
    %70 = vector.load %arg11[%c0_40, %c0_41] : memref<128x512xbf16, #tpu.memory_space<vmem>>, vector<128x512xbf16>
    %cst_42 = arith.constant dense<0.000000e+00> : vector<16x512xf32>
    %71 = tpu.matmul %69, %70, %cst_42 {dimension_numbers = #tpu.dot_dimension_numbers<[1], [0], [0], [1], [0, 0, 1, 1], [], []>} : vector<16x128xbf16>, vector<128x512xbf16>, vector<16x512xf32> -> vector<16x512xf32>
    %c16_i32 = arith.constant 16 : i32
    %72 = arith.muli %c1_i32_36, %c16_i32 : i32
    %73 = tpu.assume_multiple %72, 16 : i32
    %74 = arith.index_cast %73 : i32 to index
    %c0_43 = arith.constant 0 : index
    %75 = vector.load %arg9[%74, %c0_43] : memref<128x512xf32, #tpu.memory_space<vmem>>, vector<16x512xf32>
    %76 = vector.extract_strided_slice %68 {offsets = [0, 0], sizes = [16, 512], strides = [1, 1]} : vector<16x1024xf32> to vector<16x512xf32>
    %77 = arith.addf %75, %76 : vector<16x512xf32>
    %78 = vector.extract_strided_slice %68 {offsets = [0, 512], sizes = [16, 512], strides = [1, 1]} : vector<16x1024xf32> to vector<16x512xf32>
    %79 = arith.addf %78, %71 : vector<16x512xf32>
    %80 = arith.addf %79, %29 : vector<16x512xf32>
    %81 = math.tanh %77 : vector<16x512xf32>
    %82 = vector.extract_strided_slice %81 {offsets = [0, 0], sizes = [16, 128], strides = [1, 1]} : vector<16x512xf32> to vector<16x128xf32>
    %cst_44 = arith.constant 5.000000e-01 : f32
    %83 = vector.broadcast %cst_44 : f32 to vector<16x128xf32>
    %84 = arith.mulf %83, %82 : vector<16x128xf32>
    %cst_45 = arith.constant 5.000000e-01 : f32
    %85 = vector.broadcast %cst_45 : f32 to vector<16x128xf32>
    %86 = arith.addf %84, %85 : vector<16x128xf32>
    %87 = vector.extract_strided_slice %81 {offsets = [0, 128], sizes = [16, 128], strides = [1, 1]} : vector<16x512xf32> to vector<16x128xf32>
    %cst_46 = arith.constant 5.000000e-01 : f32
    %88 = vector.broadcast %cst_46 : f32 to vector<16x128xf32>
    %89 = arith.mulf %88, %87 : vector<16x128xf32>
    %cst_47 = arith.constant 5.000000e-01 : f32
    %90 = vector.broadcast %cst_47 : f32 to vector<16x128xf32>
    %91 = arith.addf %89, %90 : vector<16x128xf32>
    %92 = vector.extract_strided_slice %81 {offsets = [0, 256], sizes = [16, 128], strides = [1, 1]} : vector<16x512xf32> to vector<16x128xf32>
    %93 = vector.extract_strided_slice %81 {offsets = [0, 384], sizes = [16, 128], strides = [1, 1]} : vector<16x512xf32> to vector<16x128xf32>
    %cst_48 = arith.constant 5.000000e-01 : f32
    %94 = vector.broadcast %cst_48 : f32 to vector<16x128xf32>
    %95 = arith.mulf %94, %93 : vector<16x128xf32>
    %cst_49 = arith.constant 5.000000e-01 : f32
    %96 = vector.broadcast %cst_49 : f32 to vector<16x128xf32>
    %97 = arith.addf %95, %96 : vector<16x128xf32>
    %98 = arith.mulf %91, %59 : vector<16x128xf32>
    %99 = arith.mulf %86, %92 : vector<16x128xf32>
    %100 = arith.addf %98, %99 : vector<16x128xf32>
    %101 = math.tanh %100 : vector<16x128xf32>
    %102 = arith.mulf %97, %101 : vector<16x128xf32>
    %103 = math.tanh %80 : vector<16x512xf32>
    %104 = vector.extract_strided_slice %103 {offsets = [0, 0], sizes = [16, 128], strides = [1, 1]} : vector<16x512xf32> to vector<16x128xf32>
    %cst_50 = arith.constant 5.000000e-01 : f32
    %105 = vector.broadcast %cst_50 : f32 to vector<16x128xf32>
    %106 = arith.mulf %105, %104 : vector<16x128xf32>
    %cst_51 = arith.constant 5.000000e-01 : f32
    %107 = vector.broadcast %cst_51 : f32 to vector<16x128xf32>
    %108 = arith.addf %106, %107 : vector<16x128xf32>
    %109 = vector.extract_strided_slice %103 {offsets = [0, 128], sizes = [16, 128], strides = [1, 1]} : vector<16x512xf32> to vector<16x128xf32>
    %cst_52 = arith.constant 5.000000e-01 : f32
    %110 = vector.broadcast %cst_52 : f32 to vector<16x128xf32>
    %111 = arith.mulf %110, %109 : vector<16x128xf32>
    %cst_53 = arith.constant 5.000000e-01 : f32
    %112 = vector.broadcast %cst_53 : f32 to vector<16x128xf32>
    %113 = arith.addf %111, %112 : vector<16x128xf32>
    %114 = vector.extract_strided_slice %103 {offsets = [0, 256], sizes = [16, 128], strides = [1, 1]} : vector<16x512xf32> to vector<16x128xf32>
    %115 = vector.extract_strided_slice %103 {offsets = [0, 384], sizes = [16, 128], strides = [1, 1]} : vector<16x512xf32> to vector<16x128xf32>
    %cst_54 = arith.constant 5.000000e-01 : f32
    %116 = vector.broadcast %cst_54 : f32 to vector<16x128xf32>
    %117 = arith.mulf %116, %115 : vector<16x128xf32>
    %cst_55 = arith.constant 5.000000e-01 : f32
    %118 = vector.broadcast %cst_55 : f32 to vector<16x128xf32>
    %119 = arith.addf %117, %118 : vector<16x128xf32>
    %120 = arith.mulf %113, %65 : vector<16x128xf32>
    %121 = arith.mulf %108, %114 : vector<16x128xf32>
    %122 = arith.addf %120, %121 : vector<16x128xf32>
    %123 = math.tanh %122 : vector<16x128xf32>
    %124 = arith.mulf %119, %123 : vector<16x128xf32>
    %c2_i32_56 = arith.constant 2 : i32
    %125 = arith.truncf %102 : vector<16x128xf32> to vector<16x128xbf16>
    %c0_57 = arith.constant 0 : index
    %c0_58 = arith.constant 0 : index
    %126 = vector.load %arg10[%c0_57, %c0_58] : memref<128x1024xbf16, #tpu.memory_space<vmem>>, vector<128x1024xbf16>
    %cst_59 = arith.constant dense<0.000000e+00> : vector<16x1024xf32>
    %127 = tpu.matmul %125, %126, %cst_59 {dimension_numbers = #tpu.dot_dimension_numbers<[1], [0], [0], [1], [0, 0, 1, 1], [], []>} : vector<16x128xbf16>, vector<128x1024xbf16>, vector<16x1024xf32> -> vector<16x1024xf32>
    %128 = arith.truncf %124 : vector<16x128xf32> to vector<16x128xbf16>
    %c0_60 = arith.constant 0 : index
    %c0_61 = arith.constant 0 : index
    %129 = vector.load %arg11[%c0_60, %c0_61] : memref<128x512xbf16, #tpu.memory_space<vmem>>, vector<128x512xbf16>
    %cst_62 = arith.constant dense<0.000000e+00> : vector<16x512xf32>
    %130 = tpu.matmul %128, %129, %cst_62 {dimension_numbers = #tpu.dot_dimension_numbers<[1], [0], [0], [1], [0, 0, 1, 1], [], []>} : vector<16x128xbf16>, vector<128x512xbf16>, vector<16x512xf32> -> vector<16x512xf32>
    %c16_i32_63 = arith.constant 16 : i32
    %131 = arith.muli %c2_i32_56, %c16_i32_63 : i32
    %132 = tpu.assume_multiple %131, 16 : i32
    %133 = arith.index_cast %132 : i32 to index
    %c0_64 = arith.constant 0 : index
    %134 = vector.load %arg9[%133, %c0_64] : memref<128x512xf32, #tpu.memory_space<vmem>>, vector<16x512xf32>
    %135 = vector.extract_strided_slice %127 {offsets = [0, 0], sizes = [16, 512], strides = [1, 1]} : vector<16x1024xf32> to vector<16x512xf32>
    %136 = arith.addf %134, %135 : vector<16x512xf32>
    %137 = vector.extract_strided_slice %127 {offsets = [0, 512], sizes = [16, 512], strides = [1, 1]} : vector<16x1024xf32> to vector<16x512xf32>
    %138 = arith.addf %137, %130 : vector<16x512xf32>
    %139 = arith.addf %138, %29 : vector<16x512xf32>
    %140 = math.tanh %136 : vector<16x512xf32>
    %141 = vector.extract_strided_slice %140 {offsets = [0, 0], sizes = [16, 128], strides = [1, 1]} : vector<16x512xf32> to vector<16x128xf32>
    %cst_65 = arith.constant 5.000000e-01 : f32
    %142 = vector.broadcast %cst_65 : f32 to vector<16x128xf32>
    %143 = arith.mulf %142, %141 : vector<16x128xf32>
    %cst_66 = arith.constant 5.000000e-01 : f32
    %144 = vector.broadcast %cst_66 : f32 to vector<16x128xf32>
    %145 = arith.addf %143, %144 : vector<16x128xf32>
    %146 = vector.extract_strided_slice %140 {offsets = [0, 128], sizes = [16, 128], strides = [1, 1]} : vector<16x512xf32> to vector<16x128xf32>
    %cst_67 = arith.constant 5.000000e-01 : f32
    %147 = vector.broadcast %cst_67 : f32 to vector<16x128xf32>
    %148 = arith.mulf %147, %146 : vector<16x128xf32>
    %cst_68 = arith.constant 5.000000e-01 : f32
    %149 = vector.broadcast %cst_68 : f32 to vector<16x128xf32>
    %150 = arith.addf %148, %149 : vector<16x128xf32>
    %151 = vector.extract_strided_slice %140 {offsets = [0, 256], sizes = [16, 128], strides = [1, 1]} : vector<16x512xf32> to vector<16x128xf32>
    %152 = vector.extract_strided_slice %140 {offsets = [0, 384], sizes = [16, 128], strides = [1, 1]} : vector<16x512xf32> to vector<16x128xf32>
    %cst_69 = arith.constant 5.000000e-01 : f32
    %153 = vector.broadcast %cst_69 : f32 to vector<16x128xf32>
    %154 = arith.mulf %153, %152 : vector<16x128xf32>
    %cst_70 = arith.constant 5.000000e-01 : f32
    %155 = vector.broadcast %cst_70 : f32 to vector<16x128xf32>
    %156 = arith.addf %154, %155 : vector<16x128xf32>
    %157 = arith.mulf %150, %100 : vector<16x128xf32>
    %158 = arith.mulf %145, %151 : vector<16x128xf32>
    %159 = arith.addf %157, %158 : vector<16x128xf32>
    %160 = math.tanh %159 : vector<16x128xf32>
    %161 = arith.mulf %156, %160 : vector<16x128xf32>
    %162 = math.tanh %139 : vector<16x512xf32>
    %163 = vector.extract_strided_slice %162 {offsets = [0, 0], sizes = [16, 128], strides = [1, 1]} : vector<16x512xf32> to vector<16x128xf32>
    %cst_71 = arith.constant 5.000000e-01 : f32
    %164 = vector.broadcast %cst_71 : f32 to vector<16x128xf32>
    %165 = arith.mulf %164, %163 : vector<16x128xf32>
    %cst_72 = arith.constant 5.000000e-01 : f32
    %166 = vector.broadcast %cst_72 : f32 to vector<16x128xf32>
    %167 = arith.addf %165, %166 : vector<16x128xf32>
    %168 = vector.extract_strided_slice %162 {offsets = [0, 128], sizes = [16, 128], strides = [1, 1]} : vector<16x512xf32> to vector<16x128xf32>
    %cst_73 = arith.constant 5.000000e-01 : f32
    %169 = vector.broadcast %cst_73 : f32 to vector<16x128xf32>
    %170 = arith.mulf %169, %168 : vector<16x128xf32>
    %cst_74 = arith.constant 5.000000e-01 : f32
    %171 = vector.broadcast %cst_74 : f32 to vector<16x128xf32>
    %172 = arith.addf %170, %171 : vector<16x128xf32>
    %173 = vector.extract_strided_slice %162 {offsets = [0, 256], sizes = [16, 128], strides = [1, 1]} : vector<16x512xf32> to vector<16x128xf32>
    %174 = vector.extract_strided_slice %162 {offsets = [0, 384], sizes = [16, 128], strides = [1, 1]} : vector<16x512xf32> to vector<16x128xf32>
    %cst_75 = arith.constant 5.000000e-01 : f32
    %175 = vector.broadcast %cst_75 : f32 to vector<16x128xf32>
    %176 = arith.mulf %175, %174 : vector<16x128xf32>
    %cst_76 = arith.constant 5.000000e-01 : f32
    %177 = vector.broadcast %cst_76 : f32 to vector<16x128xf32>
    %178 = arith.addf %176, %177 : vector<16x128xf32>
    %179 = arith.mulf %172, %122 : vector<16x128xf32>
    %180 = arith.mulf %167, %173 : vector<16x128xf32>
    %181 = arith.addf %179, %180 : vector<16x128xf32>
    %182 = math.tanh %181 : vector<16x128xf32>
    %183 = arith.mulf %178, %182 : vector<16x128xf32>
    %c3_i32_77 = arith.constant 3 : i32
    %184 = arith.truncf %161 : vector<16x128xf32> to vector<16x128xbf16>
    %c0_78 = arith.constant 0 : index
    %c0_79 = arith.constant 0 : index
    %185 = vector.load %arg10[%c0_78, %c0_79] : memref<128x1024xbf16, #tpu.memory_space<vmem>>, vector<128x1024xbf16>
    %cst_80 = arith.constant dense<0.000000e+00> : vector<16x1024xf32>
    %186 = tpu.matmul %184, %185, %cst_80 {dimension_numbers = #tpu.dot_dimension_numbers<[1], [0], [0], [1], [0, 0, 1, 1], [], []>} : vector<16x128xbf16>, vector<128x1024xbf16>, vector<16x1024xf32> -> vector<16x1024xf32>
    %187 = arith.truncf %183 : vector<16x128xf32> to vector<16x128xbf16>
    %c0_81 = arith.constant 0 : index
    %c0_82 = arith.constant 0 : index
    %188 = vector.load %arg11[%c0_81, %c0_82] : memref<128x512xbf16, #tpu.memory_space<vmem>>, vector<128x512xbf16>
    %cst_83 = arith.constant dense<0.000000e+00> : vector<16x512xf32>
    %189 = tpu.matmul %187, %188, %cst_83 {dimension_numbers = #tpu.dot_dimension_numbers<[1], [0], [0], [1], [0, 0, 1, 1], [], []>} : vector<16x128xbf16>, vector<128x512xbf16>, vector<16x512xf32> -> vector<16x512xf32>
    %c16_i32_84 = arith.constant 16 : i32
    %190 = arith.muli %c3_i32_77, %c16_i32_84 : i32
    %191 = tpu.assume_multiple %190, 16 : i32
    %192 = arith.index_cast %191 : i32 to index
    %c0_85 = arith.constant 0 : index
    %193 = vector.load %arg9[%192, %c0_85] : memref<128x512xf32, #tpu.memory_space<vmem>>, vector<16x512xf32>
    %194 = vector.extract_strided_slice %186 {offsets = [0, 0], sizes = [16, 512], strides = [1, 1]} : vector<16x1024xf32> to vector<16x512xf32>
    %195 = arith.addf %193, %194 : vector<16x512xf32>
    %196 = vector.extract_strided_slice %186 {offsets = [0, 512], sizes = [16, 512], strides = [1, 1]} : vector<16x1024xf32> to vector<16x512xf32>
    %197 = arith.addf %196, %189 : vector<16x512xf32>
    %198 = arith.addf %197, %29 : vector<16x512xf32>
    %199 = math.tanh %195 : vector<16x512xf32>
    %200 = vector.extract_strided_slice %199 {offsets = [0, 0], sizes = [16, 128], strides = [1, 1]} : vector<16x512xf32> to vector<16x128xf32>
    %cst_86 = arith.constant 5.000000e-01 : f32
    %201 = vector.broadcast %cst_86 : f32 to vector<16x128xf32>
    %202 = arith.mulf %201, %200 : vector<16x128xf32>
    %cst_87 = arith.constant 5.000000e-01 : f32
    %203 = vector.broadcast %cst_87 : f32 to vector<16x128xf32>
    %204 = arith.addf %202, %203 : vector<16x128xf32>
    %205 = vector.extract_strided_slice %199 {offsets = [0, 128], sizes = [16, 128], strides = [1, 1]} : vector<16x512xf32> to vector<16x128xf32>
    %cst_88 = arith.constant 5.000000e-01 : f32
    %206 = vector.broadcast %cst_88 : f32 to vector<16x128xf32>
    %207 = arith.mulf %206, %205 : vector<16x128xf32>
    %cst_89 = arith.constant 5.000000e-01 : f32
    %208 = vector.broadcast %cst_89 : f32 to vector<16x128xf32>
    %209 = arith.addf %207, %208 : vector<16x128xf32>
    %210 = vector.extract_strided_slice %199 {offsets = [0, 256], sizes = [16, 128], strides = [1, 1]} : vector<16x512xf32> to vector<16x128xf32>
    %211 = vector.extract_strided_slice %199 {offsets = [0, 384], sizes = [16, 128], strides = [1, 1]} : vector<16x512xf32> to vector<16x128xf32>
    %cst_90 = arith.constant 5.000000e-01 : f32
    %212 = vector.broadcast %cst_90 : f32 to vector<16x128xf32>
    %213 = arith.mulf %212, %211 : vector<16x128xf32>
    %cst_91 = arith.constant 5.000000e-01 : f32
    %214 = vector.broadcast %cst_91 : f32 to vector<16x128xf32>
    %215 = arith.addf %213, %214 : vector<16x128xf32>
    %216 = arith.mulf %209, %159 : vector<16x128xf32>
    %217 = arith.mulf %204, %210 : vector<16x128xf32>
    %218 = arith.addf %216, %217 : vector<16x128xf32>
    %219 = math.tanh %218 : vector<16x128xf32>
    %220 = arith.mulf %215, %219 : vector<16x128xf32>
    %221 = math.tanh %198 : vector<16x512xf32>
    %222 = vector.extract_strided_slice %221 {offsets = [0, 0], sizes = [16, 128], strides = [1, 1]} : vector<16x512xf32> to vector<16x128xf32>
    %cst_92 = arith.constant 5.000000e-01 : f32
    %223 = vector.broadcast %cst_92 : f32 to vector<16x128xf32>
    %224 = arith.mulf %223, %222 : vector<16x128xf32>
    %cst_93 = arith.constant 5.000000e-01 : f32
    %225 = vector.broadcast %cst_93 : f32 to vector<16x128xf32>
    %226 = arith.addf %224, %225 : vector<16x128xf32>
    %227 = vector.extract_strided_slice %221 {offsets = [0, 128], sizes = [16, 128], strides = [1, 1]} : vector<16x512xf32> to vector<16x128xf32>
    %cst_94 = arith.constant 5.000000e-01 : f32
    %228 = vector.broadcast %cst_94 : f32 to vector<16x128xf32>
    %229 = arith.mulf %228, %227 : vector<16x128xf32>
    %cst_95 = arith.constant 5.000000e-01 : f32
    %230 = vector.broadcast %cst_95 : f32 to vector<16x128xf32>
    %231 = arith.addf %229, %230 : vector<16x128xf32>
    %232 = vector.extract_strided_slice %221 {offsets = [0, 256], sizes = [16, 128], strides = [1, 1]} : vector<16x512xf32> to vector<16x128xf32>
    %233 = vector.extract_strided_slice %221 {offsets = [0, 384], sizes = [16, 128], strides = [1, 1]} : vector<16x512xf32> to vector<16x128xf32>
    %cst_96 = arith.constant 5.000000e-01 : f32
    %234 = vector.broadcast %cst_96 : f32 to vector<16x128xf32>
    %235 = arith.mulf %234, %233 : vector<16x128xf32>
    %cst_97 = arith.constant 5.000000e-01 : f32
    %236 = vector.broadcast %cst_97 : f32 to vector<16x128xf32>
    %237 = arith.addf %235, %236 : vector<16x128xf32>
    %238 = arith.mulf %231, %181 : vector<16x128xf32>
    %239 = arith.mulf %226, %232 : vector<16x128xf32>
    %240 = arith.addf %238, %239 : vector<16x128xf32>
    %241 = math.tanh %240 : vector<16x128xf32>
    %242 = arith.mulf %237, %241 : vector<16x128xf32>
    %c4_i32_98 = arith.constant 4 : i32
    %243 = arith.truncf %220 : vector<16x128xf32> to vector<16x128xbf16>
    %c0_99 = arith.constant 0 : index
    %c0_100 = arith.constant 0 : index
    %244 = vector.load %arg10[%c0_99, %c0_100] : memref<128x1024xbf16, #tpu.memory_space<vmem>>, vector<128x1024xbf16>
    %cst_101 = arith.constant dense<0.000000e+00> : vector<16x1024xf32>
    %245 = tpu.matmul %243, %244, %cst_101 {dimension_numbers = #tpu.dot_dimension_numbers<[1], [0], [0], [1], [0, 0, 1, 1], [], []>} : vector<16x128xbf16>, vector<128x1024xbf16>, vector<16x1024xf32> -> vector<16x1024xf32>
    %246 = arith.truncf %242 : vector<16x128xf32> to vector<16x128xbf16>
    %c0_102 = arith.constant 0 : index
    %c0_103 = arith.constant 0 : index
    %247 = vector.load %arg11[%c0_102, %c0_103] : memref<128x512xbf16, #tpu.memory_space<vmem>>, vector<128x512xbf16>
    %cst_104 = arith.constant dense<0.000000e+00> : vector<16x512xf32>
    %248 = tpu.matmul %246, %247, %cst_104 {dimension_numbers = #tpu.dot_dimension_numbers<[1], [0], [0], [1], [0, 0, 1, 1], [], []>} : vector<16x128xbf16>, vector<128x512xbf16>, vector<16x512xf32> -> vector<16x512xf32>
    %c16_i32_105 = arith.constant 16 : i32
    %249 = arith.muli %c4_i32_98, %c16_i32_105 : i32
    %250 = tpu.assume_multiple %249, 16 : i32
    %251 = arith.index_cast %250 : i32 to index
    %c0_106 = arith.constant 0 : index
    %252 = vector.load %arg9[%251, %c0_106] : memref<128x512xf32, #tpu.memory_space<vmem>>, vector<16x512xf32>
    %253 = vector.extract_strided_slice %245 {offsets = [0, 0], sizes = [16, 512], strides = [1, 1]} : vector<16x1024xf32> to vector<16x512xf32>
    %254 = arith.addf %252, %253 : vector<16x512xf32>
    %255 = vector.extract_strided_slice %245 {offsets = [0, 512], sizes = [16, 512], strides = [1, 1]} : vector<16x1024xf32> to vector<16x512xf32>
    %256 = arith.addf %255, %248 : vector<16x512xf32>
    %257 = arith.addf %256, %29 : vector<16x512xf32>
    %258 = math.tanh %254 : vector<16x512xf32>
    %259 = vector.extract_strided_slice %258 {offsets = [0, 0], sizes = [16, 128], strides = [1, 1]} : vector<16x512xf32> to vector<16x128xf32>
    %cst_107 = arith.constant 5.000000e-01 : f32
    %260 = vector.broadcast %cst_107 : f32 to vector<16x128xf32>
    %261 = arith.mulf %260, %259 : vector<16x128xf32>
    %cst_108 = arith.constant 5.000000e-01 : f32
    %262 = vector.broadcast %cst_108 : f32 to vector<16x128xf32>
    %263 = arith.addf %261, %262 : vector<16x128xf32>
    %264 = vector.extract_strided_slice %258 {offsets = [0, 128], sizes = [16, 128], strides = [1, 1]} : vector<16x512xf32> to vector<16x128xf32>
    %cst_109 = arith.constant 5.000000e-01 : f32
    %265 = vector.broadcast %cst_109 : f32 to vector<16x128xf32>
    %266 = arith.mulf %265, %264 : vector<16x128xf32>
    %cst_110 = arith.constant 5.000000e-01 : f32
    %267 = vector.broadcast %cst_110 : f32 to vector<16x128xf32>
    %268 = arith.addf %266, %267 : vector<16x128xf32>
    %269 = vector.extract_strided_slice %258 {offsets = [0, 256], sizes = [16, 128], strides = [1, 1]} : vector<16x512xf32> to vector<16x128xf32>
    %270 = vector.extract_strided_slice %258 {offsets = [0, 384], sizes = [16, 128], strides = [1, 1]} : vector<16x512xf32> to vector<16x128xf32>
    %cst_111 = arith.constant 5.000000e-01 : f32
    %271 = vector.broadcast %cst_111 : f32 to vector<16x128xf32>
    %272 = arith.mulf %271, %270 : vector<16x128xf32>
    %cst_112 = arith.constant 5.000000e-01 : f32
    %273 = vector.broadcast %cst_112 : f32 to vector<16x128xf32>
    %274 = arith.addf %272, %273 : vector<16x128xf32>
    %275 = arith.mulf %268, %218 : vector<16x128xf32>
    %276 = arith.mulf %263, %269 : vector<16x128xf32>
    %277 = arith.addf %275, %276 : vector<16x128xf32>
    %278 = math.tanh %277 : vector<16x128xf32>
    %279 = arith.mulf %274, %278 : vector<16x128xf32>
    %280 = math.tanh %257 : vector<16x512xf32>
    %281 = vector.extract_strided_slice %280 {offsets = [0, 0], sizes = [16, 128], strides = [1, 1]} : vector<16x512xf32> to vector<16x128xf32>
    %cst_113 = arith.constant 5.000000e-01 : f32
    %282 = vector.broadcast %cst_113 : f32 to vector<16x128xf32>
    %283 = arith.mulf %282, %281 : vector<16x128xf32>
    %cst_114 = arith.constant 5.000000e-01 : f32
    %284 = vector.broadcast %cst_114 : f32 to vector<16x128xf32>
    %285 = arith.addf %283, %284 : vector<16x128xf32>
    %286 = vector.extract_strided_slice %280 {offsets = [0, 128], sizes = [16, 128], strides = [1, 1]} : vector<16x512xf32> to vector<16x128xf32>
    %cst_115 = arith.constant 5.000000e-01 : f32
    %287 = vector.broadcast %cst_115 : f32 to vector<16x128xf32>
    %288 = arith.mulf %287, %286 : vector<16x128xf32>
    %cst_116 = arith.constant 5.000000e-01 : f32
    %289 = vector.broadcast %cst_116 : f32 to vector<16x128xf32>
    %290 = arith.addf %288, %289 : vector<16x128xf32>
    %291 = vector.extract_strided_slice %280 {offsets = [0, 256], sizes = [16, 128], strides = [1, 1]} : vector<16x512xf32> to vector<16x128xf32>
    %292 = vector.extract_strided_slice %280 {offsets = [0, 384], sizes = [16, 128], strides = [1, 1]} : vector<16x512xf32> to vector<16x128xf32>
    %cst_117 = arith.constant 5.000000e-01 : f32
    %293 = vector.broadcast %cst_117 : f32 to vector<16x128xf32>
    %294 = arith.mulf %293, %292 : vector<16x128xf32>
    %cst_118 = arith.constant 5.000000e-01 : f32
    %295 = vector.broadcast %cst_118 : f32 to vector<16x128xf32>
    %296 = arith.addf %294, %295 : vector<16x128xf32>
    %297 = arith.mulf %290, %240 : vector<16x128xf32>
    %298 = arith.mulf %285, %291 : vector<16x128xf32>
    %299 = arith.addf %297, %298 : vector<16x128xf32>
    %300 = math.tanh %299 : vector<16x128xf32>
    %301 = arith.mulf %296, %300 : vector<16x128xf32>
    %c5_i32 = arith.constant 5 : i32
    %302 = arith.truncf %279 : vector<16x128xf32> to vector<16x128xbf16>
    %c0_119 = arith.constant 0 : index
    %c0_120 = arith.constant 0 : index
    %303 = vector.load %arg10[%c0_119, %c0_120] : memref<128x1024xbf16, #tpu.memory_space<vmem>>, vector<128x1024xbf16>
    %cst_121 = arith.constant dense<0.000000e+00> : vector<16x1024xf32>
    %304 = tpu.matmul %302, %303, %cst_121 {dimension_numbers = #tpu.dot_dimension_numbers<[1], [0], [0], [1], [0, 0, 1, 1], [], []>} : vector<16x128xbf16>, vector<128x1024xbf16>, vector<16x1024xf32> -> vector<16x1024xf32>
    %305 = arith.truncf %301 : vector<16x128xf32> to vector<16x128xbf16>
    %c0_122 = arith.constant 0 : index
    %c0_123 = arith.constant 0 : index
    %306 = vector.load %arg11[%c0_122, %c0_123] : memref<128x512xbf16, #tpu.memory_space<vmem>>, vector<128x512xbf16>
    %cst_124 = arith.constant dense<0.000000e+00> : vector<16x512xf32>
    %307 = tpu.matmul %305, %306, %cst_124 {dimension_numbers = #tpu.dot_dimension_numbers<[1], [0], [0], [1], [0, 0, 1, 1], [], []>} : vector<16x128xbf16>, vector<128x512xbf16>, vector<16x512xf32> -> vector<16x512xf32>
    %c16_i32_125 = arith.constant 16 : i32
    %308 = arith.muli %c5_i32, %c16_i32_125 : i32
    %309 = tpu.assume_multiple %308, 16 : i32
    %310 = arith.index_cast %309 : i32 to index
    %c0_126 = arith.constant 0 : index
    %311 = vector.load %arg9[%310, %c0_126] : memref<128x512xf32, #tpu.memory_space<vmem>>, vector<16x512xf32>
    %312 = vector.extract_strided_slice %304 {offsets = [0, 0], sizes = [16, 512], strides = [1, 1]} : vector<16x1024xf32> to vector<16x512xf32>
    %313 = arith.addf %311, %312 : vector<16x512xf32>
    %314 = vector.extract_strided_slice %304 {offsets = [0, 512], sizes = [16, 512], strides = [1, 1]} : vector<16x1024xf32> to vector<16x512xf32>
    %315 = arith.addf %314, %307 : vector<16x512xf32>
    %316 = arith.addf %315, %29 : vector<16x512xf32>
    %317 = math.tanh %313 : vector<16x512xf32>
    %318 = vector.extract_strided_slice %317 {offsets = [0, 0], sizes = [16, 128], strides = [1, 1]} : vector<16x512xf32> to vector<16x128xf32>
    %cst_127 = arith.constant 5.000000e-01 : f32
    %319 = vector.broadcast %cst_127 : f32 to vector<16x128xf32>
    %320 = arith.mulf %319, %318 : vector<16x128xf32>
    %cst_128 = arith.constant 5.000000e-01 : f32
    %321 = vector.broadcast %cst_128 : f32 to vector<16x128xf32>
    %322 = arith.addf %320, %321 : vector<16x128xf32>
    %323 = vector.extract_strided_slice %317 {offsets = [0, 128], sizes = [16, 128], strides = [1, 1]} : vector<16x512xf32> to vector<16x128xf32>
    %cst_129 = arith.constant 5.000000e-01 : f32
    %324 = vector.broadcast %cst_129 : f32 to vector<16x128xf32>
    %325 = arith.mulf %324, %323 : vector<16x128xf32>
    %cst_130 = arith.constant 5.000000e-01 : f32
    %326 = vector.broadcast %cst_130 : f32 to vector<16x128xf32>
    %327 = arith.addf %325, %326 : vector<16x128xf32>
    %328 = vector.extract_strided_slice %317 {offsets = [0, 256], sizes = [16, 128], strides = [1, 1]} : vector<16x512xf32> to vector<16x128xf32>
    %329 = vector.extract_strided_slice %317 {offsets = [0, 384], sizes = [16, 128], strides = [1, 1]} : vector<16x512xf32> to vector<16x128xf32>
    %cst_131 = arith.constant 5.000000e-01 : f32
    %330 = vector.broadcast %cst_131 : f32 to vector<16x128xf32>
    %331 = arith.mulf %330, %329 : vector<16x128xf32>
    %cst_132 = arith.constant 5.000000e-01 : f32
    %332 = vector.broadcast %cst_132 : f32 to vector<16x128xf32>
    %333 = arith.addf %331, %332 : vector<16x128xf32>
    %334 = arith.mulf %327, %277 : vector<16x128xf32>
    %335 = arith.mulf %322, %328 : vector<16x128xf32>
    %336 = arith.addf %334, %335 : vector<16x128xf32>
    %337 = math.tanh %336 : vector<16x128xf32>
    %338 = arith.mulf %333, %337 : vector<16x128xf32>
    %339 = math.tanh %316 : vector<16x512xf32>
    %340 = vector.extract_strided_slice %339 {offsets = [0, 0], sizes = [16, 128], strides = [1, 1]} : vector<16x512xf32> to vector<16x128xf32>
    %cst_133 = arith.constant 5.000000e-01 : f32
    %341 = vector.broadcast %cst_133 : f32 to vector<16x128xf32>
    %342 = arith.mulf %341, %340 : vector<16x128xf32>
    %cst_134 = arith.constant 5.000000e-01 : f32
    %343 = vector.broadcast %cst_134 : f32 to vector<16x128xf32>
    %344 = arith.addf %342, %343 : vector<16x128xf32>
    %345 = vector.extract_strided_slice %339 {offsets = [0, 128], sizes = [16, 128], strides = [1, 1]} : vector<16x512xf32> to vector<16x128xf32>
    %cst_135 = arith.constant 5.000000e-01 : f32
    %346 = vector.broadcast %cst_135 : f32 to vector<16x128xf32>
    %347 = arith.mulf %346, %345 : vector<16x128xf32>
    %cst_136 = arith.constant 5.000000e-01 : f32
    %348 = vector.broadcast %cst_136 : f32 to vector<16x128xf32>
    %349 = arith.addf %347, %348 : vector<16x128xf32>
    %350 = vector.extract_strided_slice %339 {offsets = [0, 256], sizes = [16, 128], strides = [1, 1]} : vector<16x512xf32> to vector<16x128xf32>
    %351 = vector.extract_strided_slice %339 {offsets = [0, 384], sizes = [16, 128], strides = [1, 1]} : vector<16x512xf32> to vector<16x128xf32>
    %cst_137 = arith.constant 5.000000e-01 : f32
    %352 = vector.broadcast %cst_137 : f32 to vector<16x128xf32>
    %353 = arith.mulf %352, %351 : vector<16x128xf32>
    %cst_138 = arith.constant 5.000000e-01 : f32
    %354 = vector.broadcast %cst_138 : f32 to vector<16x128xf32>
    %355 = arith.addf %353, %354 : vector<16x128xf32>
    %356 = arith.mulf %349, %299 : vector<16x128xf32>
    %357 = arith.mulf %344, %350 : vector<16x128xf32>
    %358 = arith.addf %356, %357 : vector<16x128xf32>
    %359 = math.tanh %358 : vector<16x128xf32>
    %360 = arith.mulf %355, %359 : vector<16x128xf32>
    %c6_i32 = arith.constant 6 : i32
    %361 = arith.truncf %338 : vector<16x128xf32> to vector<16x128xbf16>
    %c0_139 = arith.constant 0 : index
    %c0_140 = arith.constant 0 : index
    %362 = vector.load %arg10[%c0_139, %c0_140] : memref<128x1024xbf16, #tpu.memory_space<vmem>>, vector<128x1024xbf16>
    %cst_141 = arith.constant dense<0.000000e+00> : vector<16x1024xf32>
    %363 = tpu.matmul %361, %362, %cst_141 {dimension_numbers = #tpu.dot_dimension_numbers<[1], [0], [0], [1], [0, 0, 1, 1], [], []>} : vector<16x128xbf16>, vector<128x1024xbf16>, vector<16x1024xf32> -> vector<16x1024xf32>
    %364 = arith.truncf %360 : vector<16x128xf32> to vector<16x128xbf16>
    %c0_142 = arith.constant 0 : index
    %c0_143 = arith.constant 0 : index
    %365 = vector.load %arg11[%c0_142, %c0_143] : memref<128x512xbf16, #tpu.memory_space<vmem>>, vector<128x512xbf16>
    %cst_144 = arith.constant dense<0.000000e+00> : vector<16x512xf32>
    %366 = tpu.matmul %364, %365, %cst_144 {dimension_numbers = #tpu.dot_dimension_numbers<[1], [0], [0], [1], [0, 0, 1, 1], [], []>} : vector<16x128xbf16>, vector<128x512xbf16>, vector<16x512xf32> -> vector<16x512xf32>
    %c16_i32_145 = arith.constant 16 : i32
    %367 = arith.muli %c6_i32, %c16_i32_145 : i32
    %368 = tpu.assume_multiple %367, 16 : i32
    %369 = arith.index_cast %368 : i32 to index
    %c0_146 = arith.constant 0 : index
    %370 = vector.load %arg9[%369, %c0_146] : memref<128x512xf32, #tpu.memory_space<vmem>>, vector<16x512xf32>
    %371 = vector.extract_strided_slice %363 {offsets = [0, 0], sizes = [16, 512], strides = [1, 1]} : vector<16x1024xf32> to vector<16x512xf32>
    %372 = arith.addf %370, %371 : vector<16x512xf32>
    %373 = vector.extract_strided_slice %363 {offsets = [0, 512], sizes = [16, 512], strides = [1, 1]} : vector<16x1024xf32> to vector<16x512xf32>
    %374 = arith.addf %373, %366 : vector<16x512xf32>
    %375 = arith.addf %374, %29 : vector<16x512xf32>
    %376 = math.tanh %372 : vector<16x512xf32>
    %377 = vector.extract_strided_slice %376 {offsets = [0, 0], sizes = [16, 128], strides = [1, 1]} : vector<16x512xf32> to vector<16x128xf32>
    %cst_147 = arith.constant 5.000000e-01 : f32
    %378 = vector.broadcast %cst_147 : f32 to vector<16x128xf32>
    %379 = arith.mulf %378, %377 : vector<16x128xf32>
    %cst_148 = arith.constant 5.000000e-01 : f32
    %380 = vector.broadcast %cst_148 : f32 to vector<16x128xf32>
    %381 = arith.addf %379, %380 : vector<16x128xf32>
    %382 = vector.extract_strided_slice %376 {offsets = [0, 128], sizes = [16, 128], strides = [1, 1]} : vector<16x512xf32> to vector<16x128xf32>
    %cst_149 = arith.constant 5.000000e-01 : f32
    %383 = vector.broadcast %cst_149 : f32 to vector<16x128xf32>
    %384 = arith.mulf %383, %382 : vector<16x128xf32>
    %cst_150 = arith.constant 5.000000e-01 : f32
    %385 = vector.broadcast %cst_150 : f32 to vector<16x128xf32>
    %386 = arith.addf %384, %385 : vector<16x128xf32>
    %387 = vector.extract_strided_slice %376 {offsets = [0, 256], sizes = [16, 128], strides = [1, 1]} : vector<16x512xf32> to vector<16x128xf32>
    %388 = vector.extract_strided_slice %376 {offsets = [0, 384], sizes = [16, 128], strides = [1, 1]} : vector<16x512xf32> to vector<16x128xf32>
    %cst_151 = arith.constant 5.000000e-01 : f32
    %389 = vector.broadcast %cst_151 : f32 to vector<16x128xf32>
    %390 = arith.mulf %389, %388 : vector<16x128xf32>
    %cst_152 = arith.constant 5.000000e-01 : f32
    %391 = vector.broadcast %cst_152 : f32 to vector<16x128xf32>
    %392 = arith.addf %390, %391 : vector<16x128xf32>
    %393 = arith.mulf %386, %336 : vector<16x128xf32>
    %394 = arith.mulf %381, %387 : vector<16x128xf32>
    %395 = arith.addf %393, %394 : vector<16x128xf32>
    %396 = math.tanh %395 : vector<16x128xf32>
    %397 = arith.mulf %392, %396 : vector<16x128xf32>
    %398 = math.tanh %375 : vector<16x512xf32>
    %399 = vector.extract_strided_slice %398 {offsets = [0, 0], sizes = [16, 128], strides = [1, 1]} : vector<16x512xf32> to vector<16x128xf32>
    %cst_153 = arith.constant 5.000000e-01 : f32
    %400 = vector.broadcast %cst_153 : f32 to vector<16x128xf32>
    %401 = arith.mulf %400, %399 : vector<16x128xf32>
    %cst_154 = arith.constant 5.000000e-01 : f32
    %402 = vector.broadcast %cst_154 : f32 to vector<16x128xf32>
    %403 = arith.addf %401, %402 : vector<16x128xf32>
    %404 = vector.extract_strided_slice %398 {offsets = [0, 128], sizes = [16, 128], strides = [1, 1]} : vector<16x512xf32> to vector<16x128xf32>
    %cst_155 = arith.constant 5.000000e-01 : f32
    %405 = vector.broadcast %cst_155 : f32 to vector<16x128xf32>
    %406 = arith.mulf %405, %404 : vector<16x128xf32>
    %cst_156 = arith.constant 5.000000e-01 : f32
    %407 = vector.broadcast %cst_156 : f32 to vector<16x128xf32>
    %408 = arith.addf %406, %407 : vector<16x128xf32>
    %409 = vector.extract_strided_slice %398 {offsets = [0, 256], sizes = [16, 128], strides = [1, 1]} : vector<16x512xf32> to vector<16x128xf32>
    %410 = vector.extract_strided_slice %398 {offsets = [0, 384], sizes = [16, 128], strides = [1, 1]} : vector<16x512xf32> to vector<16x128xf32>
    %cst_157 = arith.constant 5.000000e-01 : f32
    %411 = vector.broadcast %cst_157 : f32 to vector<16x128xf32>
    %412 = arith.mulf %411, %410 : vector<16x128xf32>
    %cst_158 = arith.constant 5.000000e-01 : f32
    %413 = vector.broadcast %cst_158 : f32 to vector<16x128xf32>
    %414 = arith.addf %412, %413 : vector<16x128xf32>
    %415 = arith.mulf %408, %358 : vector<16x128xf32>
    %416 = arith.mulf %403, %409 : vector<16x128xf32>
    %417 = arith.addf %415, %416 : vector<16x128xf32>
    %418 = math.tanh %417 : vector<16x128xf32>
    %419 = arith.mulf %414, %418 : vector<16x128xf32>
    %c7_i32 = arith.constant 7 : i32
    %420 = arith.truncf %397 : vector<16x128xf32> to vector<16x128xbf16>
    %c0_159 = arith.constant 0 : index
    %c0_160 = arith.constant 0 : index
    %421 = vector.load %arg10[%c0_159, %c0_160] : memref<128x1024xbf16, #tpu.memory_space<vmem>>, vector<128x1024xbf16>
    %cst_161 = arith.constant dense<0.000000e+00> : vector<16x1024xf32>
    %422 = tpu.matmul %420, %421, %cst_161 {dimension_numbers = #tpu.dot_dimension_numbers<[1], [0], [0], [1], [0, 0, 1, 1], [], []>} : vector<16x128xbf16>, vector<128x1024xbf16>, vector<16x1024xf32> -> vector<16x1024xf32>
    %423 = arith.truncf %419 : vector<16x128xf32> to vector<16x128xbf16>
    %c0_162 = arith.constant 0 : index
    %c0_163 = arith.constant 0 : index
    %424 = vector.load %arg11[%c0_162, %c0_163] : memref<128x512xbf16, #tpu.memory_space<vmem>>, vector<128x512xbf16>
    %cst_164 = arith.constant dense<0.000000e+00> : vector<16x512xf32>
    %425 = tpu.matmul %423, %424, %cst_164 {dimension_numbers = #tpu.dot_dimension_numbers<[1], [0], [0], [1], [0, 0, 1, 1], [], []>} : vector<16x128xbf16>, vector<128x512xbf16>, vector<16x512xf32> -> vector<16x512xf32>
    %c16_i32_165 = arith.constant 16 : i32
    %426 = arith.muli %c7_i32, %c16_i32_165 : i32
    %427 = tpu.assume_multiple %426, 16 : i32
    %428 = arith.index_cast %427 : i32 to index
    %c0_166 = arith.constant 0 : index
    %429 = vector.load %arg9[%428, %c0_166] : memref<128x512xf32, #tpu.memory_space<vmem>>, vector<16x512xf32>
    %430 = vector.extract_strided_slice %422 {offsets = [0, 0], sizes = [16, 512], strides = [1, 1]} : vector<16x1024xf32> to vector<16x512xf32>
    %431 = arith.addf %429, %430 : vector<16x512xf32>
    %432 = vector.extract_strided_slice %422 {offsets = [0, 512], sizes = [16, 512], strides = [1, 1]} : vector<16x1024xf32> to vector<16x512xf32>
    %433 = arith.addf %432, %425 : vector<16x512xf32>
    %434 = arith.addf %433, %29 : vector<16x512xf32>
    %435 = math.tanh %431 : vector<16x512xf32>
    %436 = vector.extract_strided_slice %435 {offsets = [0, 0], sizes = [16, 128], strides = [1, 1]} : vector<16x512xf32> to vector<16x128xf32>
    %cst_167 = arith.constant 5.000000e-01 : f32
    %437 = vector.broadcast %cst_167 : f32 to vector<16x128xf32>
    %438 = arith.mulf %437, %436 : vector<16x128xf32>
    %cst_168 = arith.constant 5.000000e-01 : f32
    %439 = vector.broadcast %cst_168 : f32 to vector<16x128xf32>
    %440 = arith.addf %438, %439 : vector<16x128xf32>
    %441 = vector.extract_strided_slice %435 {offsets = [0, 128], sizes = [16, 128], strides = [1, 1]} : vector<16x512xf32> to vector<16x128xf32>
    %cst_169 = arith.constant 5.000000e-01 : f32
    %442 = vector.broadcast %cst_169 : f32 to vector<16x128xf32>
    %443 = arith.mulf %442, %441 : vector<16x128xf32>
    %cst_170 = arith.constant 5.000000e-01 : f32
    %444 = vector.broadcast %cst_170 : f32 to vector<16x128xf32>
    %445 = arith.addf %443, %444 : vector<16x128xf32>
    %446 = vector.extract_strided_slice %435 {offsets = [0, 256], sizes = [16, 128], strides = [1, 1]} : vector<16x512xf32> to vector<16x128xf32>
    %447 = vector.extract_strided_slice %435 {offsets = [0, 384], sizes = [16, 128], strides = [1, 1]} : vector<16x512xf32> to vector<16x128xf32>
    %cst_171 = arith.constant 5.000000e-01 : f32
    %448 = vector.broadcast %cst_171 : f32 to vector<16x128xf32>
    %449 = arith.mulf %448, %447 : vector<16x128xf32>
    %cst_172 = arith.constant 5.000000e-01 : f32
    %450 = vector.broadcast %cst_172 : f32 to vector<16x128xf32>
    %451 = arith.addf %449, %450 : vector<16x128xf32>
    %452 = arith.mulf %445, %395 : vector<16x128xf32>
    %453 = arith.mulf %440, %446 : vector<16x128xf32>
    %454 = arith.addf %452, %453 : vector<16x128xf32>
    %455 = math.tanh %454 : vector<16x128xf32>
    %456 = arith.mulf %451, %455 : vector<16x128xf32>
    %457 = math.tanh %434 : vector<16x512xf32>
    %458 = vector.extract_strided_slice %457 {offsets = [0, 0], sizes = [16, 128], strides = [1, 1]} : vector<16x512xf32> to vector<16x128xf32>
    %cst_173 = arith.constant 5.000000e-01 : f32
    %459 = vector.broadcast %cst_173 : f32 to vector<16x128xf32>
    %460 = arith.mulf %459, %458 : vector<16x128xf32>
    %cst_174 = arith.constant 5.000000e-01 : f32
    %461 = vector.broadcast %cst_174 : f32 to vector<16x128xf32>
    %462 = arith.addf %460, %461 : vector<16x128xf32>
    %463 = vector.extract_strided_slice %457 {offsets = [0, 128], sizes = [16, 128], strides = [1, 1]} : vector<16x512xf32> to vector<16x128xf32>
    %cst_175 = arith.constant 5.000000e-01 : f32
    %464 = vector.broadcast %cst_175 : f32 to vector<16x128xf32>
    %465 = arith.mulf %464, %463 : vector<16x128xf32>
    %cst_176 = arith.constant 5.000000e-01 : f32
    %466 = vector.broadcast %cst_176 : f32 to vector<16x128xf32>
    %467 = arith.addf %465, %466 : vector<16x128xf32>
    %468 = vector.extract_strided_slice %457 {offsets = [0, 256], sizes = [16, 128], strides = [1, 1]} : vector<16x512xf32> to vector<16x128xf32>
    %469 = vector.extract_strided_slice %457 {offsets = [0, 384], sizes = [16, 128], strides = [1, 1]} : vector<16x512xf32> to vector<16x128xf32>
    %cst_177 = arith.constant 5.000000e-01 : f32
    %470 = vector.broadcast %cst_177 : f32 to vector<16x128xf32>
    %471 = arith.mulf %470, %469 : vector<16x128xf32>
    %cst_178 = arith.constant 5.000000e-01 : f32
    %472 = vector.broadcast %cst_178 : f32 to vector<16x128xf32>
    %473 = arith.addf %471, %472 : vector<16x128xf32>
    %474 = arith.mulf %467, %417 : vector<16x128xf32>
    %475 = arith.mulf %462, %468 : vector<16x128xf32>
    %476 = arith.addf %474, %475 : vector<16x128xf32>
    %477 = math.tanh %476 : vector<16x128xf32>
    %478 = arith.mulf %473, %477 : vector<16x128xf32>
    %c7_i32_179 = arith.constant 7 : i32
    %479 = arith.truncf %456 : vector<16x128xf32> to vector<16x128xbf16>
    %c0_180 = arith.constant 0 : index
    %c0_181 = arith.constant 0 : index
    %480 = vector.load %arg10[%c0_180, %c0_181] : memref<128x1024xbf16, #tpu.memory_space<vmem>>, vector<128x1024xbf16>
    %cst_182 = arith.constant dense<0.000000e+00> : vector<16x1024xf32>
    %481 = tpu.matmul %479, %480, %cst_182 {dimension_numbers = #tpu.dot_dimension_numbers<[1], [0], [0], [1], [0, 0, 1, 1], [], []>} : vector<16x128xbf16>, vector<128x1024xbf16>, vector<16x1024xf32> -> vector<16x1024xf32>
    %482 = arith.truncf %478 : vector<16x128xf32> to vector<16x128xbf16>
    %c0_183 = arith.constant 0 : index
    %c0_184 = arith.constant 0 : index
    %483 = vector.load %arg11[%c0_183, %c0_184] : memref<128x512xbf16, #tpu.memory_space<vmem>>, vector<128x512xbf16>
    %cst_185 = arith.constant dense<0.000000e+00> : vector<16x512xf32>
    %484 = tpu.matmul %482, %483, %cst_185 {dimension_numbers = #tpu.dot_dimension_numbers<[1], [0], [0], [1], [0, 0, 1, 1], [], []>} : vector<16x128xbf16>, vector<128x512xbf16>, vector<16x512xf32> -> vector<16x512xf32>
    %485 = vector.extract_strided_slice %481 {offsets = [0, 512], sizes = [16, 512], strides = [1, 1]} : vector<16x1024xf32> to vector<16x512xf32>
    %486 = arith.addf %485, %484 : vector<16x512xf32>
    %487 = arith.addf %486, %29 : vector<16x512xf32>
    %488 = math.tanh %487 : vector<16x512xf32>
    %489 = vector.extract_strided_slice %488 {offsets = [0, 0], sizes = [16, 128], strides = [1, 1]} : vector<16x512xf32> to vector<16x128xf32>
    %cst_186 = arith.constant 5.000000e-01 : f32
    %490 = vector.broadcast %cst_186 : f32 to vector<16x128xf32>
    %491 = arith.mulf %490, %489 : vector<16x128xf32>
    %cst_187 = arith.constant 5.000000e-01 : f32
    %492 = vector.broadcast %cst_187 : f32 to vector<16x128xf32>
    %493 = arith.addf %491, %492 : vector<16x128xf32>
    %494 = vector.extract_strided_slice %488 {offsets = [0, 128], sizes = [16, 128], strides = [1, 1]} : vector<16x512xf32> to vector<16x128xf32>
    %cst_188 = arith.constant 5.000000e-01 : f32
    %495 = vector.broadcast %cst_188 : f32 to vector<16x128xf32>
    %496 = arith.mulf %495, %494 : vector<16x128xf32>
    %cst_189 = arith.constant 5.000000e-01 : f32
    %497 = vector.broadcast %cst_189 : f32 to vector<16x128xf32>
    %498 = arith.addf %496, %497 : vector<16x128xf32>
    %499 = vector.extract_strided_slice %488 {offsets = [0, 256], sizes = [16, 128], strides = [1, 1]} : vector<16x512xf32> to vector<16x128xf32>
    %500 = vector.extract_strided_slice %488 {offsets = [0, 384], sizes = [16, 128], strides = [1, 1]} : vector<16x512xf32> to vector<16x128xf32>
    %cst_190 = arith.constant 5.000000e-01 : f32
    %501 = vector.broadcast %cst_190 : f32 to vector<16x128xf32>
    %502 = arith.mulf %501, %500 : vector<16x128xf32>
    %cst_191 = arith.constant 5.000000e-01 : f32
    %503 = vector.broadcast %cst_191 : f32 to vector<16x128xf32>
    %504 = arith.addf %502, %503 : vector<16x128xf32>
    %505 = arith.mulf %498, %476 : vector<16x128xf32>
    %506 = arith.mulf %493, %499 : vector<16x128xf32>
    %507 = arith.addf %505, %506 : vector<16x128xf32>
    %508 = math.tanh %507 : vector<16x128xf32>
    %509 = arith.mulf %504, %508 : vector<16x128xf32>
    %c0_192 = arith.constant 0 : index
    %c0_193 = arith.constant 0 : index
    %c0_194 = arith.constant 0 : index
    %510 = vector.load %arg8[%c0_192, %c0_193, %c0_194] : memref<2x16x128xf32, #tpu.memory_space<vmem>>, vector<1x16x128xf32>
    %511 = vector.shape_cast %510 : vector<1x16x128xf32> to vector<16x128xf32>
    %512 = vector.shape_cast %456 : vector<16x128xf32> to vector<1x16x128xf32>
    tpu.vector_store %arg8[%c0_192, %c0_193, %c0_194], %512 {strides = array<i32>} : memref<2x16x128xf32, #tpu.memory_space<vmem>>, vector<1x16x128xf32>,
    %c1_195 = arith.constant 1 : index
    %c0_196 = arith.constant 0 : index
    %c0_197 = arith.constant 0 : index
    %513 = vector.load %arg8[%c1_195, %c0_196, %c0_197] : memref<2x16x128xf32, #tpu.memory_space<vmem>>, vector<1x16x128xf32>
    %514 = vector.shape_cast %513 : vector<1x16x128xf32> to vector<16x128xf32>
    %515 = vector.shape_cast %509 : vector<16x128xf32> to vector<1x16x128xf32>
    tpu.vector_store %arg8[%c1_195, %c0_196, %c0_197], %515 {strides = array<i32>} : memref<2x16x128xf32, #tpu.memory_space<vmem>>, vector<1x16x128xf32>,
    return
  }
}

</mosaic_0001>

<llo_original>
// kernel: state_refactor_forward.1
$region0: #{state_refactor_forward.1}
  #allocation0 [shape = 'u32[]', space=smem, size = 0x4, offset = 0x4, fixed_abs, tag = 'smem constant byte address 0x4 - core index']
  #allocation1 [shape = 'u32[144,128]{1,0:T(1,128)}', space=vmem, size = 0x12000, scoped, tag = 'internal scratch']
  #allocation2 [shape = 'f32[128,512]{1,0:T(8,128)}', space=vmem, size = 0x40000, scoped, tag = 'scratch operand']
  #allocation3 [shape = 'bf16[128,1024]{1,0:T(16,128)(2,1)}', space=vmem, size = 0x40000, scoped, tag = 'scratch operand']
  #allocation4 [shape = 'bf16[128,512]{1,0:T(16,128)(2,1)}', space=vmem, size = 0x20000, scoped, tag = 'scratch operand']
  #allocation5 [shape = 'f32[1,512]{1,0:T(1,128)}', space=vmem, size = 0x800, scoped, tag = 'scratch operand']
  #allocation6 [shape = 'f32[2,16,128]{2,1,0:T(8,128)}', space=vmem, size = 0x4000, scoped, tag = 'scratch operand']
  #allocation7 [shape = 'f32[2,16,128]{2,1,0:T(8,128)}', space=vmem, size = 0x4000, scoped, tag = 'scratch operand']
  #allocation8 [shape = 's32[5]{0}', space=sflag, size = 0x14, scoped, tag = 'scratch operand']
  #allocation11 [shape = 's32[]', space=sflag, size = 0x4, offset = 0, fixed_abs, tag = 'sflag constant byte address 0x0 - dummy sync flag']
  #allocation13 [shape = 's32[]', space=sflag, size = 0x4, offset = 0, fixed_abs, tag = 'sflag constant byte address 0x0 - dummy sync flag']
  #allocation14 [shape = 's32[]', space=sflag, size = 0x4, offset = 0, fixed_abs, tag = 'sflag constant byte address 0x0 - dummy sync flag']
  #allocation15 [shape = 's32[]', space=sflag, size = 0x4, offset = 0, fixed_abs, tag = 'sflag constant byte address 0x0 - dummy sync flag']
  #allocation16 [shape = 's32[]', space=sflag, size = 0x4, offset = 0, fixed_abs, tag = 'sflag constant byte address 0x0 - dummy sync flag']
  %s0 = inlined_call_operand.vmem [shape: bf16[128,256], index: 0, kind: input, shape index: {}]
  %s1 = inlined_call_operand.hbm [shape: bf16[256,512], index: 1, kind: input, shape index: {}]
  %s2 = inlined_call_operand.vmem [shape: f32[1,512], index: 2, kind: input, shape index: {}]
  %s3 = inlined_call_operand.hbm [shape: bf16[128,1024], index: 3, kind: input, shape index: {}]
  %s4 = inlined_call_operand.vmem [shape: bf16[128,512], index: 4, kind: input, shape index: {}]
  %s5 = inlined_call_operand.vmem [shape: f32[1,512], index: 5, kind: input, shape index: {}]
  %s6 = inlined_call_operand.vmem [shape: f32[2,16,128], index: 6, kind: input, shape index: {}]
  %s7 = inlined_call_operand.vmem [shape: f32[2,16,128], index: 7, kind: input, shape index: {}]
  %s8 = inlined_call_operand.vmem [shape: f32[2,16,128], index: 8, kind: output, shape index: {}]
  %s9 = sld [smem:[#allocation0]]
  $region161: #{state_refactor_forward.1} parent=0
    _
  %s11 = ssub.s32 1, %s9
  %s12 = scalar_select 0, %s11, %s9
  $region1: #{state_refactor_forward.1} parent=0
    #allocation9 [shape = 'u8[262144]{0}', space=vmem, size = 0x40000, scoped, tag = 'input window, operand 1, single buffered']
    #allocation10 [shape = 's32[1]{0}', space=sflag, size = 0x4, scoped, tag = 'scoped memory for state_refactor_forward.1']
    #allocation12 [shape = 'u32[9]{0}', space=smem, size = 0x24, scoped, tag = 'DMA stride descriptor']
    %13 = vsyncpa [#allocation10], 0
    // Predicated region
    $region2: #{state_refactor_forward.1} parent=1 // pred_check
      _
    $region3: #{state_refactor_forward.1} parent=1 // pred_check_branch
      %15 = sbr.rel (0) target = $region5
    $region4: #{state_refactor_forward.1} parent=1 // pred_region
      _
    $region5: #{state_refactor_forward.1} parent=1 // pred_fallthru
      _
    // Predicated region
    $region6: #{state_refactor_forward.1} parent=1 // pred_check
      _
    $region7: #{state_refactor_forward.1} parent=1 // pred_check_branch
      %17 = sbr.rel (0) target = $region9
    $region8: #{state_refactor_forward.1} parent=1 // pred_region
      %s19 = ssub.s32 8192, 8192
      %20 = vsyncadd [#allocation10], %s19
      %s21 = sshll.u32 [#allocation9], 4
      %s22 = int_to_ptr.vmem [resolvable:$true] %s21
      %27 = dma.hbm_to_vmem [thread:$0]  %s1, 8192, %s22, [#allocation10], 256, 256, 16
    $region9: #{state_refactor_forward.1} parent=1 // pred_fallthru
      _
    // Predicated region
    $region10: #{state_refactor_forward.1} parent=1 // pred_check
      _
    $region11: #{state_refactor_forward.1} parent=1 // pred_check_branch
      %29 = sbr.rel (0) target = $region13
    $region12: #{state_refactor_forward.1} parent=1 // pred_region
      _
    $region13: #{state_refactor_forward.1} parent=1 // pred_fallthru
      _
    // Predicated region
    $region14: #{state_refactor_forward.1} parent=1 // pred_check
      _
    $region15: #{state_refactor_forward.1} parent=1 // pred_check_branch
      %31 = sbr.rel (0) target = $region17
    $region16: #{state_refactor_forward.1} parent=1 // pred_region
      %32 = dma.done [#allocation10], 8192
    $region17: #{state_refactor_forward.1} parent=1 // pred_fallthru
      _
    %s35 = sshll.u32 1, 14
    %s36 = sxor.u32 4294967295, %s35
    %s38 = sld [smem:[#allocation0]]
    %s39 = sadd.s32 2, %s38
    %s41 = sshll.u32 7, 26
    %s42 = sxor.u32 4294967295, %s41
    %s43 = sand.u32 0, %s42
    %s44 = sshll.u32 %s39, 26
    %s45 = sor.u32 %s43, %s44
    %s46 = sshll.u32 [#allocation3], 4
    %s47 = int_to_ptr.vmem [resolvable:$true] %s46
    %50 = sst [smem:[#allocation12]] 1024
    %s51 = scalar_lea.smem [#allocation12], 1
    %52 = sst [smem:[%s51]] 1024
    %s53 = scalar_lea.smem [#allocation12], 2
    %54 = sst [smem:[%s53]] 8
    %s55 = scalar_lea.smem [#allocation12], 3
    %56 = sst [smem:[%s55]] 64
    %s57 = scalar_lea.smem [#allocation12], 4
    %58 = sst [smem:[%s57]] 128
    %s59 = scalar_lea.smem [#allocation12], 5
    %60 = sst [smem:[%s59]] 2
    %s61 = scalar_lea.smem [#allocation12], 6
    %62 = sst [smem:[%s61]] 512
    %s63 = scalar_lea.smem [#allocation12], 7
    %64 = sst [smem:[%s63]] 64
    %s65 = scalar_lea.smem [#allocation12], 8
    %66 = sst [smem:[%s65]] 4
    %68 = dma.general %s3, 8192, %s47, [#allocation8], [#allocation11], [#allocation12], %s45, 0
    %s69 = scalar_lea.sflag [#allocation8], 1
    %p71 = scmp.lt.u32.totalorder 4, 8
    %p72 = pneg %p71
    // Predicated region
    $region18: #{state_refactor_forward.1} parent=1 // pred_check
      _
    $region19: #{state_refactor_forward.1} parent=1 // pred_check_branch
      %74 = sbr.rel (%p71) target = $region21
    $region20: #{state_refactor_forward.1} parent=1 // pred_region
      %s215 = sand.u32 4, 7
      %p216 = scmp.eq.s32.totalorder %s215, 0
      %p217 = pneg %p216
      // Predicated region
      $region33: #{state_refactor_forward.1} parent=20 // pred_check
        _
      $region34: #{state_refactor_forward.1} parent=20 // pred_check_branch
        %219 = sbr.rel (%p216) target = $region36
      $region35: #{state_refactor_forward.1} parent=20 // pred_region
        %s220 = sand.u32 4, 7
        %s221 = ssub.s32 4, %s220
        %s222 = scalar_lea.vmem %s4, %s221
        %s223 = ssub.s32 4, %s220
        %s224 = scalar_lea.vmem [#allocation4], %s223
        loop: start=0, step=1, limit=1
        $region37: #{state_refactor_forward.1} parent=35 // loop_pre_header
          _
        $region38: #{state_refactor_forward.1} parent=35 // loop_header
          %s226 = sphi 0, %s230
          %p227 = scmp.ge.s32.totalorder %s226, 1
          %s231 = sphi %s4, %s4
          %s232 = sphi [#allocation4], [#allocation4]
        $region39: #{state_refactor_forward.1} parent=35 // loop_header_branch
          %229 = sbr.rel (%p227) target = $region43
        $region40: #{state_refactor_forward.1} parent=35 // loop_body
          _
        $region41: #{state_refactor_forward.1} parent=35 // loop_footer
          %s230 = sadd.s32 1, %s226
        $region42: #{state_refactor_forward.1} parent=35 // loop_footer_branch
          %225 = sbr.rel target = $region38
        $region43: #{state_refactor_forward.1} parent=35 // loop_exit
          _
        %s233 = sshllo.u32 0, %s220
        loop: start=0, step=1, limit=1
        $region44: #{state_refactor_forward.1} parent=35 // loop_pre_header
          _
        $region45: #{state_refactor_forward.1} parent=35 // loop_header
          %s235 = sphi 0, %s239
          %p236 = scmp.ge.s32.totalorder %s235, 1
          %s240 = sphi %s222, %s222
          %s241 = sphi %s224, %s224
        $region46: #{state_refactor_forward.1} parent=35 // loop_header_branch
          %238 = sbr.rel (%p236) target = $region50
        $region47: #{state_refactor_forward.1} parent=35 // loop_body
          %v242 = vld [vmem:[%s240] sm:%s233]
          %243 = vst [vmem:[%s241] sm:%s233] %v242
          %v244 = vld [vmem:[%s240 + $0x10] sm:%s233]
          %245 = vst [vmem:[%s241 + $0x4] sm:%s233] %v244
          %v246 = vld [vmem:[%s240 + $0x4] sm:%s233]
          %247 = vst [vmem:[%s241 + $0x8] sm:%s233] %v246
          %v248 = vld [vmem:[%s240 + $0x14] sm:%s233]
          %249 = vst [vmem:[%s241 + $0xc] sm:%s233] %v248
          %v250 = vld [vmem:[%s240 + $0x8] sm:%s233]
          %251 = vst [vmem:[%s241 + $0x10] sm:%s233] %v250
          %v252 = vld [vmem:[%s240 + $0x18] sm:%s233]
          %253 = vst [vmem:[%s241 + $0x14] sm:%s233] %v252
          %v254 = vld [vmem:[%s240 + $0xc] sm:%s233]
          %255 = vst [vmem:[%s241 + $0x18] sm:%s233] %v254
          %v256 = vld [vmem:[%s240 + $0x1c] sm:%s233]
          %257 = vst [vmem:[%s241 + $0x1c] sm:%s233] %v256
          %v258 = vld [vmem:[%s240 + $0x20] sm:%s233]
          %259 = vst [vmem:[%s241 + $0x20] sm:%s233] %v258
          %v260 = vld [vmem:[%s240 + $0x30] sm:%s233]
          %261 = vst [vmem:[%s241 + $0x24] sm:%s233] %v260
          %v262 = vld [vmem:[%s240 + $0x24] sm:%s233]
          %263 = vst [vmem:[%s241 + $0x28] sm:%s233] %v262
          %v264 = vld [vmem:[%s240 + $0x34] sm:%s233]
          %265 = vst [vmem:[%s241 + $0x2c] sm:%s233] %v264
          %v266 = vld [vmem:[%s240 + $0x28] sm:%s233]
          %267 = vst [vmem:[%s241 + $0x30] sm:%s233] %v266
          %v268 = vld [vmem:[%s240 + $0x38] sm:%s233]
          %269 = vst [vmem:[%s241 + $0x34] sm:%s233] %v268
          %v270 = vld [vmem:[%s240 + $0x2c] sm:%s233]
          %271 = vst [vmem:[%s241 + $0x38] sm:%s233] %v270
          %v272 = vld [vmem:[%s240 + $0x3c] sm:%s233]
          %273 = vst [vmem:[%s241 + $0x3c] sm:%s233] %v272
          %v274 = vld [vmem:[%s240 + $0x40] sm:%s233]
          %275 = vst [vmem:[%s241 + $0x40] sm:%s233] %v274
          %v276 = vld [vmem:[%s240 + $0x50] sm:%s233]
          %277 = vst [vmem:[%s241 + $0x44] sm:%s233] %v276
          %v278 = vld [vmem:[%s240 + $0x44] sm:%s233]
          %279 = vst [vmem:[%s241 + $0x48] sm:%s233] %v278
          %v280 = vld [vmem:[%s240 + $0x54] sm:%s233]
          %281 = vst [vmem:[%s241 + $0x4c] sm:%s233] %v280
          %v282 = vld [vmem:[%s240 + $0x48] sm:%s233]
          %283 = vst [vmem:[%s241 + $0x50] sm:%s233] %v282
          %v284 = vld [vmem:[%s240 + $0x58] sm:%s233]
          %285 = vst [vmem:[%s241 + $0x54] sm:%s233] %v284
          %v286 = vld [vmem:[%s240 + $0x4c] sm:%s233]
          %287 = vst [vmem:[%s241 + $0x58] sm:%s233] %v286
          %v288 = vld [vmem:[%s240 + $0x5c] sm:%s233]
          %289 = vst [vmem:[%s241 + $0x5c] sm:%s233] %v288
          %v290 = vld [vmem:[%s240 + $0x60] sm:%s233]
          %291 = vst [vmem:[%s241 + $0x60] sm:%s233] %v290
          %v292 = vld [vmem:[%s240 + $0x70] sm:%s233]
          %293 = vst [vmem:[%s241 + $0x64] sm:%s233] %v292
          %v294 = vld [vmem:[%s240 + $0x64] sm:%s233]
          %295 = vst [vmem:[%s241 + $0x68] sm:%s233] %v294
          %v296 = vld [vmem:[%s240 + $0x74] sm:%s233]
          %297 = vst [vmem:[%s241 + $0x6c] sm:%s233] %v296
          %v298 = vld [vmem:[%s240 + $0x68] sm:%s233]
          %299 = vst [vmem:[%s241 + $0x70] sm:%s233] %v298
          %v300 = vld [vmem:[%s240 + $0x78] sm:%s233]
          %301 = vst [vmem:[%s241 + $0x74] sm:%s233] %v300
          %v302 = vld [vmem:[%s240 + $0x6c] sm:%s233]
          %303 = vst [vmem:[%s241 + $0x78] sm:%s233] %v302
          %v304 = vld [vmem:[%s240 + $0x7c] sm:%s233]
          %305 = vst [vmem:[%s241 + $0x7c] sm:%s233] %v304
          %v306 = vld [vmem:[%s240 + $0x80] sm:%s233]
          %307 = vst [vmem:[%s241 + $0x80] sm:%s233] %v306
          %v308 = vld [vmem:[%s240 + $0x90] sm:%s233]
          %309 = vst [vmem:[%s241 + $0x84] sm:%s233] %v308
          %v310 = vld [vmem:[%s240 + $0x84] sm:%s233]
          %311 = vst [vmem:[%s241 + $0x88] sm:%s233] %v310
          %v312 = vld [vmem:[%s240 + $0x94] sm:%s233]
          %313 = vst [vmem:[%s241 + $0x8c] sm:%s233] %v312
          %v314 = vld [vmem:[%s240 + $0x88] sm:%s233]
          %315 = vst [vmem:[%s241 + $0x90] sm:%s233] %v314
          %v316 = vld [vmem:[%s240 + $0x98] sm:%s233]
          %317 = vst [vmem:[%s241 + $0x94] sm:%s233] %v316
          %v318 = vld [vmem:[%s240 + $0x8c] sm:%s233]
          %319 = vst [vmem:[%s241 + $0x98] sm:%s233] %v318
          %v320 = vld [vmem:[%s240 + $0x9c] sm:%s233]
          %321 = vst [vmem:[%s241 + $0x9c] sm:%s233] %v320
          %v322 = vld [vmem:[%s240 + $0xa0] sm:%s233]
          %323 = vst [vmem:[%s241 + $0xa0] sm:%s233] %v322
          %v324 = vld [vmem:[%s240 + $0xb0] sm:%s233]
          %325 = vst [vmem:[%s241 + $0xa4] sm:%s233] %v324
          %v326 = vld [vmem:[%s240 + $0xa4] sm:%s233]
          %327 = vst [vmem:[%s241 + $0xa8] sm:%s233] %v326
          %v328 = vld [vmem:[%s240 + $0xb4] sm:%s233]
          %329 = vst [vmem:[%s241 + $0xac] sm:%s233] %v328
          %v330 = vld [vmem:[%s240 + $0xa8] sm:%s233]
          %331 = vst [vmem:[%s241 + $0xb0] sm:%s233] %v330
          %v332 = vld [vmem:[%s240 + $0xb8] sm:%s233]
          %333 = vst [vmem:[%s241 + $0xb4] sm:%s233] %v332
          %v334 = vld [vmem:[%s240 + $0xac] sm:%s233]
          %335 = vst [vmem:[%s241 + $0xb8] sm:%s233] %v334
          %v336 = vld [vmem:[%s240 + $0xbc] sm:%s233]
          %337 = vst [vmem:[%s241 + $0xbc] sm:%s233] %v336
          %v338 = vld [vmem:[%s240 + $0xc0] sm:%s233]
          %339 = vst [vmem:[%s241 + $0xc0] sm:%s233] %v338
          %v340 = vld [vmem:[%s240 + $0xd0] sm:%s233]
          %341 = vst [vmem:[%s241 + $0xc4] sm:%s233] %v340
          %v342 = vld [vmem:[%s240 + $0xc4] sm:%s233]
          %343 = vst [vmem:[%s241 + $0xc8] sm:%s233] %v342
          %v344 = vld [vmem:[%s240 + $0xd4] sm:%s233]
          %345 = vst [vmem:[%s241 + $0xcc] sm:%s233] %v344
          %v346 = vld [vmem:[%s240 + $0xc8] sm:%s233]
          %347 = vst [vmem:[%s241 + $0xd0] sm:%s233] %v346
          %v348 = vld [vmem:[%s240 + $0xd8] sm:%s233]
          %349 = vst [vmem:[%s241 + $0xd4] sm:%s233] %v348
          %v350 = vld [vmem:[%s240 + $0xcc] sm:%s233]
          %351 = vst [vmem:[%s241 + $0xd8] sm:%s233] %v350
          %v352 = vld [vmem:[%s240 + $0xdc] sm:%s233]
          %353 = vst [vmem:[%s241 + $0xdc] sm:%s233] %v352
          %v354 = vld [vmem:[%s240 + $0xe0] sm:%s233]
          %355 = vst [vmem:[%s241 + $0xe0] sm:%s233] %v354
          %v356 = vld [vmem:[%s240 + $0xf0] sm:%s233]
          %357 = vst [vmem:[%s241 + $0xe4] sm:%s233] %v356
          %v358 = vld [vmem:[%s240 + $0xe4] sm:%s233]
          %359 = vst [vmem:[%s241 + $0xe8] sm:%s233] %v358
          %v360 = vld [vmem:[%s240 + $0xf4] sm:%s233]
          %361 = vst [vmem:[%s241 + $0xec] sm:%s233] %v360
          %v362 = vld [vmem:[%s240 + $0xe8] sm:%s233]
          %363 = vst [vmem:[%s241 + $0xf0] sm:%s233] %v362
          %v364 = vld [vmem:[%s240 + $0xf8] sm:%s233]
          %365 = vst [vmem:[%s241 + $0xf4] sm:%s233] %v364
          %v366 = vld [vmem:[%s240 + $0xec] sm:%s233]
          %367 = vst [vmem:[%s241 + $0xf8] sm:%s233] %v366
          %v368 = vld [vmem:[%s240 + $0xfc] sm:%s233]
          %369 = vst [vmem:[%s241 + $0xfc] sm:%s233] %v368
        $region48: #{state_refactor_forward.1} parent=35 // loop_footer
          %s239 = sadd.s32 1, %s235
        $region49: #{state_refactor_forward.1} parent=35 // loop_footer_branch
          %234 = sbr.rel target = $region45
        $region50: #{state_refactor_forward.1} parent=35 // loop_exit
          _
      $region36: #{state_refactor_forward.1} parent=20 // pred_fallthru
        _
    $region21: #{state_refactor_forward.1} parent=1 // pred_fallthru
      _
    // Predicated region
    $region22: #{state_refactor_forward.1} parent=1 // pred_check
      %p75 = pneg %p71
    $region23: #{state_refactor_forward.1} parent=1 // pred_check_branch
      %77 = sbr.rel (%p75) target = $region25
    $region24: #{state_refactor_forward.1} parent=1 // pred_region
      %s78 = sshllo.u32 0, 4
      loop: start=0, step=1, limit=1
      $region26: #{state_refactor_forward.1} parent=24 // loop_pre_header
        _
      $region27: #{state_refactor_forward.1} parent=24 // loop_header
        %s80 = sphi 0, %s84
        %p81 = scmp.ge.s32.totalorder %s80, 1
        %s85 = sphi %s4, %s4
        %s86 = sphi [#allocation4], [#allocation4]
      $region28: #{state_refactor_forward.1} parent=24 // loop_header_branch
        %83 = sbr.rel (%p81) target = $region32
      $region29: #{state_refactor_forward.1} parent=24 // loop_body
        %v87 = vld [vmem:[%s85] sm:%s78]
        %88 = vst [vmem:[%s86] sm:%s78] %v87
        %v89 = vld [vmem:[%s85 + $0x10] sm:%s78]
        %90 = vst [vmem:[%s86 + $0x4] sm:%s78] %v89
        %v91 = vld [vmem:[%s85 + $0x4] sm:%s78]
        %92 = vst [vmem:[%s86 + $0x8] sm:%s78] %v91
        %v93 = vld [vmem:[%s85 + $0x14] sm:%s78]
        %94 = vst [vmem:[%s86 + $0xc] sm:%s78] %v93
        %v95 = vld [vmem:[%s85 + $0x8] sm:%s78]
        %96 = vst [vmem:[%s86 + $0x10] sm:%s78] %v95
        %v97 = vld [vmem:[%s85 + $0x18] sm:%s78]
        %98 = vst [vmem:[%s86 + $0x14] sm:%s78] %v97
        %v99 = vld [vmem:[%s85 + $0xc] sm:%s78]
        %100 = vst [vmem:[%s86 + $0x18] sm:%s78] %v99
        %v101 = vld [vmem:[%s85 + $0x1c] sm:%s78]
        %102 = vst [vmem:[%s86 + $0x1c] sm:%s78] %v101
        %v103 = vld [vmem:[%s85 + $0x20] sm:%s78]
        %104 = vst [vmem:[%s86 + $0x20] sm:%s78] %v103
        %v105 = vld [vmem:[%s85 + $0x30] sm:%s78]
        %106 = vst [vmem:[%s86 + $0x24] sm:%s78] %v105
        %v107 = vld [vmem:[%s85 + $0x24] sm:%s78]
        %108 = vst [vmem:[%s86 + $0x28] sm:%s78] %v107
        %v109 = vld [vmem:[%s85 + $0x34] sm:%s78]
        %110 = vst [vmem:[%s86 + $0x2c] sm:%s78] %v109
        %v111 = vld [vmem:[%s85 + $0x28] sm:%s78]
        %112 = vst [vmem:[%s86 + $0x30] sm:%s78] %v111
        %v113 = vld [vmem:[%s85 + $0x38] sm:%s78]
        %114 = vst [vmem:[%s86 + $0x34] sm:%s78] %v113
        %v115 = vld [vmem:[%s85 + $0x2c] sm:%s78]
        %116 = vst [vmem:[%s86 + $0x38] sm:%s78] %v115
        %v117 = vld [vmem:[%s85 + $0x3c] sm:%s78]
        %118 = vst [vmem:[%s86 + $0x3c] sm:%s78] %v117
        %v119 = vld [vmem:[%s85 + $0x40] sm:%s78]
        %120 = vst [vmem:[%s86 + $0x40] sm:%s78] %v119
        %v121 = vld [vmem:[%s85 + $0x50] sm:%s78]
        %122 = vst [vmem:[%s86 + $0x44] sm:%s78] %v121
        %v123 = vld [vmem:[%s85 + $0x44] sm:%s78]
        %124 = vst [vmem:[%s86 + $0x48] sm:%s78] %v123
        %v125 = vld [vmem:[%s85 + $0x54] sm:%s78]
        %126 = vst [vmem:[%s86 + $0x4c] sm:%s78] %v125
        %v127 = vld [vmem:[%s85 + $0x48] sm:%s78]
        %128 = vst [vmem:[%s86 + $0x50] sm:%s78] %v127
        %v129 = vld [vmem:[%s85 + $0x58] sm:%s78]
        %130 = vst [vmem:[%s86 + $0x54] sm:%s78] %v129
        %v131 = vld [vmem:[%s85 + $0x4c] sm:%s78]
        %132 = vst [vmem:[%s86 + $0x58] sm:%s78] %v131
        %v133 = vld [vmem:[%s85 + $0x5c] sm:%s78]
        %134 = vst [vmem:[%s86 + $0x5c] sm:%s78] %v133
        %v135 = vld [vmem:[%s85 + $0x60] sm:%s78]
        %136 = vst [vmem:[%s86 + $0x60] sm:%s78] %v135
        %v137 = vld [vmem:[%s85 + $0x70] sm:%s78]
        %138 = vst [vmem:[%s86 + $0x64] sm:%s78] %v137
        %v139 = vld [vmem:[%s85 + $0x64] sm:%s78]
        %140 = vst [vmem:[%s86 + $0x68] sm:%s78] %v139
        %v141 = vld [vmem:[%s85 + $0x74] sm:%s78]
        %142 = vst [vmem:[%s86 + $0x6c] sm:%s78] %v141
        %v143 = vld [vmem:[%s85 + $0x68] sm:%s78]
        %144 = vst [vmem:[%s86 + $0x70] sm:%s78] %v143
        %v145 = vld [vmem:[%s85 + $0x78] sm:%s78]
        %146 = vst [vmem:[%s86 + $0x74] sm:%s78] %v145
        %v147 = vld [vmem:[%s85 + $0x6c] sm:%s78]
        %148 = vst [vmem:[%s86 + $0x78] sm:%s78] %v147
        %v149 = vld [vmem:[%s85 + $0x7c] sm:%s78]
        %150 = vst [vmem:[%s86 + $0x7c] sm:%s78] %v149
        %v151 = vld [vmem:[%s85 + $0x80] sm:%s78]
        %152 = vst [vmem:[%s86 + $0x80] sm:%s78] %v151
        %v153 = vld [vmem:[%s85 + $0x90] sm:%s78]
        %154 = vst [vmem:[%s86 + $0x84] sm:%s78] %v153
        %v155 = vld [vmem:[%s85 + $0x84] sm:%s78]
        %156 = vst [vmem:[%s86 + $0x88] sm:%s78] %v155
        %v157 = vld [vmem:[%s85 + $0x94] sm:%s78]
        %158 = vst [vmem:[%s86 + $0x8c] sm:%s78] %v157
        %v159 = vld [vmem:[%s85 + $0x88] sm:%s78]
        %160 = vst [vmem:[%s86 + $0x90] sm:%s78] %v159
        %v161 = vld [vmem:[%s85 + $0x98] sm:%s78]
        %162 = vst [vmem:[%s86 + $0x94] sm:%s78] %v161
        %v163 = vld [vmem:[%s85 + $0x8c] sm:%s78]
        %164 = vst [vmem:[%s86 + $0x98] sm:%s78] %v163
        %v165 = vld [vmem:[%s85 + $0x9c] sm:%s78]
        %166 = vst [vmem:[%s86 + $0x9c] sm:%s78] %v165
        %v167 = vld [vmem:[%s85 + $0xa0] sm:%s78]
        %168 = vst [vmem:[%s86 + $0xa0] sm:%s78] %v167
        %v169 = vld [vmem:[%s85 + $0xb0] sm:%s78]
        %170 = vst [vmem:[%s86 + $0xa4] sm:%s78] %v169
        %v171 = vld [vmem:[%s85 + $0xa4] sm:%s78]
        %172 = vst [vmem:[%s86 + $0xa8] sm:%s78] %v171
        %v173 = vld [vmem:[%s85 + $0xb4] sm:%s78]
        %174 = vst [vmem:[%s86 + $0xac] sm:%s78] %v173
        %v175 = vld [vmem:[%s85 + $0xa8] sm:%s78]
        %176 = vst [vmem:[%s86 + $0xb0] sm:%s78] %v175
        %v177 = vld [vmem:[%s85 + $0xb8] sm:%s78]
        %178 = vst [vmem:[%s86 + $0xb4] sm:%s78] %v177
        %v179 = vld [vmem:[%s85 + $0xac] sm:%s78]
        %180 = vst [vmem:[%s86 + $0xb8] sm:%s78] %v179
        %v181 = vld [vmem:[%s85 + $0xbc] sm:%s78]
        %182 = vst [vmem:[%s86 + $0xbc] sm:%s78] %v181
        %v183 = vld [vmem:[%s85 + $0xc0] sm:%s78]
        %184 = vst [vmem:[%s86 + $0xc0] sm:%s78] %v183
        %v185 = vld [vmem:[%s85 + $0xd0] sm:%s78]
        %186 = vst [vmem:[%s86 + $0xc4] sm:%s78] %v185
        %v187 = vld [vmem:[%s85 + $0xc4] sm:%s78]
        %188 = vst [vmem:[%s86 + $0xc8] sm:%s78] %v187
        %v189 = vld [vmem:[%s85 + $0xd4] sm:%s78]
        %190 = vst [vmem:[%s86 + $0xcc] sm:%s78] %v189
        %v191 = vld [vmem:[%s85 + $0xc8] sm:%s78]
        %192 = vst [vmem:[%s86 + $0xd0] sm:%s78] %v191
        %v193 = vld [vmem:[%s85 + $0xd8] sm:%s78]
        %194 = vst [vmem:[%s86 + $0xd4] sm:%s78] %v193
        %v195 = vld [vmem:[%s85 + $0xcc] sm:%s78]
        %196 = vst [vmem:[%s86 + $0xd8] sm:%s78] %v195
        %v197 = vld [vmem:[%s85 + $0xdc] sm:%s78]
        %198 = vst [vmem:[%s86 + $0xdc] sm:%s78] %v197
        %v199 = vld [vmem:[%s85 + $0xe0] sm:%s78]
        %200 = vst [vmem:[%s86 + $0xe0] sm:%s78] %v199
        %v201 = vld [vmem:[%s85 + $0xf0] sm:%s78]
        %202 = vst [vmem:[%s86 + $0xe4] sm:%s78] %v201
        %v203 = vld [vmem:[%s85 + $0xe4] sm:%s78]
        %204 = vst [vmem:[%s86 + $0xe8] sm:%s78] %v203
        %v205 = vld [vmem:[%s85 + $0xf4] sm:%s78]
        %206 = vst [vmem:[%s86 + $0xec] sm:%s78] %v205
        %v207 = vld [vmem:[%s85 + $0xe8] sm:%s78]
        %208 = vst [vmem:[%s86 + $0xf0] sm:%s78] %v207
        %v209 = vld [vmem:[%s85 + $0xf8] sm:%s78]
        %210 = vst [vmem:[%s86 + $0xf4] sm:%s78] %v209
        %v211 = vld [vmem:[%s85 + $0xec] sm:%s78]
        %212 = vst [vmem:[%s86 + $0xf8] sm:%s78] %v211
        %v213 = vld [vmem:[%s85 + $0xfc] sm:%s78]
        %214 = vst [vmem:[%s86 + $0xfc] sm:%s78] %v213
      $region30: #{state_refactor_forward.1} parent=24 // loop_footer
        %s84 = sadd.s32 1, %s80
      $region31: #{state_refactor_forward.1} parent=24 // loop_footer_branch
        %79 = sbr.rel target = $region27
      $region32: #{state_refactor_forward.1} parent=24 // loop_exit
        _
    $region25: #{state_refactor_forward.1} parent=1 // pred_fallthru
      _
    // Predicated region
    $region51: #{state_refactor_forward.1} parent=1 // pred_check
      _
    $region52: #{state_refactor_forward.1} parent=1 // pred_check_branch
      %372 = sbr.rel (0) target = $region54
    $region53: #{state_refactor_forward.1} parent=1 // pred_region
      %373 = vsyncadd %s69, 4096
    $region54: #{state_refactor_forward.1} parent=1 // pred_fallthru
      _
    %s374 = scalar_lea.sflag [#allocation8], 2
    %p376 = scmp.lt.u32.totalorder 4, 8
    %p377 = pneg %p376
    // Predicated region
    $region55: #{state_refactor_forward.1} parent=1 // pred_check
      _
    $region56: #{state_refactor_forward.1} parent=1 // pred_check_branch
      %379 = sbr.rel (%p376) target = $region58
    $region57: #{state_refactor_forward.1} parent=1 // pred_region
      %s394 = sand.u32 4, 7
      %p395 = scmp.eq.s32.totalorder %s394, 0
      %p396 = pneg %p395
      // Predicated region
      $region70: #{state_refactor_forward.1} parent=57 // pred_check
        _
      $region71: #{state_refactor_forward.1} parent=57 // pred_check_branch
        %398 = sbr.rel (%p395) target = $region73
      $region72: #{state_refactor_forward.1} parent=57 // pred_region
        %s399 = sand.u32 4, 7
        %s400 = ssub.s32 4, %s399
        %s401 = scalar_lea.vmem %s5, %s400
        %s402 = ssub.s32 4, %s399
        %s403 = scalar_lea.vmem [#allocation5], %s402
        %s404 = sshllo.u32 0, %s399
        loop: start=0, step=1, limit=1
        $region74: #{state_refactor_forward.1} parent=72 // loop_pre_header
          _
        $region75: #{state_refactor_forward.1} parent=72 // loop_header
          %s406 = sphi 0, %s410
          %p407 = scmp.ge.s32.totalorder %s406, 1
          %s411 = sphi %s401, %s401
          %s412 = sphi %s403, %s403
        $region76: #{state_refactor_forward.1} parent=72 // loop_header_branch
          %409 = sbr.rel (%p407) target = $region80
        $region77: #{state_refactor_forward.1} parent=72 // loop_body
          %v413 = vld [vmem:[%s411] sm:%s404]
          %414 = vst [vmem:[%s412] sm:%s404] %v413
        $region78: #{state_refactor_forward.1} parent=72 // loop_footer
          %s410 = sadd.s32 1, %s406
        $region79: #{state_refactor_forward.1} parent=72 // loop_footer_branch
          %405 = sbr.rel target = $region75
        $region80: #{state_refactor_forward.1} parent=72 // loop_exit
          _
      $region73: #{state_refactor_forward.1} parent=57 // pred_fallthru
        _
    $region58: #{state_refactor_forward.1} parent=1 // pred_fallthru
      _
    // Predicated region
    $region59: #{state_refactor_forward.1} parent=1 // pred_check
      %p380 = pneg %p376
    $region60: #{state_refactor_forward.1} parent=1 // pred_check_branch
      %382 = sbr.rel (%p380) target = $region62
    $region61: #{state_refactor_forward.1} parent=1 // pred_region
      %s383 = sshllo.u32 0, 4
      loop: start=0, step=1, limit=1
      $region63: #{state_refactor_forward.1} parent=61 // loop_pre_header
        _
      $region64: #{state_refactor_forward.1} parent=61 // loop_header
        %s385 = sphi 0, %s389
        %p386 = scmp.ge.s32.totalorder %s385, 1
        %s390 = sphi %s5, %s5
        %s391 = sphi [#allocation5], [#allocation5]
      $region65: #{state_refactor_forward.1} parent=61 // loop_header_branch
        %388 = sbr.rel (%p386) target = $region69
      $region66: #{state_refactor_forward.1} parent=61 // loop_body
        %v392 = vld [vmem:[%s390] sm:%s383]
        %393 = vst [vmem:[%s391] sm:%s383] %v392
      $region67: #{state_refactor_forward.1} parent=61 // loop_footer
        %s389 = sadd.s32 1, %s385
      $region68: #{state_refactor_forward.1} parent=61 // loop_footer_branch
        %384 = sbr.rel target = $region64
      $region69: #{state_refactor_forward.1} parent=61 // loop_exit
        _
    $region62: #{state_refactor_forward.1} parent=1 // pred_fallthru
      _
    // Predicated region
    $region81: #{state_refactor_forward.1} parent=1 // pred_check
      _
    $region82: #{state_refactor_forward.1} parent=1 // pred_check_branch
      %417 = sbr.rel (0) target = $region84
    $region83: #{state_refactor_forward.1} parent=1 // pred_region
      %418 = vsyncadd %s374, 64
    $region84: #{state_refactor_forward.1} parent=1 // pred_fallthru
      _
    %s419 = scalar_lea.sflag [#allocation8], 3
    %p421 = scmp.lt.u32.totalorder 32, 8
    %p422 = pneg %p421
    // Predicated region
    $region85: #{state_refactor_forward.1} parent=1 // pred_check
      _
    $region86: #{state_refactor_forward.1} parent=1 // pred_check_branch
      %424 = sbr.rel (%p421) target = $region88
    $region87: #{state_refactor_forward.1} parent=1 // pred_region
      %s439 = sand.u32 32, 7
      %p440 = scmp.eq.s32.totalorder %s439, 0
      // Predicated region
      $region100: #{state_refactor_forward.1} parent=87 // pred_check
        %p441 = pneg %p440
      $region101: #{state_refactor_forward.1} parent=87 // pred_check_branch
        %443 = sbr.rel (%p441) target = $region103
      $region102: #{state_refactor_forward.1} parent=87 // pred_region
        loop: start=0, step=1, limit=1
        $region104: #{state_refactor_forward.1} parent=102 // loop_pre_header
          _
        $region105: #{state_refactor_forward.1} parent=102 // loop_header
          %s445 = sphi 0, %s449
          %p446 = scmp.ge.s32.totalorder %s445, 1
          %s450 = sphi %s6, %s6
          %s451 = sphi [#allocation6], [#allocation6]
        $region106: #{state_refactor_forward.1} parent=102 // loop_header_branch
          %448 = sbr.rel (%p446) target = $region110
        $region107: #{state_refactor_forward.1} parent=102 // loop_body
          %v452 = vld [vmem:[%s450] sm:$0xff]
          %453 = vst [vmem:[%s451] sm:$0xff] %v452
          %v454 = vld [vmem:[%s450 + $0x8] sm:$0xff]
          %455 = vst [vmem:[%s451 + $0x8] sm:$0xff] %v454
          %v456 = vld [vmem:[%s450 + $0x10] sm:$0xff]
          %457 = vst [vmem:[%s451 + $0x10] sm:$0xff] %v456
          %v458 = vld [vmem:[%s450 + $0x18] sm:$0xff]
          %459 = vst [vmem:[%s451 + $0x18] sm:$0xff] %v458
        $region108: #{state_refactor_forward.1} parent=102 // loop_footer
          %s449 = sadd.s32 1, %s445
        $region109: #{state_refactor_forward.1} parent=102 // loop_footer_branch
          %444 = sbr.rel target = $region105
        $region110: #{state_refactor_forward.1} parent=102 // loop_exit
          _
      $region103: #{state_refactor_forward.1} parent=87 // pred_fallthru
        _
      %p460 = pneg %p440
      // Predicated region
      $region111: #{state_refactor_forward.1} parent=87 // pred_check
        _
      $region112: #{state_refactor_forward.1} parent=87 // pred_check_branch
        %462 = sbr.rel (%p440) target = $region114
      $region113: #{state_refactor_forward.1} parent=87 // pred_region
        %s463 = sand.u32 32, 7
      $region114: #{state_refactor_forward.1} parent=87 // pred_fallthru
        _
    $region88: #{state_refactor_forward.1} parent=1 // pred_fallthru
      _
    // Predicated region
    $region89: #{state_refactor_forward.1} parent=1 // pred_check
      %p425 = pneg %p421
    $region90: #{state_refactor_forward.1} parent=1 // pred_check_branch
      %427 = sbr.rel (%p425) target = $region92
    $region91: #{state_refactor_forward.1} parent=1 // pred_region
      %s428 = sshllo.u32 0, 32
      loop: start=0, step=1, limit=1
      $region93: #{state_refactor_forward.1} parent=91 // loop_pre_header
        _
      $region94: #{state_refactor_forward.1} parent=91 // loop_header
        %s430 = sphi 0, %s434
        %p431 = scmp.ge.s32.totalorder %s430, 1
        %s435 = sphi %s6, %s6
        %s436 = sphi [#allocation6], [#allocation6]
      $region95: #{state_refactor_forward.1} parent=91 // loop_header_branch
        %433 = sbr.rel (%p431) target = $region99
      $region96: #{state_refactor_forward.1} parent=91 // loop_body
        %v437 = vld [vmem:[%s435] sm:%s428]
        %438 = vst [vmem:[%s436] sm:%s428] %v437
      $region97: #{state_refactor_forward.1} parent=91 // loop_footer
        %s434 = sadd.s32 1, %s430
      $region98: #{state_refactor_forward.1} parent=91 // loop_footer_branch
        %429 = sbr.rel target = $region94
      $region99: #{state_refactor_forward.1} parent=91 // loop_exit
        _
    $region92: #{state_refactor_forward.1} parent=1 // pred_fallthru
      _
    // Predicated region
    $region115: #{state_refactor_forward.1} parent=1 // pred_check
      _
    $region116: #{state_refactor_forward.1} parent=1 // pred_check_branch
      %466 = sbr.rel (0) target = $region118
    $region117: #{state_refactor_forward.1} parent=1 // pred_region
      %467 = vsyncadd %s419, 512
    $region118: #{state_refactor_forward.1} parent=1 // pred_fallthru
      _
    %s468 = scalar_lea.sflag [#allocation8], 4
    %p470 = scmp.lt.u32.totalorder 32, 8
    %p471 = pneg %p470
    // Predicated region
    $region119: #{state_refactor_forward.1} parent=1 // pred_check
      _
    $region120: #{state_refactor_forward.1} parent=1 // pred_check_branch
      %473 = sbr.rel (%p470) target = $region122
    $region121: #{state_refactor_forward.1} parent=1 // pred_region
      %s488 = sand.u32 32, 7
      %p489 = scmp.eq.s32.totalorder %s488, 0
      // Predicated region
      $region134: #{state_refactor_forward.1} parent=121 // pred_check
        %p490 = pneg %p489
      $region135: #{state_refactor_forward.1} parent=121 // pred_check_branch
        %492 = sbr.rel (%p490) target = $region137
      $region136: #{state_refactor_forward.1} parent=121 // pred_region
        loop: start=0, step=1, limit=1
        $region138: #{state_refactor_forward.1} parent=136 // loop_pre_header
          _
        $region139: #{state_refactor_forward.1} parent=136 // loop_header
          %s494 = sphi 0, %s498
          %p495 = scmp.ge.s32.totalorder %s494, 1
          %s499 = sphi %s7, %s7
          %s500 = sphi [#allocation7], [#allocation7]
        $region140: #{state_refactor_forward.1} parent=136 // loop_header_branch
          %497 = sbr.rel (%p495) target = $region144
        $region141: #{state_refactor_forward.1} parent=136 // loop_body
          %v501 = vld [vmem:[%s499] sm:$0xff]
          %502 = vst [vmem:[%s500] sm:$0xff] %v501
          %v503 = vld [vmem:[%s499 + $0x8] sm:$0xff]
          %504 = vst [vmem:[%s500 + $0x8] sm:$0xff] %v503
          %v505 = vld [vmem:[%s499 + $0x10] sm:$0xff]
          %506 = vst [vmem:[%s500 + $0x10] sm:$0xff] %v505
          %v507 = vld [vmem:[%s499 + $0x18] sm:$0xff]
          %508 = vst [vmem:[%s500 + $0x18] sm:$0xff] %v507
        $region142: #{state_refactor_forward.1} parent=136 // loop_footer
          %s498 = sadd.s32 1, %s494
        $region143: #{state_refactor_forward.1} parent=136 // loop_footer_branch
          %493 = sbr.rel target = $region139
        $region144: #{state_refactor_forward.1} parent=136 // loop_exit
          _
      $region137: #{state_refactor_forward.1} parent=121 // pred_fallthru
        _
      %p509 = pneg %p489
      // Predicated region
      $region145: #{state_refactor_forward.1} parent=121 // pred_check
        _
      $region146: #{state_refactor_forward.1} parent=121 // pred_check_branch
        %511 = sbr.rel (%p489) target = $region148
      $region147: #{state_refactor_forward.1} parent=121 // pred_region
        %s512 = sand.u32 32, 7
      $region148: #{state_refactor_forward.1} parent=121 // pred_fallthru
        _
    $region122: #{state_refactor_forward.1} parent=1 // pred_fallthru
      _
    // Predicated region
    $region123: #{state_refactor_forward.1} parent=1 // pred_check
      %p474 = pneg %p470
    $region124: #{state_refactor_forward.1} parent=1 // pred_check_branch
      %476 = sbr.rel (%p474) target = $region126
    $region125: #{state_refactor_forward.1} parent=1 // pred_region
      %s477 = sshllo.u32 0, 32
      loop: start=0, step=1, limit=1
      $region127: #{state_refactor_forward.1} parent=125 // loop_pre_header
        _
      $region128: #{state_refactor_forward.1} parent=125 // loop_header
        %s479 = sphi 0, %s483
        %p480 = scmp.ge.s32.totalorder %s479, 1
        %s484 = sphi %s7, %s7
        %s485 = sphi [#allocation7], [#allocation7]
      $region129: #{state_refactor_forward.1} parent=125 // loop_header_branch
        %482 = sbr.rel (%p480) target = $region133
      $region130: #{state_refactor_forward.1} parent=125 // loop_body
        %v486 = vld [vmem:[%s484] sm:%s477]
        %487 = vst [vmem:[%s485] sm:%s477] %v486
      $region131: #{state_refactor_forward.1} parent=125 // loop_footer
        %s483 = sadd.s32 1, %s479
      $region132: #{state_refactor_forward.1} parent=125 // loop_footer_branch
        %478 = sbr.rel target = $region128
      $region133: #{state_refactor_forward.1} parent=125 // loop_exit
        _
    $region126: #{state_refactor_forward.1} parent=1 // pred_fallthru
      _
    // Predicated region
    $region149: #{state_refactor_forward.1} parent=1 // pred_check
      _
    $region150: #{state_refactor_forward.1} parent=1 // pred_check_branch
      %515 = sbr.rel (0) target = $region152
    $region151: #{state_refactor_forward.1} parent=1 // pred_region
      %516 = vsyncadd %s468, 512
    $region152: #{state_refactor_forward.1} parent=1 // pred_fallthru
      _
    %v517 = vld [vmem:[%s0] sm:$0xff]
    %v518 = vld [vmem:[%s0 + $0x8] sm:$0xff]
    %v519 = vld [vmem:[%s0 + $0x10] sm:$0xff]
    %v520 = vld [vmem:[%s0 + $0x18] sm:$0xff]
    %v521 = vld [vmem:[%s0 + $0x20] sm:$0xff]
    %v522 = vld [vmem:[%s0 + $0x28] sm:$0xff]
    %v523 = vld [vmem:[%s0 + $0x30] sm:$0xff]
    %v524 = vld [vmem:[%s0 + $0x38] sm:$0xff]
    %v525 = vld [vmem:[%s0 + $0x40] sm:$0xff]
    %v526 = vld [vmem:[%s0 + $0x48] sm:$0xff]
    %v527 = vld [vmem:[%s0 + $0x50] sm:$0xff]
    %v528 = vld [vmem:[%s0 + $0x58] sm:$0xff]
    %v529 = vld [vmem:[%s0 + $0x60] sm:$0xff]
    %v530 = vld [vmem:[%s0 + $0x68] sm:$0xff]
    %v531 = vld [vmem:[%s0 + $0x70] sm:$0xff]
    %v532 = vld [vmem:[%s0 + $0x78] sm:$0xff]
    %v533 = vld [vmem:[#allocation9] sm:$0xff]
    %v534 = vld [vmem:[#allocation9 + $0x8] sm:$0xff]
    %v535 = vld [vmem:[#allocation9 + $0x10] sm:$0xff]
    %v536 = vld [vmem:[#allocation9 + $0x18] sm:$0xff]
    %v537 = vld [vmem:[#allocation9 + $0x20] sm:$0xff]
    %v538 = vld [vmem:[#allocation9 + $0x28] sm:$0xff]
    %v539 = vld [vmem:[#allocation9 + $0x30] sm:$0xff]
    %v540 = vld [vmem:[#allocation9 + $0x38] sm:$0xff]
    %v541 = vld [vmem:[#allocation9 + $0x40] sm:$0xff]
    %v542 = vld [vmem:[#allocation9 + $0x48] sm:$0xff]
    %v543 = vld [vmem:[#allocation9 + $0x50] sm:$0xff]
    %v544 = vld [vmem:[#allocation9 + $0x58] sm:$0xff]
    %v545 = vld [vmem:[#allocation9 + $0x60] sm:$0xff]
    %v546 = vld [vmem:[#allocation9 + $0x68] sm:$0xff]
    %v547 = vld [vmem:[#allocation9 + $0x70] sm:$0xff]
    %v548 = vld [vmem:[#allocation9 + $0x78] sm:$0xff]
    %v549 = vld [vmem:[#allocation9 + $0x80] sm:$0xff]
    %v550 = vld [vmem:[#allocation9 + $0x88] sm:$0xff]
    %v551 = vld [vmem:[#allocation9 + $0x90] sm:$0xff]
    %v552 = vld [vmem:[#allocation9 + $0x98] sm:$0xff]
    %v553 = vld [vmem:[#allocation9 + $0xa0] sm:$0xff]
    %v554 = vld [vmem:[#allocation9 + $0xa8] sm:$0xff]
    %v555 = vld [vmem:[#allocation9 + $0xb0] sm:$0xff]
    %v556 = vld [vmem:[#allocation9 + $0xb8] sm:$0xff]
    %v557 = vld [vmem:[#allocation9 + $0xc0] sm:$0xff]
    %v558 = vld [vmem:[#allocation9 + $0xc8] sm:$0xff]
    %v559 = vld [vmem:[#allocation9 + $0xd0] sm:$0xff]
    %v560 = vld [vmem:[#allocation9 + $0xd8] sm:$0xff]
    %v561 = vld [vmem:[#allocation9 + $0xe0] sm:$0xff]
    %v562 = vld [vmem:[#allocation9 + $0xe8] sm:$0xff]
    %v563 = vld [vmem:[#allocation9 + $0xf0] sm:$0xff]
    %v564 = vld [vmem:[#allocation9 + $0xf8] sm:$0xff]
    %v565 = vld [vmem:[#allocation9 + $0x100] sm:$0xff]
    %v566 = vld [vmem:[#allocation9 + $0x108] sm:$0xff]
    %v567 = vld [vmem:[#allocation9 + $0x110] sm:$0xff]
    %v568 = vld [vmem:[#allocation9 + $0x118] sm:$0xff]
    %v569 = vld [vmem:[#allocation9 + $0x120] sm:$0xff]
    %v570 = vld [vmem:[#allocation9 + $0x128] sm:$0xff]
    %v571 = vld [vmem:[#allocation9 + $0x130] sm:$0xff]
    %v572 = vld [vmem:[#allocation9 + $0x138] sm:$0xff]
    %v573 = vld [vmem:[#allocation9 + $0x140] sm:$0xff]
    %v574 = vld [vmem:[#allocation9 + $0x148] sm:$0xff]
    %v575 = vld [vmem:[#allocation9 + $0x150] sm:$0xff]
    %v576 = vld [vmem:[#allocation9 + $0x158] sm:$0xff]
    %v577 = vld [vmem:[#allocation9 + $0x160] sm:$0xff]
    %v578 = vld [vmem:[#allocation9 + $0x168] sm:$0xff]
    %v579 = vld [vmem:[#allocation9 + $0x170] sm:$0xff]
    %v580 = vld [vmem:[#allocation9 + $0x178] sm:$0xff]
    %v581 = vld [vmem:[#allocation9 + $0x180] sm:$0xff]
    %v582 = vld [vmem:[#allocation9 + $0x188] sm:$0xff]
    %v583 = vld [vmem:[#allocation9 + $0x190] sm:$0xff]
    %v584 = vld [vmem:[#allocation9 + $0x198] sm:$0xff]
    %v585 = vld [vmem:[#allocation9 + $0x1a0] sm:$0xff]
    %v586 = vld [vmem:[#allocation9 + $0x1a8] sm:$0xff]
    %v587 = vld [vmem:[#allocation9 + $0x1b0] sm:$0xff]
    %v588 = vld [vmem:[#allocation9 + $0x1b8] sm:$0xff]
    %v589 = vld [vmem:[#allocation9 + $0x1c0] sm:$0xff]
    %v590 = vld [vmem:[#allocation9 + $0x1c8] sm:$0xff]
    %v591 = vld [vmem:[#allocation9 + $0x1d0] sm:$0xff]
    %v592 = vld [vmem:[#allocation9 + $0x1d8] sm:$0xff]
    %v593 = vld [vmem:[#allocation9 + $0x1e0] sm:$0xff]
    %v594 = vld [vmem:[#allocation9 + $0x1e8] sm:$0xff]
    %v595 = vld [vmem:[#allocation9 + $0x1f0] sm:$0xff]
    %v596 = vld [vmem:[#allocation9 + $0x1f8] sm:$0xff]
    %v597 = vld [vmem:[%s2] sm:$0xf]
    %v599 = vlaneseq
    %v600 = vshrl.u32 %v599, 7
    %v601 = vsub.s32 0, %v600
    %v602 = vrot.slane %v597, %v601
    %v603 = vlaneseq
    %v604 = vshrl.u32 %v603, 7
    %v605 = vsub.s32 1, %v604
    %v606 = vrot.slane %v597, %v605
    %v607 = vlaneseq
    %v608 = vshrl.u32 %v607, 7
    %v609 = vsub.s32 2, %v608
    %v610 = vrot.slane %v597, %v609
    %v611 = vlaneseq
    %v612 = vshrl.u32 %v611, 7
    %v613 = vsub.s32 3, %v612
    %v614 = vrot.slane %v597, %v613
    %v635 = vunpack.c.l.b16 %v517
    %v636 = vunpack.c.h.b16 %v517
    %v637 = vunpack.c.l.b16 %v518
    %v638 = vunpack.c.h.b16 %v518
    %v639 = vunpack.c.l.b16 %v519
    %v640 = vunpack.c.h.b16 %v519
    %v641 = vunpack.c.l.b16 %v520
    %v642 = vunpack.c.h.b16 %v520
    %v643 = vunpack.c.l.b16 %v521
    %v644 = vunpack.c.h.b16 %v521
    %v645 = vunpack.c.l.b16 %v522
    %v646 = vunpack.c.h.b16 %v522
    %v647 = vunpack.c.l.b16 %v523
    %v648 = vunpack.c.h.b16 %v523
    %v649 = vunpack.c.l.b16 %v524
    %v650 = vunpack.c.h.b16 %v524
    %v651 = vunpack.c.l.b16 %v525
    %v652 = vunpack.c.h.b16 %v525
    %v653 = vunpack.c.l.b16 %v526
    %v654 = vunpack.c.h.b16 %v526
    %v655 = vunpack.c.l.b16 %v527
    %v656 = vunpack.c.h.b16 %v527
    %v657 = vunpack.c.l.b16 %v528
    %v658 = vunpack.c.h.b16 %v528
    %v659 = vunpack.c.l.b16 %v529
    %v660 = vunpack.c.h.b16 %v529
    %v661 = vunpack.c.l.b16 %v530
    %v662 = vunpack.c.h.b16 %v530
    %v663 = vunpack.c.l.b16 %v531
    %v664 = vunpack.c.h.b16 %v531
    %v665 = vunpack.c.l.b16 %v532
    %v666 = vunpack.c.h.b16 %v532
    %v667 = vpack.c.b16 %v637, %v635
    %v668 = vpack.c.b16 %v638, %v636
    %v669 = vpack.c.b16 %v641, %v639
    %v670 = vpack.c.b16 %v642, %v640
    %v671 = vpack.c.b16 %v645, %v643
    %v672 = vpack.c.b16 %v646, %v644
    %v673 = vpack.c.b16 %v649, %v647
    %v674 = vpack.c.b16 %v650, %v648
    %v675 = vpack.c.b16 %v653, %v651
    %v676 = vpack.c.b16 %v654, %v652
    %v677 = vpack.c.b16 %v657, %v655
    %v678 = vpack.c.b16 %v658, %v656
    %v679 = vpack.c.b16 %v661, %v659
    %v680 = vpack.c.b16 %v662, %v660
    %v681 = vpack.c.b16 %v665, %v663
    %v682 = vpack.c.b16 %v666, %v664
    %v763 = vunpack.c.l.b16 %v533
    %v764 = vunpack.c.h.b16 %v533
    %v765 = vunpack.c.l.b16 %v534
    %v766 = vunpack.c.h.b16 %v534
    %v767 = vunpack.c.l.b16 %v535
    %v768 = vunpack.c.h.b16 %v535
    %v769 = vunpack.c.l.b16 %v536
    %v770 = vunpack.c.h.b16 %v536
    %v771 = vunpack.c.l.b16 %v537
    %v772 = vunpack.c.h.b16 %v537
    %v773 = vunpack.c.l.b16 %v538
    %v774 = vunpack.c.h.b16 %v538
    %v775 = vunpack.c.l.b16 %v539
    %v776 = vunpack.c.h.b16 %v539
    %v777 = vunpack.c.l.b16 %v540
    %v778 = vunpack.c.h.b16 %v540
    %v779 = vunpack.c.l.b16 %v541
    %v780 = vunpack.c.h.b16 %v541
    %v781 = vunpack.c.l.b16 %v542
    %v782 = vunpack.c.h.b16 %v542
    %v783 = vunpack.c.l.b16 %v543
    %v784 = vunpack.c.h.b16 %v543
    %v785 = vunpack.c.l.b16 %v544
    %v786 = vunpack.c.h.b16 %v544
    %v787 = vunpack.c.l.b16 %v545
    %v788 = vunpack.c.h.b16 %v545
    %v789 = vunpack.c.l.b16 %v546
    %v790 = vunpack.c.h.b16 %v546
    %v791 = vunpack.c.l.b16 %v547
    %v792 = vunpack.c.h.b16 %v547
    %v793 = vunpack.c.l.b16 %v548
    %v794 = vunpack.c.h.b16 %v548
    %v795 = vunpack.c.l.b16 %v549
    %v796 = vunpack.c.h.b16 %v549
    %v797 = vunpack.c.l.b16 %v550
    %v798 = vunpack.c.h.b16 %v550
    %v799 = vunpack.c.l.b16 %v551
    %v800 = vunpack.c.h.b16 %v551
    %v801 = vunpack.c.l.b16 %v552
    %v802 = vunpack.c.h.b16 %v552
    %v803 = vunpack.c.l.b16 %v553
    %v804 = vunpack.c.h.b16 %v553
    %v805 = vunpack.c.l.b16 %v554
    %v806 = vunpack.c.h.b16 %v554
    %v807 = vunpack.c.l.b16 %v555
    %v808 = vunpack.c.h.b16 %v555
    %v809 = vunpack.c.l.b16 %v556
    %v810 = vunpack.c.h.b16 %v556
    %v811 = vunpack.c.l.b16 %v557
    %v812 = vunpack.c.h.b16 %v557
    %v813 = vunpack.c.l.b16 %v558
    %v814 = vunpack.c.h.b16 %v558
    %v815 = vunpack.c.l.b16 %v559
    %v816 = vunpack.c.h.b16 %v559
    %v817 = vunpack.c.l.b16 %v560
    %v818 = vunpack.c.h.b16 %v560
    %v819 = vunpack.c.l.b16 %v561
    %v820 = vunpack.c.h.b16 %v561
    %v821 = vunpack.c.l.b16 %v562
    %v822 = vunpack.c.h.b16 %v562
    %v823 = vunpack.c.l.b16 %v563
    %v824 = vunpack.c.h.b16 %v563
    %v825 = vunpack.c.l.b16 %v564
    %v826 = vunpack.c.h.b16 %v564
    %v827 = vunpack.c.l.b16 %v565
    %v828 = vunpack.c.h.b16 %v565
    %v829 = vunpack.c.l.b16 %v566
    %v830 = vunpack.c.h.b16 %v566
    %v831 = vunpack.c.l.b16 %v567
    %v832 = vunpack.c.h.b16 %v567
    %v833 = vunpack.c.l.b16 %v568
    %v834 = vunpack.c.h.b16 %v568
    %v835 = vunpack.c.l.b16 %v569
    %v836 = vunpack.c.h.b16 %v569
    %v837 = vunpack.c.l.b16 %v570
    %v838 = vunpack.c.h.b16 %v570
    %v839 = vunpack.c.l.b16 %v571
    %v840 = vunpack.c.h.b16 %v571
    %v841 = vunpack.c.l.b16 %v572
    %v842 = vunpack.c.h.b16 %v572
    %v843 = vunpack.c.l.b16 %v573
    %v844 = vunpack.c.h.b16 %v573
    %v845 = vunpack.c.l.b16 %v574
    %v846 = vunpack.c.h.b16 %v574
    %v847 = vunpack.c.l.b16 %v575
    %v848 = vunpack.c.h.b16 %v575
    %v849 = vunpack.c.l.b16 %v576
    %v850 = vunpack.c.h.b16 %v576
    %v851 = vunpack.c.l.b16 %v577
    %v852 = vunpack.c.h.b16 %v577
    %v853 = vunpack.c.l.b16 %v578
    %v854 = vunpack.c.h.b16 %v578
    %v855 = vunpack.c.l.b16 %v579
    %v856 = vunpack.c.h.b16 %v579
    %v857 = vunpack.c.l.b16 %v580
    %v858 = vunpack.c.h.b16 %v580
    %v859 = vunpack.c.l.b16 %v581
    %v860 = vunpack.c.h.b16 %v581
    %v861 = vunpack.c.l.b16 %v582
    %v862 = vunpack.c.h.b16 %v582
    %v863 = vunpack.c.l.b16 %v583
    %v864 = vunpack.c.h.b16 %v583
    %v865 = vunpack.c.l.b16 %v584
    %v866 = vunpack.c.h.b16 %v584
    %v867 = vunpack.c.l.b16 %v585
    %v868 = vunpack.c.h.b16 %v585
    %v869 = vunpack.c.l.b16 %v586
    %v870 = vunpack.c.h.b16 %v586
    %v871 = vunpack.c.l.b16 %v587
    %v872 = vunpack.c.h.b16 %v587
    %v873 = vunpack.c.l.b16 %v588
    %v874 = vunpack.c.h.b16 %v588
    %v875 = vunpack.c.l.b16 %v589
    %v876 = vunpack.c.h.b16 %v589
    %v877 = vunpack.c.l.b16 %v590
    %v878 = vunpack.c.h.b16 %v590
    %v879 = vunpack.c.l.b16 %v591
    %v880 = vunpack.c.h.b16 %v591
    %v881 = vunpack.c.l.b16 %v592
    %v882 = vunpack.c.h.b16 %v592
    %v883 = vunpack.c.l.b16 %v593
    %v884 = vunpack.c.h.b16 %v593
    %v885 = vunpack.c.l.b16 %v594
    %v886 = vunpack.c.h.b16 %v594
    %v887 = vunpack.c.l.b16 %v595
    %v888 = vunpack.c.h.b16 %v595
    %v889 = vunpack.c.l.b16 %v596
    %v890 = vunpack.c.h.b16 %v596
    %v891 = vpack.c.b16 %v767, %v763
    %v892 = vpack.c.b16 %v768, %v764
    %v893 = vpack.c.b16 %v769, %v765
    %v894 = vpack.c.b16 %v770, %v766
    %v895 = vpack.c.b16 %v775, %v771
    %v896 = vpack.c.b16 %v776, %v772
    %v897 = vpack.c.b16 %v777, %v773
    %v898 = vpack.c.b16 %v778, %v774
    %v899 = vpack.c.b16 %v783, %v779
    %v900 = vpack.c.b16 %v784, %v780
    %v901 = vpack.c.b16 %v785, %v781
    %v902 = vpack.c.b16 %v786, %v782
    %v903 = vpack.c.b16 %v791, %v787
    %v904 = vpack.c.b16 %v792, %v788
    %v905 = vpack.c.b16 %v793, %v789
    %v906 = vpack.c.b16 %v794, %v790
    %v907 = vpack.c.b16 %v799, %v795
    %v908 = vpack.c.b16 %v800, %v796
    %v909 = vpack.c.b16 %v801, %v797
    %v910 = vpack.c.b16 %v802, %v798
    %v911 = vpack.c.b16 %v807, %v803
    %v912 = vpack.c.b16 %v808, %v804
    %v913 = vpack.c.b16 %v809, %v805
    %v914 = vpack.c.b16 %v810, %v806
    %v915 = vpack.c.b16 %v815, %v811
    %v916 = vpack.c.b16 %v816, %v812
    %v917 = vpack.c.b16 %v817, %v813
    %v918 = vpack.c.b16 %v818, %v814
    %v919 = vpack.c.b16 %v823, %v819
    %v920 = vpack.c.b16 %v824, %v820
    %v921 = vpack.c.b16 %v825, %v821
    %v922 = vpack.c.b16 %v826, %v822
    %v923 = vpack.c.b16 %v831, %v827
    %v924 = vpack.c.b16 %v832, %v828
    %v925 = vpack.c.b16 %v833, %v829
    %v926 = vpack.c.b16 %v834, %v830
    %v927 = vpack.c.b16 %v839, %v835
    %v928 = vpack.c.b16 %v840, %v836
    %v929 = vpack.c.b16 %v841, %v837
    %v930 = vpack.c.b16 %v842, %v838
    %v931 = vpack.c.b16 %v847, %v843
    %v932 = vpack.c.b16 %v848, %v844
    %v933 = vpack.c.b16 %v849, %v845
    %v934 = vpack.c.b16 %v850, %v846
    %v935 = vpack.c.b16 %v855, %v851
    %v936 = vpack.c.b16 %v856, %v852
    %v937 = vpack.c.b16 %v857, %v853
    %v938 = vpack.c.b16 %v858, %v854
    %v939 = vpack.c.b16 %v863, %v859
    %v940 = vpack.c.b16 %v864, %v860
    %v941 = vpack.c.b16 %v865, %v861
    %v942 = vpack.c.b16 %v866, %v862
    %v943 = vpack.c.b16 %v871, %v867
    %v944 = vpack.c.b16 %v872, %v868
    %v945 = vpack.c.b16 %v873, %v869
    %v946 = vpack.c.b16 %v874, %v870
    %v947 = vpack.c.b16 %v879, %v875
    %v948 = vpack.c.b16 %v880, %v876
    %v949 = vpack.c.b16 %v881, %v877
    %v950 = vpack.c.b16 %v882, %v878
    %v951 = vpack.c.b16 %v887, %v883
    %v952 = vpack.c.b16 %v888, %v884
    %v953 = vpack.c.b16 %v889, %v885
    %v954 = vpack.c.b16 %v890, %v886
    %1019 = vmatprep.subr.bf16.mxu0 %v892
    %1020 = vmatpush1.bf16.msra.mxu0 %v891
    %1021 = vmatprep.subr.bf16.mxu0 %v896
    %1022 = vmatpush1.bf16.msra.mxu0 %v895
    %1023 = vmatprep.subr.bf16.mxu0 %v900
    %1024 = vmatpush1.bf16.msra.mxu0 %v899
    %1025 = vmatprep.subr.bf16.mxu0 %v904
    %1026 = vmatpush1.bf16.msra.mxu0 %v903
    %1027 = vmatprep.subr.bf16.mxu0 %v908
    %1028 = vmatpush1.bf16.msra.mxu0 %v907
    %1029 = vmatprep.subr.bf16.mxu0 %v912
    %1030 = vmatpush1.bf16.msra.mxu0 %v911
    %1031 = vmatprep.subr.bf16.mxu0 %v916
    %1032 = vmatpush1.bf16.msra.mxu0 %v915
    %1033 = vmatprep.subr.bf16.mxu0 %v920
    %1034 = vmatpush1.bf16.msra.mxu0 %v919
    %1035 = vmatprep.subr.bf16.mxu0 %v924
    %1036 = vmatpush1.bf16.msra.mxu0 %v923
    %1037 = vmatprep.subr.bf16.mxu0 %v928
    %1038 = vmatpush1.bf16.msra.mxu0 %v927
    %1039 = vmatprep.subr.bf16.mxu0 %v932
    %1040 = vmatpush1.bf16.msra.mxu0 %v931
    %1041 = vmatprep.subr.bf16.mxu0 %v936
    %1042 = vmatpush1.bf16.msra.mxu0 %v935
    %1043 = vmatprep.subr.bf16.mxu0 %v940
    %1044 = vmatpush1.bf16.msra.mxu0 %v939
    %1045 = vmatprep.subr.bf16.mxu0 %v944
    %1046 = vmatpush1.bf16.msra.mxu0 %v943
    %1047 = vmatprep.subr.bf16.mxu0 %v948
    %1048 = vmatpush1.bf16.msra.mxu0 %v947
    %1049 = vmatprep.subr.bf16.mxu0 %v952
    %1050 = vmatpush1.bf16.msra.mxu0 %v951
    %1051 = vmatprep.mubr.bf16.mxu0 %v668
    %1052 = vmatmul.mubr.bf16.gmra.mrb[0].mxu0 %v667
    %v1053 = vpop.f32.mrb[0].mxu0
    %v1054 = vadd.f32 %v602, %v1053
    %v1055 = vpop.f32.mrb[0].mxu0
    %v1056 = vadd.f32 %v606, %v1055
    %v1057 = vpop.f32.mrb[0].mxu0
    %v1058 = vadd.f32 %v602, %v1057
    %v1059 = vpop.f32.mrb[0].mxu0
    %v1060 = vadd.f32 %v606, %v1059
    %1061 = vmatprep.mubr.bf16.mxu0 %v670
    %1062 = vmatmul.mubr.bf16.gmra.mrb[0].mxu0 %v669
    %v1063 = vpop.f32.mrb[0].mxu0
    %v1064 = vadd.f32 %v602, %v1063
    %v1065 = vpop.f32.mrb[0].mxu0
    %v1066 = vadd.f32 %v606, %v1065
    %v1067 = vpop.f32.mrb[0].mxu0
    %v1068 = vadd.f32 %v602, %v1067
    %v1069 = vpop.f32.mrb[0].mxu0
    %v1070 = vadd.f32 %v606, %v1069
    %1071 = vmatprep.mubr.bf16.mxu0 %v672
    %1072 = vmatmul.mubr.bf16.gmra.mrb[0].mxu0 %v671
    %v1073 = vpop.f32.mrb[0].mxu0
    %v1074 = vadd.f32 %v602, %v1073
    %v1075 = vpop.f32.mrb[0].mxu0
    %v1076 = vadd.f32 %v606, %v1075
    %v1077 = vpop.f32.mrb[0].mxu0
    %v1078 = vadd.f32 %v602, %v1077
    %v1079 = vpop.f32.mrb[0].mxu0
    %v1080 = vadd.f32 %v606, %v1079
    %1081 = vmatprep.mubr.bf16.mxu0 %v674
    %1082 = vmatmul.mubr.bf16.gmra.mrb[0].mxu0 %v673
    %v1083 = vpop.f32.mrb[0].mxu0
    %v1084 = vadd.f32 %v602, %v1083
    %v1085 = vpop.f32.mrb[0].mxu0
    %v1086 = vadd.f32 %v606, %v1085
    %v1087 = vpop.f32.mrb[0].mxu0
    %v1088 = vadd.f32 %v602, %v1087
    %v1089 = vpop.f32.mrb[0].mxu0
    %v1090 = vadd.f32 %v606, %v1089
    %1091 = vmatprep.mubr.bf16.mxu0 %v676
    %1092 = vmatmul.mubr.bf16.gmra.mrb[0].mxu0 %v675
    %v1093 = vpop.f32.mrb[0].mxu0
    %v1094 = vadd.f32 %v602, %v1093
    %v1095 = vpop.f32.mrb[0].mxu0
    %v1096 = vadd.f32 %v606, %v1095
    %v1097 = vpop.f32.mrb[0].mxu0
    %v1098 = vadd.f32 %v602, %v1097
    %v1099 = vpop.f32.mrb[0].mxu0
    %v1100 = vadd.f32 %v606, %v1099
    %1101 = vmatprep.mubr.bf16.mxu0 %v678
    %1102 = vmatmul.mubr.bf16.gmra.mrb[0].mxu0 %v677
    %v1103 = vpop.f32.mrb[0].mxu0
    %v1104 = vadd.f32 %v602, %v1103
    %v1105 = vpop.f32.mrb[0].mxu0
    %v1106 = vadd.f32 %v606, %v1105
    %v1107 = vpop.f32.mrb[0].mxu0
    %v1108 = vadd.f32 %v602, %v1107
    %v1109 = vpop.f32.mrb[0].mxu0
    %v1110 = vadd.f32 %v606, %v1109
    %1111 = vmatprep.mubr.bf16.mxu0 %v680
    %1112 = vmatmul.mubr.bf16.gmra.mrb[0].mxu0 %v679
    %v1113 = vpop.f32.mrb[0].mxu0
    %v1114 = vadd.f32 %v602, %v1113
    %v1115 = vpop.f32.mrb[0].mxu0
    %v1116 = vadd.f32 %v606, %v1115
    %v1117 = vpop.f32.mrb[0].mxu0
    %v1118 = vadd.f32 %v602, %v1117
    %v1119 = vpop.f32.mrb[0].mxu0
    %v1120 = vadd.f32 %v606, %v1119
    %1121 = vmatprep.mubr.bf16.mxu0 %v682
    %1122 = vmatmul.mubr.bf16.gmra.mrb[0].mxu0 %v681
    %v1123 = vpop.f32.mrb[0].mxu0
    %v1124 = vadd.f32 %v602, %v1123
    %v1125 = vpop.f32.mrb[0].mxu0
    %v1126 = vadd.f32 %v606, %v1125
    %v1127 = vpop.f32.mrb[0].mxu0
    %v1128 = vadd.f32 %v602, %v1127
    %v1129 = vpop.f32.mrb[0].mxu0
    %v1130 = vadd.f32 %v606, %v1129
    %1131 = vdwg.mxu0
    %1132 = vmatprep.subr.bf16.mxu0 %v894
    %1133 = vmatpush1.bf16.msra.mxu0 %v893
    %1134 = vmatprep.subr.bf16.mxu0 %v898
    %1135 = vmatpush1.bf16.msra.mxu0 %v897
    %1136 = vmatprep.subr.bf16.mxu0 %v902
    %1137 = vmatpush1.bf16.msra.mxu0 %v901
    %1138 = vmatprep.subr.bf16.mxu0 %v906
    %1139 = vmatpush1.bf16.msra.mxu0 %v905
    %1140 = vmatprep.subr.bf16.mxu0 %v910
    %1141 = vmatpush1.bf16.msra.mxu0 %v909
    %1142 = vmatprep.subr.bf16.mxu0 %v914
    %1143 = vmatpush1.bf16.msra.mxu0 %v913
    %1144 = vmatprep.subr.bf16.mxu0 %v918
    %1145 = vmatpush1.bf16.msra.mxu0 %v917
    %1146 = vmatprep.subr.bf16.mxu0 %v922
    %1147 = vmatpush1.bf16.msra.mxu0 %v921
    %1148 = vmatprep.subr.bf16.mxu0 %v926
    %1149 = vmatpush1.bf16.msra.mxu0 %v925
    %1150 = vmatprep.subr.bf16.mxu0 %v930
    %1151 = vmatpush1.bf16.msra.mxu0 %v929
    %1152 = vmatprep.subr.bf16.mxu0 %v934
    %1153 = vmatpush1.bf16.msra.mxu0 %v933
    %1154 = vmatprep.subr.bf16.mxu0 %v938
    %1155 = vmatpush1.bf16.msra.mxu0 %v937
    %1156 = vmatprep.subr.bf16.mxu0 %v942
    %1157 = vmatpush1.bf16.msra.mxu0 %v941
    %1158 = vmatprep.subr.bf16.mxu0 %v946
    %1159 = vmatpush1.bf16.msra.mxu0 %v945
    %1160 = vmatprep.subr.bf16.mxu0 %v950
    %1161 = vmatpush1.bf16.msra.mxu0 %v949
    %1162 = vmatprep.subr.bf16.mxu0 %v954
    %1163 = vmatpush1.bf16.msra.mxu0 %v953
    %1164 = vmatprep.mubr.bf16.mxu0 %v668
    %1165 = vmatmul.mubr.bf16.gmra.mrb[0].mxu0 %v667
    %v1166 = vpop.f32.mrb[0].mxu0
    %v1167 = vadd.f32 %v610, %v1166
    %v1168 = vpop.f32.mrb[0].mxu0
    %v1169 = vadd.f32 %v614, %v1168
    %v1170 = vpop.f32.mrb[0].mxu0
    %v1171 = vadd.f32 %v610, %v1170
    %v1172 = vpop.f32.mrb[0].mxu0
    %v1173 = vadd.f32 %v614, %v1172
    %1174 = vmatprep.mubr.bf16.mxu0 %v670
    %1175 = vmatmul.mubr.bf16.gmra.mrb[0].mxu0 %v669
    %v1176 = vpop.f32.mrb[0].mxu0
    %v1177 = vadd.f32 %v610, %v1176
    %v1178 = vpop.f32.mrb[0].mxu0
    %v1179 = vadd.f32 %v614, %v1178
    %v1180 = vpop.f32.mrb[0].mxu0
    %v1181 = vadd.f32 %v610, %v1180
    %v1182 = vpop.f32.mrb[0].mxu0
    %v1183 = vadd.f32 %v614, %v1182
    %1184 = vmatprep.mubr.bf16.mxu0 %v672
    %1185 = vmatmul.mubr.bf16.gmra.mrb[0].mxu0 %v671
    %v1186 = vpop.f32.mrb[0].mxu0
    %v1187 = vadd.f32 %v610, %v1186
    %v1188 = vpop.f32.mrb[0].mxu0
    %v1189 = vadd.f32 %v614, %v1188
    %v1190 = vpop.f32.mrb[0].mxu0
    %v1191 = vadd.f32 %v610, %v1190
    %v1192 = vpop.f32.mrb[0].mxu0
    %v1193 = vadd.f32 %v614, %v1192
    %1194 = vmatprep.mubr.bf16.mxu0 %v674
    %1195 = vmatmul.mubr.bf16.gmra.mrb[0].mxu0 %v673
    %v1196 = vpop.f32.mrb[0].mxu0
    %v1197 = vadd.f32 %v610, %v1196
    %v1198 = vpop.f32.mrb[0].mxu0
    %v1199 = vadd.f32 %v614, %v1198
    %v1200 = vpop.f32.mrb[0].mxu0
    %v1201 = vadd.f32 %v610, %v1200
    %v1202 = vpop.f32.mrb[0].mxu0
    %v1203 = vadd.f32 %v614, %v1202
    %1204 = vmatprep.mubr.bf16.mxu0 %v676
    %1205 = vmatmul.mubr.bf16.gmra.mrb[0].mxu0 %v675
    %v1206 = vpop.f32.mrb[0].mxu0
    %v1207 = vadd.f32 %v610, %v1206
    %v1208 = vpop.f32.mrb[0].mxu0
    %v1209 = vadd.f32 %v614, %v1208
    %v1210 = vpop.f32.mrb[0].mxu0
    %v1211 = vadd.f32 %v610, %v1210
    %v1212 = vpop.f32.mrb[0].mxu0
    %v1213 = vadd.f32 %v614, %v1212
    %1214 = vmatprep.mubr.bf16.mxu0 %v678
    %1215 = vmatmul.mubr.bf16.gmra.mrb[0].mxu0 %v677
    %v1216 = vpop.f32.mrb[0].mxu0
    %v1217 = vadd.f32 %v610, %v1216
    %v1218 = vpop.f32.mrb[0].mxu0
    %v1219 = vadd.f32 %v614, %v1218
    %v1220 = vpop.f32.mrb[0].mxu0
    %v1221 = vadd.f32 %v610, %v1220
    %v1222 = vpop.f32.mrb[0].mxu0
    %v1223 = vadd.f32 %v614, %v1222
    %1224 = vmatprep.mubr.bf16.mxu0 %v680
    %1225 = vmatmul.mubr.bf16.gmra.mrb[0].mxu0 %v679
    %v1226 = vpop.f32.mrb[0].mxu0
    %v1227 = vadd.f32 %v610, %v1226
    %v1228 = vpop.f32.mrb[0].mxu0
    %v1229 = vadd.f32 %v614, %v1228
    %v1230 = vpop.f32.mrb[0].mxu0
    %v1231 = vadd.f32 %v610, %v1230
    %v1232 = vpop.f32.mrb[0].mxu0
    %v1233 = vadd.f32 %v614, %v1232
    %1234 = vmatprep.mubr.bf16.mxu0 %v682
    %1235 = vmatmul.mubr.bf16.gmra.mrb[0].mxu0 %v681
    %v1236 = vpop.f32.mrb[0].mxu0
    %v1237 = vadd.f32 %v610, %v1236
    %v1238 = vpop.f32.mrb[0].mxu0
    %v1239 = vadd.f32 %v614, %v1238
    %v1240 = vpop.f32.mrb[0].mxu0
    %v1241 = vadd.f32 %v610, %v1240
    %v1242 = vpop.f32.mrb[0].mxu0
    %v1243 = vadd.f32 %v614, %v1242
    %1244 = vdwg.mxu0
    %1245 = vst [vmem:[#allocation2] sm:$0xff] %v1054
    %1246 = vst [vmem:[#allocation2 + $0x8] sm:$0xff] %v1056
    %1247 = vst [vmem:[#allocation2 + $0x10] sm:$0xff] %v1167
    %1248 = vst [vmem:[#allocation2 + $0x18] sm:$0xff] %v1169
    %1249 = vst [vmem:[#allocation2 + $0x20] sm:$0xff] %v1058
    %1250 = vst [vmem:[#allocation2 + $0x28] sm:$0xff] %v1060
    %1251 = vst [vmem:[#allocation2 + $0x30] sm:$0xff] %v1171
    %1252 = vst [vmem:[#allocation2 + $0x38] sm:$0xff] %v1173
    %1253 = vst [vmem:[#allocation2 + $0x40] sm:$0xff] %v1064
    %1254 = vst [vmem:[#allocation2 + $0x48] sm:$0xff] %v1066
    %1255 = vst [vmem:[#allocation2 + $0x50] sm:$0xff] %v1177
    %1256 = vst [vmem:[#allocation2 + $0x58] sm:$0xff] %v1179
    %1257 = vst [vmem:[#allocation2 + $0x60] sm:$0xff] %v1068
    %1258 = vst [vmem:[#allocation2 + $0x68] sm:$0xff] %v1070
    %1259 = vst [vmem:[#allocation2 + $0x70] sm:$0xff] %v1181
    %1260 = vst [vmem:[#allocation2 + $0x78] sm:$0xff] %v1183
    %1261 = vst [vmem:[#allocation2 + $0x80] sm:$0xff] %v1074
    %1262 = vst [vmem:[#allocation2 + $0x88] sm:$0xff] %v1076
    %1263 = vst [vmem:[#allocation2 + $0x90] sm:$0xff] %v1187
    %1264 = vst [vmem:[#allocation2 + $0x98] sm:$0xff] %v1189
    %1265 = vst [vmem:[#allocation2 + $0xa0] sm:$0xff] %v1078
    %1266 = vst [vmem:[#allocation2 + $0xa8] sm:$0xff] %v1080
    %1267 = vst [vmem:[#allocation2 + $0xb0] sm:$0xff] %v1191
    %1268 = vst [vmem:[#allocation2 + $0xb8] sm:$0xff] %v1193
    %1269 = vst [vmem:[#allocation2 + $0xc0] sm:$0xff] %v1084
    %1270 = vst [vmem:[#allocation2 + $0xc8] sm:$0xff] %v1086
    %1271 = vst [vmem:[#allocation2 + $0xd0] sm:$0xff] %v1197
    %1272 = vst [vmem:[#allocation2 + $0xd8] sm:$0xff] %v1199
    %1273 = vst [vmem:[#allocation2 + $0xe0] sm:$0xff] %v1088
    %1274 = vst [vmem:[#allocation2 + $0xe8] sm:$0xff] %v1090
    %1275 = vst [vmem:[#allocation2 + $0xf0] sm:$0xff] %v1201
    %1276 = vst [vmem:[#allocation2 + $0xf8] sm:$0xff] %v1203
    %1277 = vst [vmem:[#allocation2 + $0x100] sm:$0xff] %v1094
    %1278 = vst [vmem:[#allocation2 + $0x108] sm:$0xff] %v1096
    %1279 = vst [vmem:[#allocation2 + $0x110] sm:$0xff] %v1207
    %1280 = vst [vmem:[#allocation2 + $0x118] sm:$0xff] %v1209
    %1281 = vst [vmem:[#allocation2 + $0x120] sm:$0xff] %v1098
    %1282 = vst [vmem:[#allocation2 + $0x128] sm:$0xff] %v1100
    %1283 = vst [vmem:[#allocation2 + $0x130] sm:$0xff] %v1211
    %1284 = vst [vmem:[#allocation2 + $0x138] sm:$0xff] %v1213
    %1285 = vst [vmem:[#allocation2 + $0x140] sm:$0xff] %v1104
    %1286 = vst [vmem:[#allocation2 + $0x148] sm:$0xff] %v1106
    %1287 = vst [vmem:[#allocation2 + $0x150] sm:$0xff] %v1217
    %1288 = vst [vmem:[#allocation2 + $0x158] sm:$0xff] %v1219
    %1289 = vst [vmem:[#allocation2 + $0x160] sm:$0xff] %v1108
    %1290 = vst [vmem:[#allocation2 + $0x168] sm:$0xff] %v1110
    %1291 = vst [vmem:[#allocation2 + $0x170] sm:$0xff] %v1221
    %1292 = vst [vmem:[#allocation2 + $0x178] sm:$0xff] %v1223
    %1293 = vst [vmem:[#allocation2 + $0x180] sm:$0xff] %v1114
    %1294 = vst [vmem:[#allocation2 + $0x188] sm:$0xff] %v1116
    %1295 = vst [vmem:[#allocation2 + $0x190] sm:$0xff] %v1227
    %1296 = vst [vmem:[#allocation2 + $0x198] sm:$0xff] %v1229
    %1297 = vst [vmem:[#allocation2 + $0x1a0] sm:$0xff] %v1118
    %1298 = vst [vmem:[#allocation2 + $0x1a8] sm:$0xff] %v1120
    %1299 = vst [vmem:[#allocation2 + $0x1b0] sm:$0xff] %v1231
    %1300 = vst [vmem:[#allocation2 + $0x1b8] sm:$0xff] %v1233
    %1301 = vst [vmem:[#allocation2 + $0x1c0] sm:$0xff] %v1124
    %1302 = vst [vmem:[#allocation2 + $0x1c8] sm:$0xff] %v1126
    %1303 = vst [vmem:[#allocation2 + $0x1d0] sm:$0xff] %v1237
    %1304 = vst [vmem:[#allocation2 + $0x1d8] sm:$0xff] %v1239
    %1305 = vst [vmem:[#allocation2 + $0x1e0] sm:$0xff] %v1128
    %1306 = vst [vmem:[#allocation2 + $0x1e8] sm:$0xff] %v1130
    %1307 = vst [vmem:[#allocation2 + $0x1f0] sm:$0xff] %v1241
    %1308 = vst [vmem:[#allocation2 + $0x1f8] sm:$0xff] %v1243
    %s1309 = smul.u32 4, 16
    %s1310 = smul.u32 %s1309, 8
    %s1311 = sshll.u32 %s1310, 4
    %1312 = dma.done [#allocation8], %s1311
    %s1313 = smul.u32 %s1309, 4
    %s1314 = sshll.u32 %s1313, 4
    %1315 = dma.done %s69, %s1314
    %s1316 = smul.u32 1, 4
    %s1317 = sshll.u32 %s1316, 4
    %1318 = dma.done %s374, %s1317
    %s1319 = smul.u32 2, 16
    %s1320 = smul.u32 %s1319, 1
    %s1321 = sshll.u32 %s1320, 4
    %1322 = dma.done %s419, %s1321
    %s1323 = sshll.u32 %s1320, 4
    %1324 = dma.done %s468, %s1323
    %v1325 = vld [vmem:[#allocation5] sm:$0xf]
    %v1327 = vlaneseq
    %v1328 = vshrl.u32 %v1327, 7
    %v1329 = vsub.s32 0, %v1328
    %v1330 = vrot.slane %v1325, %v1329
    %v1331 = vlaneseq
    %v1332 = vshrl.u32 %v1331, 7
    %v1333 = vsub.s32 1, %v1332
    %v1334 = vrot.slane %v1325, %v1333
    %v1335 = vlaneseq
    %v1336 = vshrl.u32 %v1335, 7
    %v1337 = vsub.s32 2, %v1336
    %v1338 = vrot.slane %v1325, %v1337
    %v1339 = vlaneseq
    %v1340 = vshrl.u32 %v1339, 7
    %v1341 = vsub.s32 3, %v1340
    %v1342 = vrot.slane %v1325, %v1341
    %v1347 = vld [vmem:[#allocation6] sm:$0xff]
    %v1348 = vld [vmem:[#allocation6 + $0x8] sm:$0xff]
    %v1349 = vpack.c.bf16 %v1348, %v1347
    %v1350 = vld [vmem:[#allocation3] sm:$0xff]
    %v1351 = vld [vmem:[#allocation3 + $0x8] sm:$0xff]
    %v1352 = vld [vmem:[#allocation3 + $0x10] sm:$0xff]
    %v1353 = vld [vmem:[#allocation3 + $0x18] sm:$0xff]
    %v1354 = vld [vmem:[#allocation3 + $0x20] sm:$0xff]
    %v1355 = vld [vmem:[#allocation3 + $0x28] sm:$0xff]
    %v1356 = vld [vmem:[#allocation3 + $0x30] sm:$0xff]
    %v1357 = vld [vmem:[#allocation3 + $0x38] sm:$0xff]
    %v1358 = vld [vmem:[#allocation3 + $0x40] sm:$0xff]
    %v1359 = vld [vmem:[#allocation3 + $0x48] sm:$0xff]
    %v1360 = vld [vmem:[#allocation3 + $0x50] sm:$0xff]
    %v1361 = vld [vmem:[#allocation3 + $0x58] sm:$0xff]
    %v1362 = vld [vmem:[#allocation3 + $0x60] sm:$0xff]
    %v1363 = vld [vmem:[#allocation3 + $0x68] sm:$0xff]
    %v1364 = vld [vmem:[#allocation3 + $0x70] sm:$0xff]
    %v1365 = vld [vmem:[#allocation3 + $0x78] sm:$0xff]
    %v1366 = vld [vmem:[#allocation3 + $0x80] sm:$0xff]
    %v1367 = vld [vmem:[#allocation3 + $0x88] sm:$0xff]
    %v1368 = vld [vmem:[#allocation3 + $0x90] sm:$0xff]
    %v1369 = vld [vmem:[#allocation3 + $0x98] sm:$0xff]
    %v1370 = vld [vmem:[#allocation3 + $0xa0] sm:$0xff]
    %v1371 = vld [vmem:[#allocation3 + $0xa8] sm:$0xff]
    %v1372 = vld [vmem:[#allocation3 + $0xb0] sm:$0xff]
    %v1373 = vld [vmem:[#allocation3 + $0xb8] sm:$0xff]
    %v1374 = vld [vmem:[#allocation3 + $0xc0] sm:$0xff]
    %v1375 = vld [vmem:[#allocation3 + $0xc8] sm:$0xff]
    %v1376 = vld [vmem:[#allocation3 + $0xd0] sm:$0xff]
    %v1377 = vld [vmem:[#allocation3 + $0xd8] sm:$0xff]
    %v1378 = vld [vmem:[#allocation3 + $0xe0] sm:$0xff]
    %v1379 = vld [vmem:[#allocation3 + $0xe8] sm:$0xff]
    %v1380 = vld [vmem:[#allocation3 + $0xf0] sm:$0xff]
    %v1381 = vld [vmem:[#allocation3 + $0xf8] sm:$0xff]
    %v1382 = vld [vmem:[#allocation3 + $0x100] sm:$0xff]
    %v1383 = vld [vmem:[#allocation3 + $0x108] sm:$0xff]
    %v1384 = vld [vmem:[#allocation3 + $0x110] sm:$0xff]
    %v1385 = vld [vmem:[#allocation3 + $0x118] sm:$0xff]
    %v1386 = vld [vmem:[#allocation3 + $0x120] sm:$0xff]
    %v1387 = vld [vmem:[#allocation3 + $0x128] sm:$0xff]
    %v1388 = vld [vmem:[#allocation3 + $0x130] sm:$0xff]
    %v1389 = vld [vmem:[#allocation3 + $0x138] sm:$0xff]
    %v1390 = vld [vmem:[#allocation3 + $0x140] sm:$0xff]
    %v1391 = vld [vmem:[#allocation3 + $0x148] sm:$0xff]
    %v1392 = vld [vmem:[#allocation3 + $0x150] sm:$0xff]
    %v1393 = vld [vmem:[#allocation3 + $0x158] sm:$0xff]
    %v1394 = vld [vmem:[#allocation3 + $0x160] sm:$0xff]
    %v1395 = vld [vmem:[#allocation3 + $0x168] sm:$0xff]
    %v1396 = vld [vmem:[#allocation3 + $0x170] sm:$0xff]
    %v1397 = vld [vmem:[#allocation3 + $0x178] sm:$0xff]
    %v1398 = vld [vmem:[#allocation3 + $0x180] sm:$0xff]
    %v1399 = vld [vmem:[#allocation3 + $0x188] sm:$0xff]
    %v1400 = vld [vmem:[#allocation3 + $0x190] sm:$0xff]
    %v1401 = vld [vmem:[#allocation3 + $0x198] sm:$0xff]
    %v1402 = vld [vmem:[#allocation3 + $0x1a0] sm:$0xff]
    %v1403 = vld [vmem:[#allocation3 + $0x1a8] sm:$0xff]
    %v1404 = vld [vmem:[#allocation3 + $0x1b0] sm:$0xff]
    %v1405 = vld [vmem:[#allocation3 + $0x1b8] sm:$0xff]
    %v1406 = vld [vmem:[#allocation3 + $0x1c0] sm:$0xff]
    %v1407 = vld [vmem:[#allocation3 + $0x1c8] sm:$0xff]
    %v1408 = vld [vmem:[#allocation3 + $0x1d0] sm:$0xff]
    %v1409 = vld [vmem:[#allocation3 + $0x1d8] sm:$0xff]
    %v1410 = vld [vmem:[#allocation3 + $0x1e0] sm:$0xff]
    %v1411 = vld [vmem:[#allocation3 + $0x1e8] sm:$0xff]
    %v1412 = vld [vmem:[#allocation3 + $0x1f0] sm:$0xff]
    %v1413 = vld [vmem:[#allocation3 + $0x1f8] sm:$0xff]
    %1414 = vmatprep.subr.bf16.mxu0 %v1351
    %1415 = vmatpush1.bf16.msra.mxu0 %v1350
    %1416 = vmatprep.subr.bf16.mxu0 %v1359
    %1417 = vmatpush1.bf16.msra.mxu0 %v1358
    %1418 = vmatprep.subr.bf16.mxu0 %v1367
    %1419 = vmatpush1.bf16.msra.mxu0 %v1366
    %1420 = vmatprep.subr.bf16.mxu0 %v1375
    %1421 = vmatpush1.bf16.msra.mxu0 %v1374
    %1422 = vmatprep.subr.bf16.mxu0 %v1383
    %1423 = vmatpush1.bf16.msra.mxu0 %v1382
    %1424 = vmatprep.subr.bf16.mxu0 %v1391
    %1425 = vmatpush1.bf16.msra.mxu0 %v1390
    %1426 = vmatprep.subr.bf16.mxu0 %v1399
    %1427 = vmatpush1.bf16.msra.mxu0 %v1398
    %1428 = vmatprep.subr.bf16.mxu0 %v1407
    %1429 = vmatpush1.bf16.msra.mxu0 %v1406
    %1430 = vmatprep.subr.bf16.mxu0 0
    %1431 = vmatpush1.bf16.msra.mxu0 0
    %1432 = vmatprep.subr.bf16.mxu0 0
    %1433 = vmatpush1.bf16.msra.mxu0 0
    %1434 = vmatprep.subr.bf16.mxu0 0
    %1435 = vmatpush1.bf16.msra.mxu0 0
    %1436 = vmatprep.subr.bf16.mxu0 0
    %1437 = vmatpush1.bf16.msra.mxu0 0
    %1438 = vmatprep.subr.bf16.mxu0 0
    %1439 = vmatpush1.bf16.msra.mxu0 0
    %1440 = vmatprep.subr.bf16.mxu0 0
    %1441 = vmatpush1.bf16.msra.mxu0 0
    %1442 = vmatprep.subr.bf16.mxu0 0
    %1443 = vmatpush1.bf16.msra.mxu0 0
    %1444 = vmatprep.subr.bf16.mxu0 0
    %1445 = vmatpush1.bf16.msra.mxu0 0
    %1446 = vmatprep.mubr.bf16.mxu0 0
    %1447 = vmatmul.mubr.bf16.gmra.mrb[0].mxu0 %v1349
    %v1448 = vpop.f32.mrb[0].mxu0
    %v1449 = vadd.f32 0.0, %v1448
    %v1450 = vpop.f32.mrb[0].mxu0
    %v1451 = vadd.f32 0.0, %v1450
    %v1452 = vpop.f32.mrb[0].mxu0
    %v1453 = vadd.f32 0.0, %v1452
    %v1454 = vpop.f32.mrb[0].mxu0
    %v1455 = vadd.f32 0.0, %v1454
    %1456 = vdwg.mxu0
    %1457 = vmatprep.subr.bf16.mxu0 %v1353
    %1458 = vmatpush1.bf16.msra.mxu0 %v1352
    %1459 = vmatprep.subr.bf16.mxu0 %v1361
    %1460 = vmatpush1.bf16.msra.mxu0 %v1360
    %1461 = vmatprep.subr.bf16.mxu0 %v1369
    %1462 = vmatpush1.bf16.msra.mxu0 %v1368
    %1463 = vmatprep.subr.bf16.mxu0 %v1377
    %1464 = vmatpush1.bf16.msra.mxu0 %v1376
    %1465 = vmatprep.subr.bf16.mxu0 %v1385
    %1466 = vmatpush1.bf16.msra.mxu0 %v1384
    %1467 = vmatprep.subr.bf16.mxu0 %v1393
    %1468 = vmatpush1.bf16.msra.mxu0 %v1392
    %1469 = vmatprep.subr.bf16.mxu0 %v1401
    %1470 = vmatpush1.bf16.msra.mxu0 %v1400
    %1471 = vmatprep.subr.bf16.mxu0 %v1409
    %1472 = vmatpush1.bf16.msra.mxu0 %v1408
    %1473 = vmatprep.subr.bf16.mxu0 0
    %1474 = vmatpush1.bf16.msra.mxu0 0
    %1475 = vmatprep.subr.bf16.mxu0 0
    %1476 = vmatpush1.bf16.msra.mxu0 0
    %1477 = vmatprep.subr.bf16.mxu0 0
    %1478 = vmatpush1.bf16.msra.mxu0 0
    %1479 = vmatprep.subr.bf16.mxu0 0
    %1480 = vmatpush1.bf16.msra.mxu0 0
    %1481 = vmatprep.subr.bf16.mxu0 0
    %1482 = vmatpush1.bf16.msra.mxu0 0
    %1483 = vmatprep.subr.bf16.mxu0 0
    %1484 = vmatpush1.bf16.msra.mxu0 0
    %1485 = vmatprep.subr.bf16.mxu0 0
    %1486 = vmatpush1.bf16.msra.mxu0 0
    %1487 = vmatprep.subr.bf16.mxu0 0
    %1488 = vmatpush1.bf16.msra.mxu0 0
    %1489 = vmatprep.mubr.bf16.mxu0 0
    %1490 = vmatmul.mubr.bf16.gmra.mrb[0].mxu0 %v1349
    %v1491 = vpop.f32.mrb[0].mxu0
    %v1492 = vadd.f32 0.0, %v1491
    %v1493 = vpop.f32.mrb[0].mxu0
    %v1494 = vadd.f32 0.0, %v1493
    %v1495 = vpop.f32.mrb[0].mxu0
    %v1496 = vadd.f32 0.0, %v1495
    %v1497 = vpop.f32.mrb[0].mxu0
    %v1498 = vadd.f32 0.0, %v1497
    %1499 = vdwg.mxu0
    %v1500 = vld [vmem:[#allocation2] sm:$0xff]
    %v1501 = vld [vmem:[#allocation2 + $0x8] sm:$0xff]
    %v1502 = vld [vmem:[#allocation2 + $0x10] sm:$0xff]
    %v1503 = vld [vmem:[#allocation2 + $0x18] sm:$0xff]
    %v1504 = vld [vmem:[#allocation2 + $0x20] sm:$0xff]
    %v1505 = vld [vmem:[#allocation2 + $0x28] sm:$0xff]
    %v1506 = vld [vmem:[#allocation2 + $0x30] sm:$0xff]
    %v1507 = vld [vmem:[#allocation2 + $0x38] sm:$0xff]
    %v1508 = vadd.f32 %v1500, %v1449
    %v1509 = vadd.f32 %v1501, %v1451
    %v1510 = vadd.f32 %v1502, %v1492
    %v1511 = vadd.f32 %v1503, %v1494
    %v1512 = vadd.f32 %v1504, %v1453
    %v1513 = vadd.f32 %v1505, %v1455
    %v1514 = vadd.f32 %v1506, %v1496
    %v1515 = vadd.f32 %v1507, %v1498
    %v1516 = vld [vmem:[#allocation7] sm:$0xff]
    %v1517 = vld [vmem:[#allocation7 + $0x8] sm:$0xff]
    %v1518 = vtanh.pop %v1508
    %v1519 = vtanh.pop %v1509
    %v1520 = vtanh.pop %v1510
    %v1521 = vtanh.pop %v1511
    %v1522 = vtanh.pop %v1512
    %v1523 = vtanh.pop %v1513
    %v1524 = vtanh.pop %v1514
    %v1525 = vtanh.pop %v1515
    %v1526 = vmul.f32 %v1518, 0.5
    %v1527 = vmul.f32 %v1522, 0.5
    %v1528 = vadd.f32 %v1526, 0.5
    %v1529 = vadd.f32 %v1527, 0.5
    %v1530 = vmul.f32 %v1519, 0.5
    %v1531 = vmul.f32 %v1523, 0.5
    %v1532 = vadd.f32 %v1530, 0.5
    %v1533 = vadd.f32 %v1531, 0.5
    %v1534 = vmul.f32 %v1521, 0.5
    %v1535 = vmul.f32 %v1525, 0.5
    %v1536 = vadd.f32 %v1534, 0.5
    %v1537 = vadd.f32 %v1535, 0.5
    %v1538 = vmul.f32 %v1532, %v1516
    %v1539 = vmul.f32 %v1533, %v1517
    %v1540 = vmul.f32 %v1528, %v1520
    %v1541 = vmul.f32 %v1529, %v1524
    %v1542 = vadd.f32 %v1538, %v1540
    %v1543 = vadd.f32 %v1539, %v1541
    %v1544 = vtanh.pop %v1542
    %v1545 = vtanh.pop %v1543
    %v1546 = vmul.f32 %v1536, %v1544
    %v1547 = vmul.f32 %v1537, %v1545
    %s1548 = scalar_lea.vmem [#allocation6], 16
    %v1549 = vld [vmem:[%s1548] sm:$0xff]
    %v1550 = vld [vmem:[%s1548 + $0x8] sm:$0xff]
    %s1551 = scalar_lea.vmem [#allocation7], 16
    %v1552 = vld [vmem:[%s1551] sm:$0xff]
    %v1553 = vld [vmem:[%s1551 + $0x8] sm:$0xff]
    %v1554 = vpack.c.bf16 %v1547, %v1546
    %1555 = vmatprep.subr.bf16.mxu0 %v1351
    %1556 = vmatpush1.bf16.msra.mxu0 %v1350
    %1557 = vmatprep.subr.bf16.mxu0 %v1359
    %1558 = vmatpush1.bf16.msra.mxu0 %v1358
    %1559 = vmatprep.subr.bf16.mxu0 %v1367
    %1560 = vmatpush1.bf16.msra.mxu0 %v1366
    %1561 = vmatprep.subr.bf16.mxu0 %v1375
    %1562 = vmatpush1.bf16.msra.mxu0 %v1374
    %1563 = vmatprep.subr.bf16.mxu0 %v1383
    %1564 = vmatpush1.bf16.msra.mxu0 %v1382
    %1565 = vmatprep.subr.bf16.mxu0 %v1391
    %1566 = vmatpush1.bf16.msra.mxu0 %v1390
    %1567 = vmatprep.subr.bf16.mxu0 %v1399
    %1568 = vmatpush1.bf16.msra.mxu0 %v1398
    %1569 = vmatprep.subr.bf16.mxu0 %v1407
    %1570 = vmatpush1.bf16.msra.mxu0 %v1406
    %1571 = vmatprep.subr.bf16.mxu0 0
    %1572 = vmatpush1.bf16.msra.mxu0 0
    %1573 = vmatprep.subr.bf16.mxu0 0
    %1574 = vmatpush1.bf16.msra.mxu0 0
    %1575 = vmatprep.subr.bf16.mxu0 0
    %1576 = vmatpush1.bf16.msra.mxu0 0
    %1577 = vmatprep.subr.bf16.mxu0 0
    %1578 = vmatpush1.bf16.msra.mxu0 0
    %1579 = vmatprep.subr.bf16.mxu0 0
    %1580 = vmatpush1.bf16.msra.mxu0 0
    %1581 = vmatprep.subr.bf16.mxu0 0
    %1582 = vmatpush1.bf16.msra.mxu0 0
    %1583 = vmatprep.subr.bf16.mxu0 0
    %1584 = vmatpush1.bf16.msra.mxu0 0
    %1585 = vmatprep.subr.bf16.mxu0 0
    %1586 = vmatpush1.bf16.msra.mxu0 0
    %1587 = vmatprep.mubr.bf16.mxu0 0
    %1588 = vmatmul.mubr.bf16.gmra.mrb[0].mxu0 %v1554
    %v1589 = vpop.f32.mrb[0].mxu0
    %v1590 = vadd.f32 0.0, %v1589
    %v1591 = vpop.f32.mrb[0].mxu0
    %v1592 = vadd.f32 0.0, %v1591
    %v1593 = vpop.f32.mrb[0].mxu0
    %v1594 = vadd.f32 0.0, %v1593
    %v1595 = vpop.f32.mrb[0].mxu0
    %v1596 = vadd.f32 0.0, %v1595
    %1597 = vdwg.mxu0
    %1598 = vmatprep.subr.bf16.mxu0 %v1353
    %1599 = vmatpush1.bf16.msra.mxu0 %v1352
    %1600 = vmatprep.subr.bf16.mxu0 %v1361
    %1601 = vmatpush1.bf16.msra.mxu0 %v1360
    %1602 = vmatprep.subr.bf16.mxu0 %v1369
    %1603 = vmatpush1.bf16.msra.mxu0 %v1368
    %1604 = vmatprep.subr.bf16.mxu0 %v1377
    %1605 = vmatpush1.bf16.msra.mxu0 %v1376
    %1606 = vmatprep.subr.bf16.mxu0 %v1385
    %1607 = vmatpush1.bf16.msra.mxu0 %v1384
    %1608 = vmatprep.subr.bf16.mxu0 %v1393
    %1609 = vmatpush1.bf16.msra.mxu0 %v1392
    %1610 = vmatprep.subr.bf16.mxu0 %v1401
    %1611 = vmatpush1.bf16.msra.mxu0 %v1400
    %1612 = vmatprep.subr.bf16.mxu0 %v1409
    %1613 = vmatpush1.bf16.msra.mxu0 %v1408
    %1614 = vmatprep.subr.bf16.mxu0 0
    %1615 = vmatpush1.bf16.msra.mxu0 0
    %1616 = vmatprep.subr.bf16.mxu0 0
    %1617 = vmatpush1.bf16.msra.mxu0 0
    %1618 = vmatprep.subr.bf16.mxu0 0
    %1619 = vmatpush1.bf16.msra.mxu0 0
    %1620 = vmatprep.subr.bf16.mxu0 0
    %1621 = vmatpush1.bf16.msra.mxu0 0
    %1622 = vmatprep.subr.bf16.mxu0 0
    %1623 = vmatpush1.bf16.msra.mxu0 0
    %1624 = vmatprep.subr.bf16.mxu0 0
    %1625 = vmatpush1.bf16.msra.mxu0 0
    %1626 = vmatprep.subr.bf16.mxu0 0
    %1627 = vmatpush1.bf16.msra.mxu0 0
    %1628 = vmatprep.subr.bf16.mxu0 0
    %1629 = vmatpush1.bf16.msra.mxu0 0
    %1630 = vmatprep.mubr.bf16.mxu0 0
    %1631 = vmatmul.mubr.bf16.gmra.mrb[0].mxu0 %v1554
    %v1632 = vpop.f32.mrb[0].mxu0
    %v1633 = vadd.f32 0.0, %v1632
    %v1634 = vpop.f32.mrb[0].mxu0
    %v1635 = vadd.f32 0.0, %v1634
    %v1636 = vpop.f32.mrb[0].mxu0
    %v1637 = vadd.f32 0.0, %v1636
    %v1638 = vpop.f32.mrb[0].mxu0
    %v1639 = vadd.f32 0.0, %v1638
    %1640 = vdwg.mxu0
    %1641 = vmatprep.subr.bf16.mxu0 %v1355
    %1642 = vmatpush1.bf16.msra.mxu0 %v1354
    %1643 = vmatprep.subr.bf16.mxu0 %v1363
    %1644 = vmatpush1.bf16.msra.mxu0 %v1362
    %1645 = vmatprep.subr.bf16.mxu0 %v1371
    %1646 = vmatpush1.bf16.msra.mxu0 %v1370
    %1647 = vmatprep.subr.bf16.mxu0 %v1379
    %1648 = vmatpush1.bf16.msra.mxu0 %v1378
    %1649 = vmatprep.subr.bf16.mxu0 %v1387
    %1650 = vmatpush1.bf16.msra.mxu0 %v1386
    %1651 = vmatprep.subr.bf16.mxu0 %v1395
    %1652 = vmatpush1.bf16.msra.mxu0 %v1394
    %1653 = vmatprep.subr.bf16.mxu0 %v1403
    %1654 = vmatpush1.bf16.msra.mxu0 %v1402
    %1655 = vmatprep.subr.bf16.mxu0 %v1411
    %1656 = vmatpush1.bf16.msra.mxu0 %v1410
    %1657 = vmatprep.subr.bf16.mxu0 0
    %1658 = vmatpush1.bf16.msra.mxu0 0
    %1659 = vmatprep.subr.bf16.mxu0 0
    %1660 = vmatpush1.bf16.msra.mxu0 0
    %1661 = vmatprep.subr.bf16.mxu0 0
    %1662 = vmatpush1.bf16.msra.mxu0 0
    %1663 = vmatprep.subr.bf16.mxu0 0
    %1664 = vmatpush1.bf16.msra.mxu0 0
    %1665 = vmatprep.subr.bf16.mxu0 0
    %1666 = vmatpush1.bf16.msra.mxu0 0
    %1667 = vmatprep.subr.bf16.mxu0 0
    %1668 = vmatpush1.bf16.msra.mxu0 0
    %1669 = vmatprep.subr.bf16.mxu0 0
    %1670 = vmatpush1.bf16.msra.mxu0 0
    %1671 = vmatprep.subr.bf16.mxu0 0
    %1672 = vmatpush1.bf16.msra.mxu0 0
    %1673 = vmatprep.mubr.bf16.mxu0 0
    %1674 = vmatmul.mubr.bf16.gmra.mrb[0].mxu0 %v1554
    %v1675 = vpop.f32.mrb[0].mxu0
    %v1676 = vadd.f32 0.0, %v1675
    %v1677 = vpop.f32.mrb[0].mxu0
    %v1678 = vadd.f32 0.0, %v1677
    %v1679 = vpop.f32.mrb[0].mxu0
    %v1680 = vadd.f32 0.0, %v1679
    %v1681 = vpop.f32.mrb[0].mxu0
    %v1682 = vadd.f32 0.0, %v1681
    %1683 = vdwg.mxu0
    %1684 = vmatprep.subr.bf16.mxu0 %v1357
    %1685 = vmatpush1.bf16.msra.mxu0 %v1356
    %1686 = vmatprep.subr.bf16.mxu0 %v1365
    %1687 = vmatpush1.bf16.msra.mxu0 %v1364
    %1688 = vmatprep.subr.bf16.mxu0 %v1373
    %1689 = vmatpush1.bf16.msra.mxu0 %v1372
    %1690 = vmatprep.subr.bf16.mxu0 %v1381
    %1691 = vmatpush1.bf16.msra.mxu0 %v1380
    %1692 = vmatprep.subr.bf16.mxu0 %v1389
    %1693 = vmatpush1.bf16.msra.mxu0 %v1388
    %1694 = vmatprep.subr.bf16.mxu0 %v1397
    %1695 = vmatpush1.bf16.msra.mxu0 %v1396
    %1696 = vmatprep.subr.bf16.mxu0 %v1405
    %1697 = vmatpush1.bf16.msra.mxu0 %v1404
    %1698 = vmatprep.subr.bf16.mxu0 %v1413
    %1699 = vmatpush1.bf16.msra.mxu0 %v1412
    %1700 = vmatprep.subr.bf16.mxu0 0
    %1701 = vmatpush1.bf16.msra.mxu0 0
    %1702 = vmatprep.subr.bf16.mxu0 0
    %1703 = vmatpush1.bf16.msra.mxu0 0
    %1704 = vmatprep.subr.bf16.mxu0 0
    %1705 = vmatpush1.bf16.msra.mxu0 0
    %1706 = vmatprep.subr.bf16.mxu0 0
    %1707 = vmatpush1.bf16.msra.mxu0 0
    %1708 = vmatprep.subr.bf16.mxu0 0
    %1709 = vmatpush1.bf16.msra.mxu0 0
    %1710 = vmatprep.subr.bf16.mxu0 0
    %1711 = vmatpush1.bf16.msra.mxu0 0
    %1712 = vmatprep.subr.bf16.mxu0 0
    %1713 = vmatpush1.bf16.msra.mxu0 0
    %1714 = vmatprep.subr.bf16.mxu0 0
    %1715 = vmatpush1.bf16.msra.mxu0 0
    %1716 = vmatprep.mubr.bf16.mxu0 0
    %1717 = vmatmul.mubr.bf16.gmra.mrb[0].mxu0 %v1554
    %v1718 = vpop.f32.mrb[0].mxu0
    %v1719 = vadd.f32 0.0, %v1718
    %v1720 = vpop.f32.mrb[0].mxu0
    %v1721 = vadd.f32 0.0, %v1720
    %v1722 = vpop.f32.mrb[0].mxu0
    %v1723 = vadd.f32 0.0, %v1722
    %v1724 = vpop.f32.mrb[0].mxu0
    %v1725 = vadd.f32 0.0, %v1724
    %1726 = vdwg.mxu0
    %v1727 = vpack.c.bf16 %v1550, %v1549
    %v1728 = vld [vmem:[#allocation4] sm:$0xff]
    %v1729 = vld [vmem:[#allocation4 + $0x8] sm:$0xff]
    %v1730 = vld [vmem:[#allocation4 + $0x10] sm:$0xff]
    %v1731 = vld [vmem:[#allocation4 + $0x18] sm:$0xff]
    %v1732 = vld [vmem:[#allocation4 + $0x20] sm:$0xff]
    %v1733 = vld [vmem:[#allocation4 + $0x28] sm:$0xff]
    %v1734 = vld [vmem:[#allocation4 + $0x30] sm:$0xff]
    %v1735 = vld [vmem:[#allocation4 + $0x38] sm:$0xff]
    %v1736 = vld [vmem:[#allocation4 + $0x40] sm:$0xff]
    %v1737 = vld [vmem:[#allocation4 + $0x48] sm:$0xff]
    %v1738 = vld [vmem:[#allocation4 + $0x50] sm:$0xff]
    %v1739 = vld [vmem:[#allocation4 + $0x58] sm:$0xff]
    %v1740 = vld [vmem:[#allocation4 + $0x60] sm:$0xff]
    %v1741 = vld [vmem:[#allocation4 + $0x68] sm:$0xff]
    %v1742 = vld [vmem:[#allocation4 + $0x70] sm:$0xff]
    %v1743 = vld [vmem:[#allocation4 + $0x78] sm:$0xff]
    %v1744 = vld [vmem:[#allocation4 + $0x80] sm:$0xff]
    %v1745 = vld [vmem:[#allocation4 + $0x88] sm:$0xff]
    %v1746 = vld [vmem:[#allocation4 + $0x90] sm:$0xff]
    %v1747 = vld [vmem:[#allocation4 + $0x98] sm:$0xff]
    %v1748 = vld [vmem:[#allocation4 + $0xa0] sm:$0xff]
    %v1749 = vld [vmem:[#allocation4 + $0xa8] sm:$0xff]
    %v1750 = vld [vmem:[#allocation4 + $0xb0] sm:$0xff]
    %v1751 = vld [vmem:[#allocation4 + $0xb8] sm:$0xff]
    %v1752 = vld [vmem:[#allocation4 + $0xc0] sm:$0xff]
    %v1753 = vld [vmem:[#allocation4 + $0xc8] sm:$0xff]
    %v1754 = vld [vmem:[#allocation4 + $0xd0] sm:$0xff]
    %v1755 = vld [vmem:[#allocation4 + $0xd8] sm:$0xff]
    %v1756 = vld [vmem:[#allocation4 + $0xe0] sm:$0xff]
    %v1757 = vld [vmem:[#allocation4 + $0xe8] sm:$0xff]
    %v1758 = vld [vmem:[#allocation4 + $0xf0] sm:$0xff]
    %v1759 = vld [vmem:[#allocation4 + $0xf8] sm:$0xff]
    %1760 = vmatprep.subr.bf16.mxu0 %v1729
    %1761 = vmatpush1.bf16.msra.mxu0 %v1728
    %1762 = vmatprep.subr.bf16.mxu0 %v1733
    %1763 = vmatpush1.bf16.msra.mxu0 %v1732
    %1764 = vmatprep.subr.bf16.mxu0 %v1737
    %1765 = vmatpush1.bf16.msra.mxu0 %v1736
    %1766 = vmatprep.subr.bf16.mxu0 %v1741
    %1767 = vmatpush1.bf16.msra.mxu0 %v1740
    %1768 = vmatprep.subr.bf16.mxu0 %v1745
    %1769 = vmatpush1.bf16.msra.mxu0 %v1744
    %1770 = vmatprep.subr.bf16.mxu0 %v1749
    %1771 = vmatpush1.bf16.msra.mxu0 %v1748
    %1772 = vmatprep.subr.bf16.mxu0 %v1753
    %1773 = vmatpush1.bf16.msra.mxu0 %v1752
    %1774 = vmatprep.subr.bf16.mxu0 %v1757
    %1775 = vmatpush1.bf16.msra.mxu0 %v1756
    %1776 = vmatprep.subr.bf16.mxu0 0
    %1777 = vmatpush1.bf16.msra.mxu0 0
    %1778 = vmatprep.subr.bf16.mxu0 0
    %1779 = vmatpush1.bf16.msra.mxu0 0
    %1780 = vmatprep.subr.bf16.mxu0 0
    %1781 = vmatpush1.bf16.msra.mxu0 0
    %1782 = vmatprep.subr.bf16.mxu0 0
    %1783 = vmatpush1.bf16.msra.mxu0 0
    %1784 = vmatprep.subr.bf16.mxu0 0
    %1785 = vmatpush1.bf16.msra.mxu0 0
    %1786 = vmatprep.subr.bf16.mxu0 0
    %1787 = vmatpush1.bf16.msra.mxu0 0
    %1788 = vmatprep.subr.bf16.mxu0 0
    %1789 = vmatpush1.bf16.msra.mxu0 0
    %1790 = vmatprep.subr.bf16.mxu0 0
    %1791 = vmatpush1.bf16.msra.mxu0 0
    %1792 = vmatprep.mubr.bf16.mxu0 0
    %1793 = vmatmul.mubr.bf16.gmra.mrb[0].mxu0 %v1727
    %v1794 = vpop.f32.mrb[0].mxu0
    %v1795 = vadd.f32 0.0, %v1794
    %v1796 = vpop.f32.mrb[0].mxu0
    %v1797 = vadd.f32 0.0, %v1796
    %v1798 = vpop.f32.mrb[0].mxu0
    %v1799 = vadd.f32 0.0, %v1798
    %v1800 = vpop.f32.mrb[0].mxu0
    %v1801 = vadd.f32 0.0, %v1800
    %1802 = vdwg.mxu0
    %1803 = vmatprep.subr.bf16.mxu0 %v1731
    %1804 = vmatpush1.bf16.msra.mxu0 %v1730
    %1805 = vmatprep.subr.bf16.mxu0 %v1735
    %1806 = vmatpush1.bf16.msra.mxu0 %v1734
    %1807 = vmatprep.subr.bf16.mxu0 %v1739
    %1808 = vmatpush1.bf16.msra.mxu0 %v1738
    %1809 = vmatprep.subr.bf16.mxu0 %v1743
    %1810 = vmatpush1.bf16.msra.mxu0 %v1742
    %1811 = vmatprep.subr.bf16.mxu0 %v1747
    %1812 = vmatpush1.bf16.msra.mxu0 %v1746
    %1813 = vmatprep.subr.bf16.mxu0 %v1751
    %1814 = vmatpush1.bf16.msra.mxu0 %v1750
    %1815 = vmatprep.subr.bf16.mxu0 %v1755
    %1816 = vmatpush1.bf16.msra.mxu0 %v1754
    %1817 = vmatprep.subr.bf16.mxu0 %v1759
    %1818 = vmatpush1.bf16.msra.mxu0 %v1758
    %1819 = vmatprep.subr.bf16.mxu0 0
    %1820 = vmatpush1.bf16.msra.mxu0 0
    %1821 = vmatprep.subr.bf16.mxu0 0
    %1822 = vmatpush1.bf16.msra.mxu0 0
    %1823 = vmatprep.subr.bf16.mxu0 0
    %1824 = vmatpush1.bf16.msra.mxu0 0
    %1825 = vmatprep.subr.bf16.mxu0 0
    %1826 = vmatpush1.bf16.msra.mxu0 0
    %1827 = vmatprep.subr.bf16.mxu0 0
    %1828 = vmatpush1.bf16.msra.mxu0 0
    %1829 = vmatprep.subr.bf16.mxu0 0
    %1830 = vmatpush1.bf16.msra.mxu0 0
    %1831 = vmatprep.subr.bf16.mxu0 0
    %1832 = vmatpush1.bf16.msra.mxu0 0
    %1833 = vmatprep.subr.bf16.mxu0 0
    %1834 = vmatpush1.bf16.msra.mxu0 0
    %1835 = vmatprep.mubr.bf16.mxu0 0
    %1836 = vmatmul.mubr.bf16.gmra.mrb[0].mxu0 %v1727
    %v1837 = vpop.f32.mrb[0].mxu0
    %v1838 = vadd.f32 0.0, %v1837
    %v1839 = vpop.f32.mrb[0].mxu0
    %v1840 = vadd.f32 0.0, %v1839
    %v1841 = vpop.f32.mrb[0].mxu0
    %v1842 = vadd.f32 0.0, %v1841
    %v1843 = vpop.f32.mrb[0].mxu0
    %v1844 = vadd.f32 0.0, %v1843
    %1845 = vdwg.mxu0
    %s1846 = smul.u32 2, 4
    %s1847 = smul.addr %s1846, 8
    %s1848 = scalar_lea.vmem [#allocation2], %s1847
    %v1849 = vld [vmem:[%s1848] sm:$0xff]
    %v1850 = vld [vmem:[%s1848 + $0x8] sm:$0xff]
    %v1851 = vld [vmem:[%s1848 + $0x10] sm:$0xff]
    %v1852 = vld [vmem:[%s1848 + $0x18] sm:$0xff]
    %v1853 = vld [vmem:[%s1848 + $0x20] sm:$0xff]
    %v1854 = vld [vmem:[%s1848 + $0x28] sm:$0xff]
    %v1855 = vld [vmem:[%s1848 + $0x30] sm:$0xff]
    %v1856 = vld [vmem:[%s1848 + $0x38] sm:$0xff]
    %v1857 = vadd.f32 %v1849, %v1590
    %v1858 = vadd.f32 %v1850, %v1592
    %v1859 = vadd.f32 %v1851, %v1633
    %v1860 = vadd.f32 %v1852, %v1635
    %v1861 = vadd.f32 %v1853, %v1594
    %v1862 = vadd.f32 %v1854, %v1596
    %v1863 = vadd.f32 %v1855, %v1637
    %v1864 = vadd.f32 %v1856, %v1639
    %v1865 = vadd.f32 %v1676, %v1795
    %v1866 = vadd.f32 %v1678, %v1797
    %v1867 = vadd.f32 %v1719, %v1838
    %v1868 = vadd.f32 %v1721, %v1840
    %v1869 = vadd.f32 %v1680, %v1799
    %v1870 = vadd.f32 %v1682, %v1801
    %v1871 = vadd.f32 %v1723, %v1842
    %v1872 = vadd.f32 %v1725, %v1844
    %v1873 = vadd.f32 %v1865, %v1330
    %v1874 = vadd.f32 %v1866, %v1334
    %v1875 = vadd.f32 %v1867, %v1338
    %v1876 = vadd.f32 %v1868, %v1342
    %v1877 = vadd.f32 %v1869, %v1330
    %v1878 = vadd.f32 %v1870, %v1334
    %v1879 = vadd.f32 %v1871, %v1338
    %v1880 = vadd.f32 %v1872, %v1342
    %v1881 = vtanh.pop %v1857
    %v1882 = vtanh.pop %v1858
    %v1883 = vtanh.pop %v1859
    %v1884 = vtanh.pop %v1860
    %v1885 = vtanh.pop %v1861
    %v1886 = vtanh.pop %v1862
    %v1887 = vtanh.pop %v1863
    %v1888 = vtanh.pop %v1864
    %v1889 = vmul.f32 %v1881, 0.5
    %v1890 = vmul.f32 %v1885, 0.5
    %v1891 = vadd.f32 %v1889, 0.5
    %v1892 = vadd.f32 %v1890, 0.5
    %v1893 = vmul.f32 %v1882, 0.5
    %v1894 = vmul.f32 %v1886, 0.5
    %v1895 = vadd.f32 %v1893, 0.5
    %v1896 = vadd.f32 %v1894, 0.5
    %v1897 = vmul.f32 %v1884, 0.5
    %v1898 = vmul.f32 %v1888, 0.5
    %v1899 = vadd.f32 %v1897, 0.5
    %v1900 = vadd.f32 %v1898, 0.5
    %v1901 = vmul.f32 %v1895, %v1542
    %v1902 = vmul.f32 %v1896, %v1543
    %v1903 = vmul.f32 %v1891, %v1883
    %v1904 = vmul.f32 %v1892, %v1887
    %v1905 = vadd.f32 %v1901, %v1903
    %v1906 = vadd.f32 %v1902, %v1904
    %v1907 = vtanh.pop %v1905
    %v1908 = vtanh.pop %v1906
    %v1909 = vmul.f32 %v1899, %v1907
    %v1910 = vmul.f32 %v1900, %v1908
    %v1911 = vtanh.pop %v1873
    %v1912 = vtanh.pop %v1874
    %v1913 = vtanh.pop %v1875
    %v1914 = vtanh.pop %v1876
    %v1915 = vtanh.pop %v1877
    %v1916 = vtanh.pop %v1878
    %v1917 = vtanh.pop %v1879
    %v1918 = vtanh.pop %v1880
    %v1919 = vmul.f32 %v1911, 0.5
    %v1920 = vmul.f32 %v1915, 0.5
    %v1921 = vadd.f32 %v1919, 0.5
    %v1922 = vadd.f32 %v1920, 0.5
    %v1923 = vmul.f32 %v1912, 0.5
    %v1924 = vmul.f32 %v1916, 0.5
    %v1925 = vadd.f32 %v1923, 0.5
    %v1926 = vadd.f32 %v1924, 0.5
    %v1927 = vmul.f32 %v1914, 0.5
    %v1928 = vmul.f32 %v1918, 0.5
    %v1929 = vadd.f32 %v1927, 0.5
    %v1930 = vadd.f32 %v1928, 0.5
    %v1931 = vmul.f32 %v1925, %v1552
    %v1932 = vmul.f32 %v1926, %v1553
    %v1933 = vmul.f32 %v1921, %v1913
    %v1934 = vmul.f32 %v1922, %v1917
    %v1935 = vadd.f32 %v1931, %v1933
    %v1936 = vadd.f32 %v1932, %v1934
    %v1937 = vtanh.pop %v1935
    %v1938 = vtanh.pop %v1936
    %v1939 = vmul.f32 %v1929, %v1937
    %v1940 = vmul.f32 %v1930, %v1938
    %v1941 = vpack.c.bf16 %v1910, %v1909
    %1942 = vmatprep.subr.bf16.mxu0 %v1351
    %1943 = vmatpush1.bf16.msra.mxu0 %v1350
    %1944 = vmatprep.subr.bf16.mxu0 %v1359
    %1945 = vmatpush1.bf16.msra.mxu0 %v1358
    %1946 = vmatprep.subr.bf16.mxu0 %v1367
    %1947 = vmatpush1.bf16.msra.mxu0 %v1366
    %1948 = vmatprep.subr.bf16.mxu0 %v1375
    %1949 = vmatpush1.bf16.msra.mxu0 %v1374
    %1950 = vmatprep.subr.bf16.mxu0 %v1383
    %1951 = vmatpush1.bf16.msra.mxu0 %v1382
    %1952 = vmatprep.subr.bf16.mxu0 %v1391
    %1953 = vmatpush1.bf16.msra.mxu0 %v1390
    %1954 = vmatprep.subr.bf16.mxu0 %v1399
    %1955 = vmatpush1.bf16.msra.mxu0 %v1398
    %1956 = vmatprep.subr.bf16.mxu0 %v1407
    %1957 = vmatpush1.bf16.msra.mxu0 %v1406
    %1958 = vmatprep.subr.bf16.mxu0 0
    %1959 = vmatpush1.bf16.msra.mxu0 0
    %1960 = vmatprep.subr.bf16.mxu0 0
    %1961 = vmatpush1.bf16.msra.mxu0 0
    %1962 = vmatprep.subr.bf16.mxu0 0
    %1963 = vmatpush1.bf16.msra.mxu0 0
    %1964 = vmatprep.subr.bf16.mxu0 0
    %1965 = vmatpush1.bf16.msra.mxu0 0
    %1966 = vmatprep.subr.bf16.mxu0 0
    %1967 = vmatpush1.bf16.msra.mxu0 0
    %1968 = vmatprep.subr.bf16.mxu0 0
    %1969 = vmatpush1.bf16.msra.mxu0 0
    %1970 = vmatprep.subr.bf16.mxu0 0
    %1971 = vmatpush1.bf16.msra.mxu0 0
    %1972 = vmatprep.subr.bf16.mxu0 0
    %1973 = vmatpush1.bf16.msra.mxu0 0
    %1974 = vmatprep.mubr.bf16.mxu0 0
    %1975 = vmatmul.mubr.bf16.gmra.mrb[0].mxu0 %v1941
    %v1976 = vpop.f32.mrb[0].mxu0
    %v1977 = vadd.f32 0.0, %v1976
    %v1978 = vpop.f32.mrb[0].mxu0
    %v1979 = vadd.f32 0.0, %v1978
    %v1980 = vpop.f32.mrb[0].mxu0
    %v1981 = vadd.f32 0.0, %v1980
    %v1982 = vpop.f32.mrb[0].mxu0
    %v1983 = vadd.f32 0.0, %v1982
    %1984 = vdwg.mxu0
    %1985 = vmatprep.subr.bf16.mxu0 %v1353
    %1986 = vmatpush1.bf16.msra.mxu0 %v1352
    %1987 = vmatprep.subr.bf16.mxu0 %v1361
    %1988 = vmatpush1.bf16.msra.mxu0 %v1360
    %1989 = vmatprep.subr.bf16.mxu0 %v1369
    %1990 = vmatpush1.bf16.msra.mxu0 %v1368
    %1991 = vmatprep.subr.bf16.mxu0 %v1377
    %1992 = vmatpush1.bf16.msra.mxu0 %v1376
    %1993 = vmatprep.subr.bf16.mxu0 %v1385
    %1994 = vmatpush1.bf16.msra.mxu0 %v1384
    %1995 = vmatprep.subr.bf16.mxu0 %v1393
    %1996 = vmatpush1.bf16.msra.mxu0 %v1392
    %1997 = vmatprep.subr.bf16.mxu0 %v1401
    %1998 = vmatpush1.bf16.msra.mxu0 %v1400
    %1999 = vmatprep.subr.bf16.mxu0 %v1409
    %2000 = vmatpush1.bf16.msra.mxu0 %v1408
    %2001 = vmatprep.subr.bf16.mxu0 0
    %2002 = vmatpush1.bf16.msra.mxu0 0
    %2003 = vmatprep.subr.bf16.mxu0 0
    %2004 = vmatpush1.bf16.msra.mxu0 0
    %2005 = vmatprep.subr.bf16.mxu0 0
    %2006 = vmatpush1.bf16.msra.mxu0 0
    %2007 = vmatprep.subr.bf16.mxu0 0
    %2008 = vmatpush1.bf16.msra.mxu0 0
    %2009 = vmatprep.subr.bf16.mxu0 0
    %2010 = vmatpush1.bf16.msra.mxu0 0
    %2011 = vmatprep.subr.bf16.mxu0 0
    %2012 = vmatpush1.bf16.msra.mxu0 0
    %2013 = vmatprep.subr.bf16.mxu0 0
    %2014 = vmatpush1.bf16.msra.mxu0 0
    %2015 = vmatprep.subr.bf16.mxu0 0
    %2016 = vmatpush1.bf16.msra.mxu0 0
    %2017 = vmatprep.mubr.bf16.mxu0 0
    %2018 = vmatmul.mubr.bf16.gmra.mrb[0].mxu0 %v1941
    %v2019 = vpop.f32.mrb[0].mxu0
    %v2020 = vadd.f32 0.0, %v2019
    %v2021 = vpop.f32.mrb[0].mxu0
    %v2022 = vadd.f32 0.0, %v2021
    %v2023 = vpop.f32.mrb[0].mxu0
    %v2024 = vadd.f32 0.0, %v2023
    %v2025 = vpop.f32.mrb[0].mxu0
    %v2026 = vadd.f32 0.0, %v2025
    %2027 = vdwg.mxu0
    %2028 = vmatprep.subr.bf16.mxu0 %v1355
    %2029 = vmatpush1.bf16.msra.mxu0 %v1354
    %2030 = vmatprep.subr.bf16.mxu0 %v1363
    %2031 = vmatpush1.bf16.msra.mxu0 %v1362
    %2032 = vmatprep.subr.bf16.mxu0 %v1371
    %2033 = vmatpush1.bf16.msra.mxu0 %v1370
    %2034 = vmatprep.subr.bf16.mxu0 %v1379
    %2035 = vmatpush1.bf16.msra.mxu0 %v1378
    %2036 = vmatprep.subr.bf16.mxu0 %v1387
    %2037 = vmatpush1.bf16.msra.mxu0 %v1386
    %2038 = vmatprep.subr.bf16.mxu0 %v1395
    %2039 = vmatpush1.bf16.msra.mxu0 %v1394
    %2040 = vmatprep.subr.bf16.mxu0 %v1403
    %2041 = vmatpush1.bf16.msra.mxu0 %v1402
    %2042 = vmatprep.subr.bf16.mxu0 %v1411
    %2043 = vmatpush1.bf16.msra.mxu0 %v1410
    %2044 = vmatprep.subr.bf16.mxu0 0
    %2045 = vmatpush1.bf16.msra.mxu0 0
    %2046 = vmatprep.subr.bf16.mxu0 0
    %2047 = vmatpush1.bf16.msra.mxu0 0
    %2048 = vmatprep.subr.bf16.mxu0 0
    %2049 = vmatpush1.bf16.msra.mxu0 0
    %2050 = vmatprep.subr.bf16.mxu0 0
    %2051 = vmatpush1.bf16.msra.mxu0 0
    %2052 = vmatprep.subr.bf16.mxu0 0
    %2053 = vmatpush1.bf16.msra.mxu0 0
    %2054 = vmatprep.subr.bf16.mxu0 0
    %2055 = vmatpush1.bf16.msra.mxu0 0
    %2056 = vmatprep.subr.bf16.mxu0 0
    %2057 = vmatpush1.bf16.msra.mxu0 0
    %2058 = vmatprep.subr.bf16.mxu0 0
    %2059 = vmatpush1.bf16.msra.mxu0 0
    %2060 = vmatprep.mubr.bf16.mxu0 0
    %2061 = vmatmul.mubr.bf16.gmra.mrb[0].mxu0 %v1941
    %v2062 = vpop.f32.mrb[0].mxu0
    %v2063 = vadd.f32 0.0, %v2062
    %v2064 = vpop.f32.mrb[0].mxu0
    %v2065 = vadd.f32 0.0, %v2064
    %v2066 = vpop.f32.mrb[0].mxu0
    %v2067 = vadd.f32 0.0, %v2066
    %v2068 = vpop.f32.mrb[0].mxu0
    %v2069 = vadd.f32 0.0, %v2068
    %2070 = vdwg.mxu0
    %2071 = vmatprep.subr.bf16.mxu0 %v1357
    %2072 = vmatpush1.bf16.msra.mxu0 %v1356
    %2073 = vmatprep.subr.bf16.mxu0 %v1365
    %2074 = vmatpush1.bf16.msra.mxu0 %v1364
    %2075 = vmatprep.subr.bf16.mxu0 %v1373
    %2076 = vmatpush1.bf16.msra.mxu0 %v1372
    %2077 = vmatprep.subr.bf16.mxu0 %v1381
    %2078 = vmatpush1.bf16.msra.mxu0 %v1380
    %2079 = vmatprep.subr.bf16.mxu0 %v1389
    %2080 = vmatpush1.bf16.msra.mxu0 %v1388
    %2081 = vmatprep.subr.bf16.mxu0 %v1397
    %2082 = vmatpush1.bf16.msra.mxu0 %v1396
    %2083 = vmatprep.subr.bf16.mxu0 %v1405
    %2084 = vmatpush1.bf16.msra.mxu0 %v1404
    %2085 = vmatprep.subr.bf16.mxu0 %v1413
    %2086 = vmatpush1.bf16.msra.mxu0 %v1412
    %2087 = vmatprep.subr.bf16.mxu0 0
    %2088 = vmatpush1.bf16.msra.mxu0 0
    %2089 = vmatprep.subr.bf16.mxu0 0
    %2090 = vmatpush1.bf16.msra.mxu0 0
    %2091 = vmatprep.subr.bf16.mxu0 0
    %2092 = vmatpush1.bf16.msra.mxu0 0
    %2093 = vmatprep.subr.bf16.mxu0 0
    %2094 = vmatpush1.bf16.msra.mxu0 0
    %2095 = vmatprep.subr.bf16.mxu0 0
    %2096 = vmatpush1.bf16.msra.mxu0 0
    %2097 = vmatprep.subr.bf16.mxu0 0
    %2098 = vmatpush1.bf16.msra.mxu0 0
    %2099 = vmatprep.subr.bf16.mxu0 0
    %2100 = vmatpush1.bf16.msra.mxu0 0
    %2101 = vmatprep.subr.bf16.mxu0 0
    %2102 = vmatpush1.bf16.msra.mxu0 0
    %2103 = vmatprep.mubr.bf16.mxu0 0
    %2104 = vmatmul.mubr.bf16.gmra.mrb[0].mxu0 %v1941
    %v2105 = vpop.f32.mrb[0].mxu0
    %v2106 = vadd.f32 0.0, %v2105
    %v2107 = vpop.f32.mrb[0].mxu0
    %v2108 = vadd.f32 0.0, %v2107
    %v2109 = vpop.f32.mrb[0].mxu0
    %v2110 = vadd.f32 0.0, %v2109
    %v2111 = vpop.f32.mrb[0].mxu0
    %v2112 = vadd.f32 0.0, %v2111
    %2113 = vdwg.mxu0
    %v2114 = vpack.c.bf16 %v1940, %v1939
    %2115 = vmatprep.subr.bf16.mxu0 %v1729
    %2116 = vmatpush1.bf16.msra.mxu0 %v1728
    %2117 = vmatprep.subr.bf16.mxu0 %v1733
    %2118 = vmatpush1.bf16.msra.mxu0 %v1732
    %2119 = vmatprep.subr.bf16.mxu0 %v1737
    %2120 = vmatpush1.bf16.msra.mxu0 %v1736
    %2121 = vmatprep.subr.bf16.mxu0 %v1741
    %2122 = vmatpush1.bf16.msra.mxu0 %v1740
    %2123 = vmatprep.subr.bf16.mxu0 %v1745
    %2124 = vmatpush1.bf16.msra.mxu0 %v1744
    %2125 = vmatprep.subr.bf16.mxu0 %v1749
    %2126 = vmatpush1.bf16.msra.mxu0 %v1748
    %2127 = vmatprep.subr.bf16.mxu0 %v1753
    %2128 = vmatpush1.bf16.msra.mxu0 %v1752
    %2129 = vmatprep.subr.bf16.mxu0 %v1757
    %2130 = vmatpush1.bf16.msra.mxu0 %v1756
    %2131 = vmatprep.subr.bf16.mxu0 0
    %2132 = vmatpush1.bf16.msra.mxu0 0
    %2133 = vmatprep.subr.bf16.mxu0 0
    %2134 = vmatpush1.bf16.msra.mxu0 0
    %2135 = vmatprep.subr.bf16.mxu0 0
    %2136 = vmatpush1.bf16.msra.mxu0 0
    %2137 = vmatprep.subr.bf16.mxu0 0
    %2138 = vmatpush1.bf16.msra.mxu0 0
    %2139 = vmatprep.subr.bf16.mxu0 0
    %2140 = vmatpush1.bf16.msra.mxu0 0
    %2141 = vmatprep.subr.bf16.mxu0 0
    %2142 = vmatpush1.bf16.msra.mxu0 0
    %2143 = vmatprep.subr.bf16.mxu0 0
    %2144 = vmatpush1.bf16.msra.mxu0 0
    %2145 = vmatprep.subr.bf16.mxu0 0
    %2146 = vmatpush1.bf16.msra.mxu0 0
    %2147 = vmatprep.mubr.bf16.mxu0 0
    %2148 = vmatmul.mubr.bf16.gmra.mrb[0].mxu0 %v2114
    %v2149 = vpop.f32.mrb[0].mxu0
    %v2150 = vadd.f32 0.0, %v2149
    %v2151 = vpop.f32.mrb[0].mxu0
    %v2152 = vadd.f32 0.0, %v2151
    %v2153 = vpop.f32.mrb[0].mxu0
    %v2154 = vadd.f32 0.0, %v2153
    %v2155 = vpop.f32.mrb[0].mxu0
    %v2156 = vadd.f32 0.0, %v2155
    %2157 = vdwg.mxu0
    %2158 = vmatprep.subr.bf16.mxu0 %v1731
    %2159 = vmatpush1.bf16.msra.mxu0 %v1730
    %2160 = vmatprep.subr.bf16.mxu0 %v1735
    %2161 = vmatpush1.bf16.msra.mxu0 %v1734
    %2162 = vmatprep.subr.bf16.mxu0 %v1739
    %2163 = vmatpush1.bf16.msra.mxu0 %v1738
    %2164 = vmatprep.subr.bf16.mxu0 %v1743
    %2165 = vmatpush1.bf16.msra.mxu0 %v1742
    %2166 = vmatprep.subr.bf16.mxu0 %v1747
    %2167 = vmatpush1.bf16.msra.mxu0 %v1746
    %2168 = vmatprep.subr.bf16.mxu0 %v1751
    %2169 = vmatpush1.bf16.msra.mxu0 %v1750
    %2170 = vmatprep.subr.bf16.mxu0 %v1755
    %2171 = vmatpush1.bf16.msra.mxu0 %v1754
    %2172 = vmatprep.subr.bf16.mxu0 %v1759
    %2173 = vmatpush1.bf16.msra.mxu0 %v1758
    %2174 = vmatprep.subr.bf16.mxu0 0
    %2175 = vmatpush1.bf16.msra.mxu0 0
    %2176 = vmatprep.subr.bf16.mxu0 0
    %2177 = vmatpush1.bf16.msra.mxu0 0
    %2178 = vmatprep.subr.bf16.mxu0 0
    %2179 = vmatpush1.bf16.msra.mxu0 0
    %2180 = vmatprep.subr.bf16.mxu0 0
    %2181 = vmatpush1.bf16.msra.mxu0 0
    %2182 = vmatprep.subr.bf16.mxu0 0
    %2183 = vmatpush1.bf16.msra.mxu0 0
    %2184 = vmatprep.subr.bf16.mxu0 0
    %2185 = vmatpush1.bf16.msra.mxu0 0
    %2186 = vmatprep.subr.bf16.mxu0 0
    %2187 = vmatpush1.bf16.msra.mxu0 0
    %2188 = vmatprep.subr.bf16.mxu0 0
    %2189 = vmatpush1.bf16.msra.mxu0 0
    %2190 = vmatprep.mubr.bf16.mxu0 0
    %2191 = vmatmul.mubr.bf16.gmra.mrb[0].mxu0 %v2114
    %v2192 = vpop.f32.mrb[0].mxu0
    %v2193 = vadd.f32 0.0, %v2192
    %v2194 = vpop.f32.mrb[0].mxu0
    %v2195 = vadd.f32 0.0, %v2194
    %v2196 = vpop.f32.mrb[0].mxu0
    %v2197 = vadd.f32 0.0, %v2196
    %v2198 = vpop.f32.mrb[0].mxu0
    %v2199 = vadd.f32 0.0, %v2198
    %2200 = vdwg.mxu0
    %s2201 = smul.u32 4, 4
    %s2202 = smul.addr %s2201, 8
    %s2203 = scalar_lea.vmem [#allocation2], %s2202
    %v2204 = vld [vmem:[%s2203] sm:$0xff]
    %v2205 = vld [vmem:[%s2203 + $0x8] sm:$0xff]
    %v2206 = vld [vmem:[%s2203 + $0x10] sm:$0xff]
    %v2207 = vld [vmem:[%s2203 + $0x18] sm:$0xff]
    %v2208 = vld [vmem:[%s2203 + $0x20] sm:$0xff]
    %v2209 = vld [vmem:[%s2203 + $0x28] sm:$0xff]
    %v2210 = vld [vmem:[%s2203 + $0x30] sm:$0xff]
    %v2211 = vld [vmem:[%s2203 + $0x38] sm:$0xff]
    %v2212 = vadd.f32 %v2204, %v1977
    %v2213 = vadd.f32 %v2205, %v1979
    %v2214 = vadd.f32 %v2206, %v2020
    %v2215 = vadd.f32 %v2207, %v2022
    %v2216 = vadd.f32 %v2208, %v1981
    %v2217 = vadd.f32 %v2209, %v1983
    %v2218 = vadd.f32 %v2210, %v2024
    %v2219 = vadd.f32 %v2211, %v2026
    %v2220 = vadd.f32 %v2063, %v2150
    %v2221 = vadd.f32 %v2065, %v2152
    %v2222 = vadd.f32 %v2106, %v2193
    %v2223 = vadd.f32 %v2108, %v2195
    %v2224 = vadd.f32 %v2067, %v2154
    %v2225 = vadd.f32 %v2069, %v2156
    %v2226 = vadd.f32 %v2110, %v2197
    %v2227 = vadd.f32 %v2112, %v2199
    %v2228 = vadd.f32 %v2220, %v1330
    %v2229 = vadd.f32 %v2221, %v1334
    %v2230 = vadd.f32 %v2222, %v1338
    %v2231 = vadd.f32 %v2223, %v1342
    %v2232 = vadd.f32 %v2224, %v1330
    %v2233 = vadd.f32 %v2225, %v1334
    %v2234 = vadd.f32 %v2226, %v1338
    %v2235 = vadd.f32 %v2227, %v1342
    %v2236 = vtanh.pop %v2212
    %v2237 = vtanh.pop %v2213
    %v2238 = vtanh.pop %v2214
    %v2239 = vtanh.pop %v2215
    %v2240 = vtanh.pop %v2216
    %v2241 = vtanh.pop %v2217
    %v2242 = vtanh.pop %v2218
    %v2243 = vtanh.pop %v2219
    %v2244 = vmul.f32 %v2236, 0.5
    %v2245 = vmul.f32 %v2240, 0.5
    %v2246 = vadd.f32 %v2244, 0.5
    %v2247 = vadd.f32 %v2245, 0.5
    %v2248 = vmul.f32 %v2237, 0.5
    %v2249 = vmul.f32 %v2241, 0.5
    %v2250 = vadd.f32 %v2248, 0.5
    %v2251 = vadd.f32 %v2249, 0.5
    %v2252 = vmul.f32 %v2239, 0.5
    %v2253 = vmul.f32 %v2243, 0.5
    %v2254 = vadd.f32 %v2252, 0.5
    %v2255 = vadd.f32 %v2253, 0.5
    %v2256 = vmul.f32 %v2250, %v1905
    %v2257 = vmul.f32 %v2251, %v1906
    %v2258 = vmul.f32 %v2246, %v2238
    %v2259 = vmul.f32 %v2247, %v2242
    %v2260 = vadd.f32 %v2256, %v2258
    %v2261 = vadd.f32 %v2257, %v2259
    %v2262 = vtanh.pop %v2260
    %v2263 = vtanh.pop %v2261
    %v2264 = vmul.f32 %v2254, %v2262
    %v2265 = vmul.f32 %v2255, %v2263
    %v2266 = vtanh.pop %v2228
    %v2267 = vtanh.pop %v2229
    %v2268 = vtanh.pop %v2230
    %v2269 = vtanh.pop %v2231
    %v2270 = vtanh.pop %v2232
    %v2271 = vtanh.pop %v2233
    %v2272 = vtanh.pop %v2234
    %v2273 = vtanh.pop %v2235
    %v2274 = vmul.f32 %v2266, 0.5
    %v2275 = vmul.f32 %v2270, 0.5
    %v2276 = vadd.f32 %v2274, 0.5
    %v2277 = vadd.f32 %v2275, 0.5
    %v2278 = vmul.f32 %v2267, 0.5
    %v2279 = vmul.f32 %v2271, 0.5
    %v2280 = vadd.f32 %v2278, 0.5
    %v2281 = vadd.f32 %v2279, 0.5
    %v2282 = vmul.f32 %v2269, 0.5
    %v2283 = vmul.f32 %v2273, 0.5
    %v2284 = vadd.f32 %v2282, 0.5
    %v2285 = vadd.f32 %v2283, 0.5
    %v2286 = vmul.f32 %v2280, %v1935
    %v2287 = vmul.f32 %v2281, %v1936
    %v2288 = vmul.f32 %v2276, %v2268
    %v2289 = vmul.f32 %v2277, %v2272
    %v2290 = vadd.f32 %v2286, %v2288
    %v2291 = vadd.f32 %v2287, %v2289
    %v2292 = vtanh.pop %v2290
    %v2293 = vtanh.pop %v2291
    %v2294 = vmul.f32 %v2284, %v2292
    %v2295 = vmul.f32 %v2285, %v2293
    %v2296 = vpack.c.bf16 %v2265, %v2264
    %2297 = vmatprep.subr.bf16.mxu0 %v1351
    %2298 = vmatpush1.bf16.msra.mxu0 %v1350
    %2299 = vmatprep.subr.bf16.mxu0 %v1359
    %2300 = vmatpush1.bf16.msra.mxu0 %v1358
    %2301 = vmatprep.subr.bf16.mxu0 %v1367
    %2302 = vmatpush1.bf16.msra.mxu0 %v1366
    %2303 = vmatprep.subr.bf16.mxu0 %v1375
    %2304 = vmatpush1.bf16.msra.mxu0 %v1374
    %2305 = vmatprep.subr.bf16.mxu0 %v1383
    %2306 = vmatpush1.bf16.msra.mxu0 %v1382
    %2307 = vmatprep.subr.bf16.mxu0 %v1391
    %2308 = vmatpush1.bf16.msra.mxu0 %v1390
    %2309 = vmatprep.subr.bf16.mxu0 %v1399
    %2310 = vmatpush1.bf16.msra.mxu0 %v1398
    %2311 = vmatprep.subr.bf16.mxu0 %v1407
    %2312 = vmatpush1.bf16.msra.mxu0 %v1406
    %2313 = vmatprep.subr.bf16.mxu0 0
    %2314 = vmatpush1.bf16.msra.mxu0 0
    %2315 = vmatprep.subr.bf16.mxu0 0
    %2316 = vmatpush1.bf16.msra.mxu0 0
    %2317 = vmatprep.subr.bf16.mxu0 0
    %2318 = vmatpush1.bf16.msra.mxu0 0
    %2319 = vmatprep.subr.bf16.mxu0 0
    %2320 = vmatpush1.bf16.msra.mxu0 0
    %2321 = vmatprep.subr.bf16.mxu0 0
    %2322 = vmatpush1.bf16.msra.mxu0 0
    %2323 = vmatprep.subr.bf16.mxu0 0
    %2324 = vmatpush1.bf16.msra.mxu0 0
    %2325 = vmatprep.subr.bf16.mxu0 0
    %2326 = vmatpush1.bf16.msra.mxu0 0
    %2327 = vmatprep.subr.bf16.mxu0 0
    %2328 = vmatpush1.bf16.msra.mxu0 0
    %2329 = vmatprep.mubr.bf16.mxu0 0
    %2330 = vmatmul.mubr.bf16.gmra.mrb[0].mxu0 %v2296
    %v2331 = vpop.f32.mrb[0].mxu0
    %v2332 = vadd.f32 0.0, %v2331
    %v2333 = vpop.f32.mrb[0].mxu0
    %v2334 = vadd.f32 0.0, %v2333
    %v2335 = vpop.f32.mrb[0].mxu0
    %v2336 = vadd.f32 0.0, %v2335
    %v2337 = vpop.f32.mrb[0].mxu0
    %v2338 = vadd.f32 0.0, %v2337
    %2339 = vdwg.mxu0
    %2340 = vmatprep.subr.bf16.mxu0 %v1353
    %2341 = vmatpush1.bf16.msra.mxu0 %v1352
    %2342 = vmatprep.subr.bf16.mxu0 %v1361
    %2343 = vmatpush1.bf16.msra.mxu0 %v1360
    %2344 = vmatprep.subr.bf16.mxu0 %v1369
    %2345 = vmatpush1.bf16.msra.mxu0 %v1368
    %2346 = vmatprep.subr.bf16.mxu0 %v1377
    %2347 = vmatpush1.bf16.msra.mxu0 %v1376
    %2348 = vmatprep.subr.bf16.mxu0 %v1385
    %2349 = vmatpush1.bf16.msra.mxu0 %v1384
    %2350 = vmatprep.subr.bf16.mxu0 %v1393
    %2351 = vmatpush1.bf16.msra.mxu0 %v1392
    %2352 = vmatprep.subr.bf16.mxu0 %v1401
    %2353 = vmatpush1.bf16.msra.mxu0 %v1400
    %2354 = vmatprep.subr.bf16.mxu0 %v1409
    %2355 = vmatpush1.bf16.msra.mxu0 %v1408
    %2356 = vmatprep.subr.bf16.mxu0 0
    %2357 = vmatpush1.bf16.msra.mxu0 0
    %2358 = vmatprep.subr.bf16.mxu0 0
    %2359 = vmatpush1.bf16.msra.mxu0 0
    %2360 = vmatprep.subr.bf16.mxu0 0
    %2361 = vmatpush1.bf16.msra.mxu0 0
    %2362 = vmatprep.subr.bf16.mxu0 0
    %2363 = vmatpush1.bf16.msra.mxu0 0
    %2364 = vmatprep.subr.bf16.mxu0 0
    %2365 = vmatpush1.bf16.msra.mxu0 0
    %2366 = vmatprep.subr.bf16.mxu0 0
    %2367 = vmatpush1.bf16.msra.mxu0 0
    %2368 = vmatprep.subr.bf16.mxu0 0
    %2369 = vmatpush1.bf16.msra.mxu0 0
    %2370 = vmatprep.subr.bf16.mxu0 0
    %2371 = vmatpush1.bf16.msra.mxu0 0
    %2372 = vmatprep.mubr.bf16.mxu0 0
    %2373 = vmatmul.mubr.bf16.gmra.mrb[0].mxu0 %v2296
    %v2374 = vpop.f32.mrb[0].mxu0
    %v2375 = vadd.f32 0.0, %v2374
    %v2376 = vpop.f32.mrb[0].mxu0
    %v2377 = vadd.f32 0.0, %v2376
    %v2378 = vpop.f32.mrb[0].mxu0
    %v2379 = vadd.f32 0.0, %v2378
    %v2380 = vpop.f32.mrb[0].mxu0
    %v2381 = vadd.f32 0.0, %v2380
    %2382 = vdwg.mxu0
    %2383 = vmatprep.subr.bf16.mxu0 %v1355
    %2384 = vmatpush1.bf16.msra.mxu0 %v1354
    %2385 = vmatprep.subr.bf16.mxu0 %v1363
    %2386 = vmatpush1.bf16.msra.mxu0 %v1362
    %2387 = vmatprep.subr.bf16.mxu0 %v1371
    %2388 = vmatpush1.bf16.msra.mxu0 %v1370
    %2389 = vmatprep.subr.bf16.mxu0 %v1379
    %2390 = vmatpush1.bf16.msra.mxu0 %v1378
    %2391 = vmatprep.subr.bf16.mxu0 %v1387
    %2392 = vmatpush1.bf16.msra.mxu0 %v1386
    %2393 = vmatprep.subr.bf16.mxu0 %v1395
    %2394 = vmatpush1.bf16.msra.mxu0 %v1394
    %2395 = vmatprep.subr.bf16.mxu0 %v1403
    %2396 = vmatpush1.bf16.msra.mxu0 %v1402
    %2397 = vmatprep.subr.bf16.mxu0 %v1411
    %2398 = vmatpush1.bf16.msra.mxu0 %v1410
    %2399 = vmatprep.subr.bf16.mxu0 0
    %2400 = vmatpush1.bf16.msra.mxu0 0
    %2401 = vmatprep.subr.bf16.mxu0 0
    %2402 = vmatpush1.bf16.msra.mxu0 0
    %2403 = vmatprep.subr.bf16.mxu0 0
    %2404 = vmatpush1.bf16.msra.mxu0 0
    %2405 = vmatprep.subr.bf16.mxu0 0
    %2406 = vmatpush1.bf16.msra.mxu0 0
    %2407 = vmatprep.subr.bf16.mxu0 0
    %2408 = vmatpush1.bf16.msra.mxu0 0
    %2409 = vmatprep.subr.bf16.mxu0 0
    %2410 = vmatpush1.bf16.msra.mxu0 0
    %2411 = vmatprep.subr.bf16.mxu0 0
    %2412 = vmatpush1.bf16.msra.mxu0 0
    %2413 = vmatprep.subr.bf16.mxu0 0
    %2414 = vmatpush1.bf16.msra.mxu0 0
    %2415 = vmatprep.mubr.bf16.mxu0 0
    %2416 = vmatmul.mubr.bf16.gmra.mrb[0].mxu0 %v2296
    %v2417 = vpop.f32.mrb[0].mxu0
    %v2418 = vadd.f32 0.0, %v2417
    %v2419 = vpop.f32.mrb[0].mxu0
    %v2420 = vadd.f32 0.0, %v2419
    %v2421 = vpop.f32.mrb[0].mxu0
    %v2422 = vadd.f32 0.0, %v2421
    %v2423 = vpop.f32.mrb[0].mxu0
    %v2424 = vadd.f32 0.0, %v2423
    %2425 = vdwg.mxu0
    %2426 = vmatprep.subr.bf16.mxu0 %v1357
    %2427 = vmatpush1.bf16.msra.mxu0 %v1356
    %2428 = vmatprep.subr.bf16.mxu0 %v1365
    %2429 = vmatpush1.bf16.msra.mxu0 %v1364
    %2430 = vmatprep.subr.bf16.mxu0 %v1373
    %2431 = vmatpush1.bf16.msra.mxu0 %v1372
    %2432 = vmatprep.subr.bf16.mxu0 %v1381
    %2433 = vmatpush1.bf16.msra.mxu0 %v1380
    %2434 = vmatprep.subr.bf16.mxu0 %v1389
    %2435 = vmatpush1.bf16.msra.mxu0 %v1388
    %2436 = vmatprep.subr.bf16.mxu0 %v1397
    %2437 = vmatpush1.bf16.msra.mxu0 %v1396
    %2438 = vmatprep.subr.bf16.mxu0 %v1405
    %2439 = vmatpush1.bf16.msra.mxu0 %v1404
    %2440 = vmatprep.subr.bf16.mxu0 %v1413
    %2441 = vmatpush1.bf16.msra.mxu0 %v1412
    %2442 = vmatprep.subr.bf16.mxu0 0
    %2443 = vmatpush1.bf16.msra.mxu0 0
    %2444 = vmatprep.subr.bf16.mxu0 0
    %2445 = vmatpush1.bf16.msra.mxu0 0
    %2446 = vmatprep.subr.bf16.mxu0 0
    %2447 = vmatpush1.bf16.msra.mxu0 0
    %2448 = vmatprep.subr.bf16.mxu0 0
    %2449 = vmatpush1.bf16.msra.mxu0 0
    %2450 = vmatprep.subr.bf16.mxu0 0
    %2451 = vmatpush1.bf16.msra.mxu0 0
    %2452 = vmatprep.subr.bf16.mxu0 0
    %2453 = vmatpush1.bf16.msra.mxu0 0
    %2454 = vmatprep.subr.bf16.mxu0 0
    %2455 = vmatpush1.bf16.msra.mxu0 0
    %2456 = vmatprep.subr.bf16.mxu0 0
    %2457 = vmatpush1.bf16.msra.mxu0 0
    %2458 = vmatprep.mubr.bf16.mxu0 0
    %2459 = vmatmul.mubr.bf16.gmra.mrb[0].mxu0 %v2296
    %v2460 = vpop.f32.mrb[0].mxu0
    %v2461 = vadd.f32 0.0, %v2460
    %v2462 = vpop.f32.mrb[0].mxu0
    %v2463 = vadd.f32 0.0, %v2462
    %v2464 = vpop.f32.mrb[0].mxu0
    %v2465 = vadd.f32 0.0, %v2464
    %v2466 = vpop.f32.mrb[0].mxu0
    %v2467 = vadd.f32 0.0, %v2466
    %2468 = vdwg.mxu0
    %v2469 = vpack.c.bf16 %v2295, %v2294
    %2470 = vmatprep.subr.bf16.mxu0 %v1729
    %2471 = vmatpush1.bf16.msra.mxu0 %v1728
    %2472 = vmatprep.subr.bf16.mxu0 %v1733
    %2473 = vmatpush1.bf16.msra.mxu0 %v1732
    %2474 = vmatprep.subr.bf16.mxu0 %v1737
    %2475 = vmatpush1.bf16.msra.mxu0 %v1736
    %2476 = vmatprep.subr.bf16.mxu0 %v1741
    %2477 = vmatpush1.bf16.msra.mxu0 %v1740
    %2478 = vmatprep.subr.bf16.mxu0 %v1745
    %2479 = vmatpush1.bf16.msra.mxu0 %v1744
    %2480 = vmatprep.subr.bf16.mxu0 %v1749
    %2481 = vmatpush1.bf16.msra.mxu0 %v1748
    %2482 = vmatprep.subr.bf16.mxu0 %v1753
    %2483 = vmatpush1.bf16.msra.mxu0 %v1752
    %2484 = vmatprep.subr.bf16.mxu0 %v1757
    %2485 = vmatpush1.bf16.msra.mxu0 %v1756
    %2486 = vmatprep.subr.bf16.mxu0 0
    %2487 = vmatpush1.bf16.msra.mxu0 0
    %2488 = vmatprep.subr.bf16.mxu0 0
    %2489 = vmatpush1.bf16.msra.mxu0 0
    %2490 = vmatprep.subr.bf16.mxu0 0
    %2491 = vmatpush1.bf16.msra.mxu0 0
    %2492 = vmatprep.subr.bf16.mxu0 0
    %2493 = vmatpush1.bf16.msra.mxu0 0
    %2494 = vmatprep.subr.bf16.mxu0 0
    %2495 = vmatpush1.bf16.msra.mxu0 0
    %2496 = vmatprep.subr.bf16.mxu0 0
    %2497 = vmatpush1.bf16.msra.mxu0 0
    %2498 = vmatprep.subr.bf16.mxu0 0
    %2499 = vmatpush1.bf16.msra.mxu0 0
    %2500 = vmatprep.subr.bf16.mxu0 0
    %2501 = vmatpush1.bf16.msra.mxu0 0
    %2502 = vmatprep.mubr.bf16.mxu0 0
    %2503 = vmatmul.mubr.bf16.gmra.mrb[0].mxu0 %v2469
    %v2504 = vpop.f32.mrb[0].mxu0
    %v2505 = vadd.f32 0.0, %v2504
    %v2506 = vpop.f32.mrb[0].mxu0
    %v2507 = vadd.f32 0.0, %v2506
    %v2508 = vpop.f32.mrb[0].mxu0
    %v2509 = vadd.f32 0.0, %v2508
    %v2510 = vpop.f32.mrb[0].mxu0
    %v2511 = vadd.f32 0.0, %v2510
    %2512 = vdwg.mxu0
    %2513 = vmatprep.subr.bf16.mxu0 %v1731
    %2514 = vmatpush1.bf16.msra.mxu0 %v1730
    %2515 = vmatprep.subr.bf16.mxu0 %v1735
    %2516 = vmatpush1.bf16.msra.mxu0 %v1734
    %2517 = vmatprep.subr.bf16.mxu0 %v1739
    %2518 = vmatpush1.bf16.msra.mxu0 %v1738
    %2519 = vmatprep.subr.bf16.mxu0 %v1743
    %2520 = vmatpush1.bf16.msra.mxu0 %v1742
    %2521 = vmatprep.subr.bf16.mxu0 %v1747
    %2522 = vmatpush1.bf16.msra.mxu0 %v1746
    %2523 = vmatprep.subr.bf16.mxu0 %v1751
    %2524 = vmatpush1.bf16.msra.mxu0 %v1750
    %2525 = vmatprep.subr.bf16.mxu0 %v1755
    %2526 = vmatpush1.bf16.msra.mxu0 %v1754
    %2527 = vmatprep.subr.bf16.mxu0 %v1759
    %2528 = vmatpush1.bf16.msra.mxu0 %v1758
    %2529 = vmatprep.subr.bf16.mxu0 0
    %2530 = vmatpush1.bf16.msra.mxu0 0
    %2531 = vmatprep.subr.bf16.mxu0 0
    %2532 = vmatpush1.bf16.msra.mxu0 0
    %2533 = vmatprep.subr.bf16.mxu0 0
    %2534 = vmatpush1.bf16.msra.mxu0 0
    %2535 = vmatprep.subr.bf16.mxu0 0
    %2536 = vmatpush1.bf16.msra.mxu0 0
    %2537 = vmatprep.subr.bf16.mxu0 0
    %2538 = vmatpush1.bf16.msra.mxu0 0
    %2539 = vmatprep.subr.bf16.mxu0 0
    %2540 = vmatpush1.bf16.msra.mxu0 0
    %2541 = vmatprep.subr.bf16.mxu0 0
    %2542 = vmatpush1.bf16.msra.mxu0 0
    %2543 = vmatprep.subr.bf16.mxu0 0
    %2544 = vmatpush1.bf16.msra.mxu0 0
    %2545 = vmatprep.mubr.bf16.mxu0 0
    %2546 = vmatmul.mubr.bf16.gmra.mrb[0].mxu0 %v2469
    %v2547 = vpop.f32.mrb[0].mxu0
    %v2548 = vadd.f32 0.0, %v2547
    %v2549 = vpop.f32.mrb[0].mxu0
    %v2550 = vadd.f32 0.0, %v2549
    %v2551 = vpop.f32.mrb[0].mxu0
    %v2552 = vadd.f32 0.0, %v2551
    %v2553 = vpop.f32.mrb[0].mxu0
    %v2554 = vadd.f32 0.0, %v2553
    %2555 = vdwg.mxu0
    %s2556 = smul.u32 6, 4
    %s2557 = smul.addr %s2556, 8
    %s2558 = scalar_lea.vmem [#allocation2], %s2557
    %v2559 = vld [vmem:[%s2558] sm:$0xff]
    %v2560 = vld [vmem:[%s2558 + $0x8] sm:$0xff]
    %v2561 = vld [vmem:[%s2558 + $0x10] sm:$0xff]
    %v2562 = vld [vmem:[%s2558 + $0x18] sm:$0xff]
    %v2563 = vld [vmem:[%s2558 + $0x20] sm:$0xff]
    %v2564 = vld [vmem:[%s2558 + $0x28] sm:$0xff]
    %v2565 = vld [vmem:[%s2558 + $0x30] sm:$0xff]
    %v2566 = vld [vmem:[%s2558 + $0x38] sm:$0xff]
    %v2567 = vadd.f32 %v2559, %v2332
    %v2568 = vadd.f32 %v2560, %v2334
    %v2569 = vadd.f32 %v2561, %v2375
    %v2570 = vadd.f32 %v2562, %v2377
    %v2571 = vadd.f32 %v2563, %v2336
    %v2572 = vadd.f32 %v2564, %v2338
    %v2573 = vadd.f32 %v2565, %v2379
    %v2574 = vadd.f32 %v2566, %v2381
    %v2575 = vadd.f32 %v2418, %v2505
    %v2576 = vadd.f32 %v2420, %v2507
    %v2577 = vadd.f32 %v2461, %v2548
    %v2578 = vadd.f32 %v2463, %v2550
    %v2579 = vadd.f32 %v2422, %v2509
    %v2580 = vadd.f32 %v2424, %v2511
    %v2581 = vadd.f32 %v2465, %v2552
    %v2582 = vadd.f32 %v2467, %v2554
    %v2583 = vadd.f32 %v2575, %v1330
    %v2584 = vadd.f32 %v2576, %v1334
    %v2585 = vadd.f32 %v2577, %v1338
    %v2586 = vadd.f32 %v2578, %v1342
    %v2587 = vadd.f32 %v2579, %v1330
    %v2588 = vadd.f32 %v2580, %v1334
    %v2589 = vadd.f32 %v2581, %v1338
    %v2590 = vadd.f32 %v2582, %v1342
    %v2591 = vtanh.pop %v2567
    %v2592 = vtanh.pop %v2568
    %v2593 = vtanh.pop %v2569
    %v2594 = vtanh.pop %v2570
    %v2595 = vtanh.pop %v2571
    %v2596 = vtanh.pop %v2572
    %v2597 = vtanh.pop %v2573
    %v2598 = vtanh.pop %v2574
    %v2599 = vmul.f32 %v2591, 0.5
    %v2600 = vmul.f32 %v2595, 0.5
    %v2601 = vadd.f32 %v2599, 0.5
    %v2602 = vadd.f32 %v2600, 0.5
    %v2603 = vmul.f32 %v2592, 0.5
    %v2604 = vmul.f32 %v2596, 0.5
    %v2605 = vadd.f32 %v2603, 0.5
    %v2606 = vadd.f32 %v2604, 0.5
    %v2607 = vmul.f32 %v2594, 0.5
    %v2608 = vmul.f32 %v2598, 0.5
    %v2609 = vadd.f32 %v2607, 0.5
    %v2610 = vadd.f32 %v2608, 0.5
    %v2611 = vmul.f32 %v2605, %v2260
    %v2612 = vmul.f32 %v2606, %v2261
    %v2613 = vmul.f32 %v2601, %v2593
    %v2614 = vmul.f32 %v2602, %v2597
    %v2615 = vadd.f32 %v2611, %v2613
    %v2616 = vadd.f32 %v2612, %v2614
    %v2617 = vtanh.pop %v2615
    %v2618 = vtanh.pop %v2616
    %v2619 = vmul.f32 %v2609, %v2617
    %v2620 = vmul.f32 %v2610, %v2618
    %v2621 = vtanh.pop %v2583
    %v2622 = vtanh.pop %v2584
    %v2623 = vtanh.pop %v2585
    %v2624 = vtanh.pop %v2586
    %v2625 = vtanh.pop %v2587
    %v2626 = vtanh.pop %v2588
    %v2627 = vtanh.pop %v2589
    %v2628 = vtanh.pop %v2590
    %v2629 = vmul.f32 %v2621, 0.5
    %v2630 = vmul.f32 %v2625, 0.5
    %v2631 = vadd.f32 %v2629, 0.5
    %v2632 = vadd.f32 %v2630, 0.5
    %v2633 = vmul.f32 %v2622, 0.5
    %v2634 = vmul.f32 %v2626, 0.5
    %v2635 = vadd.f32 %v2633, 0.5
    %v2636 = vadd.f32 %v2634, 0.5
    %v2637 = vmul.f32 %v2624, 0.5
    %v2638 = vmul.f32 %v2628, 0.5
    %v2639 = vadd.f32 %v2637, 0.5
    %v2640 = vadd.f32 %v2638, 0.5
    %v2641 = vmul.f32 %v2635, %v2290
    %v2642 = vmul.f32 %v2636, %v2291
    %v2643 = vmul.f32 %v2631, %v2623
    %v2644 = vmul.f32 %v2632, %v2627
    %v2645 = vadd.f32 %v2641, %v2643
    %v2646 = vadd.f32 %v2642, %v2644
    %v2647 = vtanh.pop %v2645
    %v2648 = vtanh.pop %v2646
    %v2649 = vmul.f32 %v2639, %v2647
    %v2650 = vmul.f32 %v2640, %v2648
    %v2651 = vpack.c.bf16 %v2620, %v2619
    %2652 = vmatprep.subr.bf16.mxu0 %v1351
    %2653 = vmatpush1.bf16.msra.mxu0 %v1350
    %2654 = vmatprep.subr.bf16.mxu0 %v1359
    %2655 = vmatpush1.bf16.msra.mxu0 %v1358
    %2656 = vmatprep.subr.bf16.mxu0 %v1367
    %2657 = vmatpush1.bf16.msra.mxu0 %v1366
    %2658 = vmatprep.subr.bf16.mxu0 %v1375
    %2659 = vmatpush1.bf16.msra.mxu0 %v1374
    %2660 = vmatprep.subr.bf16.mxu0 %v1383
    %2661 = vmatpush1.bf16.msra.mxu0 %v1382
    %2662 = vmatprep.subr.bf16.mxu0 %v1391
    %2663 = vmatpush1.bf16.msra.mxu0 %v1390
    %2664 = vmatprep.subr.bf16.mxu0 %v1399
    %2665 = vmatpush1.bf16.msra.mxu0 %v1398
    %2666 = vmatprep.subr.bf16.mxu0 %v1407
    %2667 = vmatpush1.bf16.msra.mxu0 %v1406
    %2668 = vmatprep.subr.bf16.mxu0 0
    %2669 = vmatpush1.bf16.msra.mxu0 0
    %2670 = vmatprep.subr.bf16.mxu0 0
    %2671 = vmatpush1.bf16.msra.mxu0 0
    %2672 = vmatprep.subr.bf16.mxu0 0
    %2673 = vmatpush1.bf16.msra.mxu0 0
    %2674 = vmatprep.subr.bf16.mxu0 0
    %2675 = vmatpush1.bf16.msra.mxu0 0
    %2676 = vmatprep.subr.bf16.mxu0 0
    %2677 = vmatpush1.bf16.msra.mxu0 0
    %2678 = vmatprep.subr.bf16.mxu0 0
    %2679 = vmatpush1.bf16.msra.mxu0 0
    %2680 = vmatprep.subr.bf16.mxu0 0
    %2681 = vmatpush1.bf16.msra.mxu0 0
    %2682 = vmatprep.subr.bf16.mxu0 0
    %2683 = vmatpush1.bf16.msra.mxu0 0
    %2684 = vmatprep.mubr.bf16.mxu0 0
    %2685 = vmatmul.mubr.bf16.gmra.mrb[0].mxu0 %v2651
    %v2686 = vpop.f32.mrb[0].mxu0
    %v2687 = vadd.f32 0.0, %v2686
    %v2688 = vpop.f32.mrb[0].mxu0
    %v2689 = vadd.f32 0.0, %v2688
    %v2690 = vpop.f32.mrb[0].mxu0
    %v2691 = vadd.f32 0.0, %v2690
    %v2692 = vpop.f32.mrb[0].mxu0
    %v2693 = vadd.f32 0.0, %v2692
    %2694 = vdwg.mxu0
    %2695 = vmatprep.subr.bf16.mxu0 %v1353
    %2696 = vmatpush1.bf16.msra.mxu0 %v1352
    %2697 = vmatprep.subr.bf16.mxu0 %v1361
    %2698 = vmatpush1.bf16.msra.mxu0 %v1360
    %2699 = vmatprep.subr.bf16.mxu0 %v1369
    %2700 = vmatpush1.bf16.msra.mxu0 %v1368
    %2701 = vmatprep.subr.bf16.mxu0 %v1377
    %2702 = vmatpush1.bf16.msra.mxu0 %v1376
    %2703 = vmatprep.subr.bf16.mxu0 %v1385
    %2704 = vmatpush1.bf16.msra.mxu0 %v1384
    %2705 = vmatprep.subr.bf16.mxu0 %v1393
    %2706 = vmatpush1.bf16.msra.mxu0 %v1392
    %2707 = vmatprep.subr.bf16.mxu0 %v1401
    %2708 = vmatpush1.bf16.msra.mxu0 %v1400
    %2709 = vmatprep.subr.bf16.mxu0 %v1409
    %2710 = vmatpush1.bf16.msra.mxu0 %v1408
    %2711 = vmatprep.subr.bf16.mxu0 0
    %2712 = vmatpush1.bf16.msra.mxu0 0
    %2713 = vmatprep.subr.bf16.mxu0 0
    %2714 = vmatpush1.bf16.msra.mxu0 0
    %2715 = vmatprep.subr.bf16.mxu0 0
    %2716 = vmatpush1.bf16.msra.mxu0 0
    %2717 = vmatprep.subr.bf16.mxu0 0
    %2718 = vmatpush1.bf16.msra.mxu0 0
    %2719 = vmatprep.subr.bf16.mxu0 0
    %2720 = vmatpush1.bf16.msra.mxu0 0
    %2721 = vmatprep.subr.bf16.mxu0 0
    %2722 = vmatpush1.bf16.msra.mxu0 0
    %2723 = vmatprep.subr.bf16.mxu0 0
    %2724 = vmatpush1.bf16.msra.mxu0 0
    %2725 = vmatprep.subr.bf16.mxu0 0
    %2726 = vmatpush1.bf16.msra.mxu0 0
    %2727 = vmatprep.mubr.bf16.mxu0 0
    %2728 = vmatmul.mubr.bf16.gmra.mrb[0].mxu0 %v2651
    %v2729 = vpop.f32.mrb[0].mxu0
    %v2730 = vadd.f32 0.0, %v2729
    %v2731 = vpop.f32.mrb[0].mxu0
    %v2732 = vadd.f32 0.0, %v2731
    %v2733 = vpop.f32.mrb[0].mxu0
    %v2734 = vadd.f32 0.0, %v2733
    %v2735 = vpop.f32.mrb[0].mxu0
    %v2736 = vadd.f32 0.0, %v2735
    %2737 = vdwg.mxu0
    %2738 = vmatprep.subr.bf16.mxu0 %v1355
    %2739 = vmatpush1.bf16.msra.mxu0 %v1354
    %2740 = vmatprep.subr.bf16.mxu0 %v1363
    %2741 = vmatpush1.bf16.msra.mxu0 %v1362
    %2742 = vmatprep.subr.bf16.mxu0 %v1371
    %2743 = vmatpush1.bf16.msra.mxu0 %v1370
    %2744 = vmatprep.subr.bf16.mxu0 %v1379
    %2745 = vmatpush1.bf16.msra.mxu0 %v1378
    %2746 = vmatprep.subr.bf16.mxu0 %v1387
    %2747 = vmatpush1.bf16.msra.mxu0 %v1386
    %2748 = vmatprep.subr.bf16.mxu0 %v1395
    %2749 = vmatpush1.bf16.msra.mxu0 %v1394
    %2750 = vmatprep.subr.bf16.mxu0 %v1403
    %2751 = vmatpush1.bf16.msra.mxu0 %v1402
    %2752 = vmatprep.subr.bf16.mxu0 %v1411
    %2753 = vmatpush1.bf16.msra.mxu0 %v1410
    %2754 = vmatprep.subr.bf16.mxu0 0
    %2755 = vmatpush1.bf16.msra.mxu0 0
    %2756 = vmatprep.subr.bf16.mxu0 0
    %2757 = vmatpush1.bf16.msra.mxu0 0
    %2758 = vmatprep.subr.bf16.mxu0 0
    %2759 = vmatpush1.bf16.msra.mxu0 0
    %2760 = vmatprep.subr.bf16.mxu0 0
    %2761 = vmatpush1.bf16.msra.mxu0 0
    %2762 = vmatprep.subr.bf16.mxu0 0
    %2763 = vmatpush1.bf16.msra.mxu0 0
    %2764 = vmatprep.subr.bf16.mxu0 0
    %2765 = vmatpush1.bf16.msra.mxu0 0
    %2766 = vmatprep.subr.bf16.mxu0 0
    %2767 = vmatpush1.bf16.msra.mxu0 0
    %2768 = vmatprep.subr.bf16.mxu0 0
    %2769 = vmatpush1.bf16.msra.mxu0 0
    %2770 = vmatprep.mubr.bf16.mxu0 0
    %2771 = vmatmul.mubr.bf16.gmra.mrb[0].mxu0 %v2651
    %v2772 = vpop.f32.mrb[0].mxu0
    %v2773 = vadd.f32 0.0, %v2772
    %v2774 = vpop.f32.mrb[0].mxu0
    %v2775 = vadd.f32 0.0, %v2774
    %v2776 = vpop.f32.mrb[0].mxu0
    %v2777 = vadd.f32 0.0, %v2776
    %v2778 = vpop.f32.mrb[0].mxu0
    %v2779 = vadd.f32 0.0, %v2778
    %2780 = vdwg.mxu0
    %2781 = vmatprep.subr.bf16.mxu0 %v1357
    %2782 = vmatpush1.bf16.msra.mxu0 %v1356
    %2783 = vmatprep.subr.bf16.mxu0 %v1365
    %2784 = vmatpush1.bf16.msra.mxu0 %v1364
    %2785 = vmatprep.subr.bf16.mxu0 %v1373
    %2786 = vmatpush1.bf16.msra.mxu0 %v1372
    %2787 = vmatprep.subr.bf16.mxu0 %v1381
    %2788 = vmatpush1.bf16.msra.mxu0 %v1380
    %2789 = vmatprep.subr.bf16.mxu0 %v1389
    %2790 = vmatpush1.bf16.msra.mxu0 %v1388
    %2791 = vmatprep.subr.bf16.mxu0 %v1397
    %2792 = vmatpush1.bf16.msra.mxu0 %v1396
    %2793 = vmatprep.subr.bf16.mxu0 %v1405
    %2794 = vmatpush1.bf16.msra.mxu0 %v1404
    %2795 = vmatprep.subr.bf16.mxu0 %v1413
    %2796 = vmatpush1.bf16.msra.mxu0 %v1412
    %2797 = vmatprep.subr.bf16.mxu0 0
    %2798 = vmatpush1.bf16.msra.mxu0 0
    %2799 = vmatprep.subr.bf16.mxu0 0
    %2800 = vmatpush1.bf16.msra.mxu0 0
    %2801 = vmatprep.subr.bf16.mxu0 0
    %2802 = vmatpush1.bf16.msra.mxu0 0
    %2803 = vmatprep.subr.bf16.mxu0 0
    %2804 = vmatpush1.bf16.msra.mxu0 0
    %2805 = vmatprep.subr.bf16.mxu0 0
    %2806 = vmatpush1.bf16.msra.mxu0 0
    %2807 = vmatprep.subr.bf16.mxu0 0
    %2808 = vmatpush1.bf16.msra.mxu0 0
    %2809 = vmatprep.subr.bf16.mxu0 0
    %2810 = vmatpush1.bf16.msra.mxu0 0
    %2811 = vmatprep.subr.bf16.mxu0 0
    %2812 = vmatpush1.bf16.msra.mxu0 0
    %2813 = vmatprep.mubr.bf16.mxu0 0
    %2814 = vmatmul.mubr.bf16.gmra.mrb[0].mxu0 %v2651
    %v2815 = vpop.f32.mrb[0].mxu0
    %v2816 = vadd.f32 0.0, %v2815
    %v2817 = vpop.f32.mrb[0].mxu0
    %v2818 = vadd.f32 0.0, %v2817
    %v2819 = vpop.f32.mrb[0].mxu0
    %v2820 = vadd.f32 0.0, %v2819
    %v2821 = vpop.f32.mrb[0].mxu0
    %v2822 = vadd.f32 0.0, %v2821
    %2823 = vdwg.mxu0
    %v2824 = vpack.c.bf16 %v2650, %v2649
    %2825 = vmatprep.subr.bf16.mxu0 %v1729
    %2826 = vmatpush1.bf16.msra.mxu0 %v1728
    %2827 = vmatprep.subr.bf16.mxu0 %v1733
    %2828 = vmatpush1.bf16.msra.mxu0 %v1732
    %2829 = vmatprep.subr.bf16.mxu0 %v1737
    %2830 = vmatpush1.bf16.msra.mxu0 %v1736
    %2831 = vmatprep.subr.bf16.mxu0 %v1741
    %2832 = vmatpush1.bf16.msra.mxu0 %v1740
    %2833 = vmatprep.subr.bf16.mxu0 %v1745
    %2834 = vmatpush1.bf16.msra.mxu0 %v1744
    %2835 = vmatprep.subr.bf16.mxu0 %v1749
    %2836 = vmatpush1.bf16.msra.mxu0 %v1748
    %2837 = vmatprep.subr.bf16.mxu0 %v1753
    %2838 = vmatpush1.bf16.msra.mxu0 %v1752
    %2839 = vmatprep.subr.bf16.mxu0 %v1757
    %2840 = vmatpush1.bf16.msra.mxu0 %v1756
    %2841 = vmatprep.subr.bf16.mxu0 0
    %2842 = vmatpush1.bf16.msra.mxu0 0
    %2843 = vmatprep.subr.bf16.mxu0 0
    %2844 = vmatpush1.bf16.msra.mxu0 0
    %2845 = vmatprep.subr.bf16.mxu0 0
    %2846 = vmatpush1.bf16.msra.mxu0 0
    %2847 = vmatprep.subr.bf16.mxu0 0
    %2848 = vmatpush1.bf16.msra.mxu0 0
    %2849 = vmatprep.subr.bf16.mxu0 0
    %2850 = vmatpush1.bf16.msra.mxu0 0
    %2851 = vmatprep.subr.bf16.mxu0 0
    %2852 = vmatpush1.bf16.msra.mxu0 0
    %2853 = vmatprep.subr.bf16.mxu0 0
    %2854 = vmatpush1.bf16.msra.mxu0 0
    %2855 = vmatprep.subr.bf16.mxu0 0
    %2856 = vmatpush1.bf16.msra.mxu0 0
    %2857 = vmatprep.mubr.bf16.mxu0 0
    %2858 = vmatmul.mubr.bf16.gmra.mrb[0].mxu0 %v2824
    %v2859 = vpop.f32.mrb[0].mxu0
    %v2860 = vadd.f32 0.0, %v2859
    %v2861 = vpop.f32.mrb[0].mxu0
    %v2862 = vadd.f32 0.0, %v2861
    %v2863 = vpop.f32.mrb[0].mxu0
    %v2864 = vadd.f32 0.0, %v2863
    %v2865 = vpop.f32.mrb[0].mxu0
    %v2866 = vadd.f32 0.0, %v2865
    %2867 = vdwg.mxu0
    %2868 = vmatprep.subr.bf16.mxu0 %v1731
    %2869 = vmatpush1.bf16.msra.mxu0 %v1730
    %2870 = vmatprep.subr.bf16.mxu0 %v1735
    %2871 = vmatpush1.bf16.msra.mxu0 %v1734
    %2872 = vmatprep.subr.bf16.mxu0 %v1739
    %2873 = vmatpush1.bf16.msra.mxu0 %v1738
    %2874 = vmatprep.subr.bf16.mxu0 %v1743
    %2875 = vmatpush1.bf16.msra.mxu0 %v1742
    %2876 = vmatprep.subr.bf16.mxu0 %v1747
    %2877 = vmatpush1.bf16.msra.mxu0 %v1746
    %2878 = vmatprep.subr.bf16.mxu0 %v1751
    %2879 = vmatpush1.bf16.msra.mxu0 %v1750
    %2880 = vmatprep.subr.bf16.mxu0 %v1755
    %2881 = vmatpush1.bf16.msra.mxu0 %v1754
    %2882 = vmatprep.subr.bf16.mxu0 %v1759
    %2883 = vmatpush1.bf16.msra.mxu0 %v1758
    %2884 = vmatprep.subr.bf16.mxu0 0
    %2885 = vmatpush1.bf16.msra.mxu0 0
    %2886 = vmatprep.subr.bf16.mxu0 0
    %2887 = vmatpush1.bf16.msra.mxu0 0
    %2888 = vmatprep.subr.bf16.mxu0 0
    %2889 = vmatpush1.bf16.msra.mxu0 0
    %2890 = vmatprep.subr.bf16.mxu0 0
    %2891 = vmatpush1.bf16.msra.mxu0 0
    %2892 = vmatprep.subr.bf16.mxu0 0
    %2893 = vmatpush1.bf16.msra.mxu0 0
    %2894 = vmatprep.subr.bf16.mxu0 0
    %2895 = vmatpush1.bf16.msra.mxu0 0
    %2896 = vmatprep.subr.bf16.mxu0 0
    %2897 = vmatpush1.bf16.msra.mxu0 0
    %2898 = vmatprep.subr.bf16.mxu0 0
    %2899 = vmatpush1.bf16.msra.mxu0 0
    %2900 = vmatprep.mubr.bf16.mxu0 0
    %2901 = vmatmul.mubr.bf16.gmra.mrb[0].mxu0 %v2824
    %v2902 = vpop.f32.mrb[0].mxu0
    %v2903 = vadd.f32 0.0, %v2902
    %v2904 = vpop.f32.mrb[0].mxu0
    %v2905 = vadd.f32 0.0, %v2904
    %v2906 = vpop.f32.mrb[0].mxu0
    %v2907 = vadd.f32 0.0, %v2906
    %v2908 = vpop.f32.mrb[0].mxu0
    %v2909 = vadd.f32 0.0, %v2908
    %2910 = vdwg.mxu0
    %s2911 = smul.u32 8, 4
    %s2912 = smul.addr %s2911, 8
    %s2913 = scalar_lea.vmem [#allocation2], %s2912
    %v2914 = vld [vmem:[%s2913] sm:$0xff]
    %v2915 = vld [vmem:[%s2913 + $0x8] sm:$0xff]
    %v2916 = vld [vmem:[%s2913 + $0x10] sm:$0xff]
    %v2917 = vld [vmem:[%s2913 + $0x18] sm:$0xff]
    %v2918 = vld [vmem:[%s2913 + $0x20] sm:$0xff]
    %v2919 = vld [vmem:[%s2913 + $0x28] sm:$0xff]
    %v2920 = vld [vmem:[%s2913 + $0x30] sm:$0xff]
    %v2921 = vld [vmem:[%s2913 + $0x38] sm:$0xff]
    %v2922 = vadd.f32 %v2914, %v2687
    %v2923 = vadd.f32 %v2915, %v2689
    %v2924 = vadd.f32 %v2916, %v2730
    %v2925 = vadd.f32 %v2917, %v2732
    %v2926 = vadd.f32 %v2918, %v2691
    %v2927 = vadd.f32 %v2919, %v2693
    %v2928 = vadd.f32 %v2920, %v2734
    %v2929 = vadd.f32 %v2921, %v2736
    %v2930 = vadd.f32 %v2773, %v2860
    %v2931 = vadd.f32 %v2775, %v2862
    %v2932 = vadd.f32 %v2816, %v2903
    %v2933 = vadd.f32 %v2818, %v2905
    %v2934 = vadd.f32 %v2777, %v2864
    %v2935 = vadd.f32 %v2779, %v2866
    %v2936 = vadd.f32 %v2820, %v2907
    %v2937 = vadd.f32 %v2822, %v2909
    %v2938 = vadd.f32 %v2930, %v1330
    %v2939 = vadd.f32 %v2931, %v1334
    %v2940 = vadd.f32 %v2932, %v1338
    %v2941 = vadd.f32 %v2933, %v1342
    %v2942 = vadd.f32 %v2934, %v1330
    %v2943 = vadd.f32 %v2935, %v1334
    %v2944 = vadd.f32 %v2936, %v1338
    %v2945 = vadd.f32 %v2937, %v1342
    %v2946 = vtanh.pop %v2922
    %v2947 = vtanh.pop %v2923
    %v2948 = vtanh.pop %v2924
    %v2949 = vtanh.pop %v2925
    %v2950 = vtanh.pop %v2926
    %v2951 = vtanh.pop %v2927
    %v2952 = vtanh.pop %v2928
    %v2953 = vtanh.pop %v2929
    %v2954 = vmul.f32 %v2946, 0.5
    %v2955 = vmul.f32 %v2950, 0.5
    %v2956 = vadd.f32 %v2954, 0.5
    %v2957 = vadd.f32 %v2955, 0.5
    %v2958 = vmul.f32 %v2947, 0.5
    %v2959 = vmul.f32 %v2951, 0.5
    %v2960 = vadd.f32 %v2958, 0.5
    %v2961 = vadd.f32 %v2959, 0.5
    %v2962 = vmul.f32 %v2949, 0.5
    %v2963 = vmul.f32 %v2953, 0.5
    %v2964 = vadd.f32 %v2962, 0.5
    %v2965 = vadd.f32 %v2963, 0.5
    %v2966 = vmul.f32 %v2960, %v2615
    %v2967 = vmul.f32 %v2961, %v2616
    %v2968 = vmul.f32 %v2956, %v2948
    %v2969 = vmul.f32 %v2957, %v2952
    %v2970 = vadd.f32 %v2966, %v2968
    %v2971 = vadd.f32 %v2967, %v2969
    %v2972 = vtanh.pop %v2970
    %v2973 = vtanh.pop %v2971
    %v2974 = vmul.f32 %v2964, %v2972
    %v2975 = vmul.f32 %v2965, %v2973
    %v2976 = vtanh.pop %v2938
    %v2977 = vtanh.pop %v2939
    %v2978 = vtanh.pop %v2940
    %v2979 = vtanh.pop %v2941
    %v2980 = vtanh.pop %v2942
    %v2981 = vtanh.pop %v2943
    %v2982 = vtanh.pop %v2944
    %v2983 = vtanh.pop %v2945
    %v2984 = vmul.f32 %v2976, 0.5
    %v2985 = vmul.f32 %v2980, 0.5
    %v2986 = vadd.f32 %v2984, 0.5
    %v2987 = vadd.f32 %v2985, 0.5
    %v2988 = vmul.f32 %v2977, 0.5
    %v2989 = vmul.f32 %v2981, 0.5
    %v2990 = vadd.f32 %v2988, 0.5
    %v2991 = vadd.f32 %v2989, 0.5
    %v2992 = vmul.f32 %v2979, 0.5
    %v2993 = vmul.f32 %v2983, 0.5
    %v2994 = vadd.f32 %v2992, 0.5
    %v2995 = vadd.f32 %v2993, 0.5
    %v2996 = vmul.f32 %v2990, %v2645
    %v2997 = vmul.f32 %v2991, %v2646
    %v2998 = vmul.f32 %v2986, %v2978
    %v2999 = vmul.f32 %v2987, %v2982
    %v3000 = vadd.f32 %v2996, %v2998
    %v3001 = vadd.f32 %v2997, %v2999
    %v3002 = vtanh.pop %v3000
    %v3003 = vtanh.pop %v3001
    %v3004 = vmul.f32 %v2994, %v3002
    %v3005 = vmul.f32 %v2995, %v3003
    %v3006 = vpack.c.bf16 %v2975, %v2974
    %3007 = vmatprep.subr.bf16.mxu0 %v1351
    %3008 = vmatpush1.bf16.msra.mxu0 %v1350
    %3009 = vmatprep.subr.bf16.mxu0 %v1359
    %3010 = vmatpush1.bf16.msra.mxu0 %v1358
    %3011 = vmatprep.subr.bf16.mxu0 %v1367
    %3012 = vmatpush1.bf16.msra.mxu0 %v1366
    %3013 = vmatprep.subr.bf16.mxu0 %v1375
    %3014 = vmatpush1.bf16.msra.mxu0 %v1374
    %3015 = vmatprep.subr.bf16.mxu0 %v1383
    %3016 = vmatpush1.bf16.msra.mxu0 %v1382
    %3017 = vmatprep.subr.bf16.mxu0 %v1391
    %3018 = vmatpush1.bf16.msra.mxu0 %v1390
    %3019 = vmatprep.subr.bf16.mxu0 %v1399
    %3020 = vmatpush1.bf16.msra.mxu0 %v1398
    %3021 = vmatprep.subr.bf16.mxu0 %v1407
    %3022 = vmatpush1.bf16.msra.mxu0 %v1406
    %3023 = vmatprep.subr.bf16.mxu0 0
    %3024 = vmatpush1.bf16.msra.mxu0 0
    %3025 = vmatprep.subr.bf16.mxu0 0
    %3026 = vmatpush1.bf16.msra.mxu0 0
    %3027 = vmatprep.subr.bf16.mxu0 0
    %3028 = vmatpush1.bf16.msra.mxu0 0
    %3029 = vmatprep.subr.bf16.mxu0 0
    %3030 = vmatpush1.bf16.msra.mxu0 0
    %3031 = vmatprep.subr.bf16.mxu0 0
    %3032 = vmatpush1.bf16.msra.mxu0 0
    %3033 = vmatprep.subr.bf16.mxu0 0
    %3034 = vmatpush1.bf16.msra.mxu0 0
    %3035 = vmatprep.subr.bf16.mxu0 0
    %3036 = vmatpush1.bf16.msra.mxu0 0
    %3037 = vmatprep.subr.bf16.mxu0 0
    %3038 = vmatpush1.bf16.msra.mxu0 0
    %3039 = vmatprep.mubr.bf16.mxu0 0
    %3040 = vmatmul.mubr.bf16.gmra.mrb[0].mxu0 %v3006
    %v3041 = vpop.f32.mrb[0].mxu0
    %v3042 = vadd.f32 0.0, %v3041
    %v3043 = vpop.f32.mrb[0].mxu0
    %v3044 = vadd.f32 0.0, %v3043
    %v3045 = vpop.f32.mrb[0].mxu0
    %v3046 = vadd.f32 0.0, %v3045
    %v3047 = vpop.f32.mrb[0].mxu0
    %v3048 = vadd.f32 0.0, %v3047
    %3049 = vdwg.mxu0
    %3050 = vmatprep.subr.bf16.mxu0 %v1353
    %3051 = vmatpush1.bf16.msra.mxu0 %v1352
    %3052 = vmatprep.subr.bf16.mxu0 %v1361
    %3053 = vmatpush1.bf16.msra.mxu0 %v1360
    %3054 = vmatprep.subr.bf16.mxu0 %v1369
    %3055 = vmatpush1.bf16.msra.mxu0 %v1368
    %3056 = vmatprep.subr.bf16.mxu0 %v1377
    %3057 = vmatpush1.bf16.msra.mxu0 %v1376
    %3058 = vmatprep.subr.bf16.mxu0 %v1385
    %3059 = vmatpush1.bf16.msra.mxu0 %v1384
    %3060 = vmatprep.subr.bf16.mxu0 %v1393
    %3061 = vmatpush1.bf16.msra.mxu0 %v1392
    %3062 = vmatprep.subr.bf16.mxu0 %v1401
    %3063 = vmatpush1.bf16.msra.mxu0 %v1400
    %3064 = vmatprep.subr.bf16.mxu0 %v1409
    %3065 = vmatpush1.bf16.msra.mxu0 %v1408
    %3066 = vmatprep.subr.bf16.mxu0 0
    %3067 = vmatpush1.bf16.msra.mxu0 0
    %3068 = vmatprep.subr.bf16.mxu0 0
    %3069 = vmatpush1.bf16.msra.mxu0 0
    %3070 = vmatprep.subr.bf16.mxu0 0
    %3071 = vmatpush1.bf16.msra.mxu0 0
    %3072 = vmatprep.subr.bf16.mxu0 0
    %3073 = vmatpush1.bf16.msra.mxu0 0
    %3074 = vmatprep.subr.bf16.mxu0 0
    %3075 = vmatpush1.bf16.msra.mxu0 0
    %3076 = vmatprep.subr.bf16.mxu0 0
    %3077 = vmatpush1.bf16.msra.mxu0 0
    %3078 = vmatprep.subr.bf16.mxu0 0
    %3079 = vmatpush1.bf16.msra.mxu0 0
    %3080 = vmatprep.subr.bf16.mxu0 0
    %3081 = vmatpush1.bf16.msra.mxu0 0
    %3082 = vmatprep.mubr.bf16.mxu0 0
    %3083 = vmatmul.mubr.bf16.gmra.mrb[0].mxu0 %v3006
    %v3084 = vpop.f32.mrb[0].mxu0
    %v3085 = vadd.f32 0.0, %v3084
    %v3086 = vpop.f32.mrb[0].mxu0
    %v3087 = vadd.f32 0.0, %v3086
    %v3088 = vpop.f32.mrb[0].mxu0
    %v3089 = vadd.f32 0.0, %v3088
    %v3090 = vpop.f32.mrb[0].mxu0
    %v3091 = vadd.f32 0.0, %v3090
    %3092 = vdwg.mxu0
    %3093 = vmatprep.subr.bf16.mxu0 %v1355
    %3094 = vmatpush1.bf16.msra.mxu0 %v1354
    %3095 = vmatprep.subr.bf16.mxu0 %v1363
    %3096 = vmatpush1.bf16.msra.mxu0 %v1362
    %3097 = vmatprep.subr.bf16.mxu0 %v1371
    %3098 = vmatpush1.bf16.msra.mxu0 %v1370
    %3099 = vmatprep.subr.bf16.mxu0 %v1379
    %3100 = vmatpush1.bf16.msra.mxu0 %v1378
    %3101 = vmatprep.subr.bf16.mxu0 %v1387
    %3102 = vmatpush1.bf16.msra.mxu0 %v1386
    %3103 = vmatprep.subr.bf16.mxu0 %v1395
    %3104 = vmatpush1.bf16.msra.mxu0 %v1394
    %3105 = vmatprep.subr.bf16.mxu0 %v1403
    %3106 = vmatpush1.bf16.msra.mxu0 %v1402
    %3107 = vmatprep.subr.bf16.mxu0 %v1411
    %3108 = vmatpush1.bf16.msra.mxu0 %v1410
    %3109 = vmatprep.subr.bf16.mxu0 0
    %3110 = vmatpush1.bf16.msra.mxu0 0
    %3111 = vmatprep.subr.bf16.mxu0 0
    %3112 = vmatpush1.bf16.msra.mxu0 0
    %3113 = vmatprep.subr.bf16.mxu0 0
    %3114 = vmatpush1.bf16.msra.mxu0 0
    %3115 = vmatprep.subr.bf16.mxu0 0
    %3116 = vmatpush1.bf16.msra.mxu0 0
    %3117 = vmatprep.subr.bf16.mxu0 0
    %3118 = vmatpush1.bf16.msra.mxu0 0
    %3119 = vmatprep.subr.bf16.mxu0 0
    %3120 = vmatpush1.bf16.msra.mxu0 0
    %3121 = vmatprep.subr.bf16.mxu0 0
    %3122 = vmatpush1.bf16.msra.mxu0 0
    %3123 = vmatprep.subr.bf16.mxu0 0
    %3124 = vmatpush1.bf16.msra.mxu0 0
    %3125 = vmatprep.mubr.bf16.mxu0 0
    %3126 = vmatmul.mubr.bf16.gmra.mrb[0].mxu0 %v3006
    %v3127 = vpop.f32.mrb[0].mxu0
    %v3128 = vadd.f32 0.0, %v3127
    %v3129 = vpop.f32.mrb[0].mxu0
    %v3130 = vadd.f32 0.0, %v3129
    %v3131 = vpop.f32.mrb[0].mxu0
    %v3132 = vadd.f32 0.0, %v3131
    %v3133 = vpop.f32.mrb[0].mxu0
    %v3134 = vadd.f32 0.0, %v3133
    %3135 = vdwg.mxu0
    %3136 = vmatprep.subr.bf16.mxu0 %v1357
    %3137 = vmatpush1.bf16.msra.mxu0 %v1356
    %3138 = vmatprep.subr.bf16.mxu0 %v1365
    %3139 = vmatpush1.bf16.msra.mxu0 %v1364
    %3140 = vmatprep.subr.bf16.mxu0 %v1373
    %3141 = vmatpush1.bf16.msra.mxu0 %v1372
    %3142 = vmatprep.subr.bf16.mxu0 %v1381
    %3143 = vmatpush1.bf16.msra.mxu0 %v1380
    %3144 = vmatprep.subr.bf16.mxu0 %v1389
    %3145 = vmatpush1.bf16.msra.mxu0 %v1388
    %3146 = vmatprep.subr.bf16.mxu0 %v1397
    %3147 = vmatpush1.bf16.msra.mxu0 %v1396
    %3148 = vmatprep.subr.bf16.mxu0 %v1405
    %3149 = vmatpush1.bf16.msra.mxu0 %v1404
    %3150 = vmatprep.subr.bf16.mxu0 %v1413
    %3151 = vmatpush1.bf16.msra.mxu0 %v1412
    %3152 = vmatprep.subr.bf16.mxu0 0
    %3153 = vmatpush1.bf16.msra.mxu0 0
    %3154 = vmatprep.subr.bf16.mxu0 0
    %3155 = vmatpush1.bf16.msra.mxu0 0
    %3156 = vmatprep.subr.bf16.mxu0 0
    %3157 = vmatpush1.bf16.msra.mxu0 0
    %3158 = vmatprep.subr.bf16.mxu0 0
    %3159 = vmatpush1.bf16.msra.mxu0 0
    %3160 = vmatprep.subr.bf16.mxu0 0
    %3161 = vmatpush1.bf16.msra.mxu0 0
    %3162 = vmatprep.subr.bf16.mxu0 0
    %3163 = vmatpush1.bf16.msra.mxu0 0
    %3164 = vmatprep.subr.bf16.mxu0 0
    %3165 = vmatpush1.bf16.msra.mxu0 0
    %3166 = vmatprep.subr.bf16.mxu0 0
    %3167 = vmatpush1.bf16.msra.mxu0 0
    %3168 = vmatprep.mubr.bf16.mxu0 0
    %3169 = vmatmul.mubr.bf16.gmra.mrb[0].mxu0 %v3006
    %v3170 = vpop.f32.mrb[0].mxu0
    %v3171 = vadd.f32 0.0, %v3170
    %v3172 = vpop.f32.mrb[0].mxu0
    %v3173 = vadd.f32 0.0, %v3172
    %v3174 = vpop.f32.mrb[0].mxu0
    %v3175 = vadd.f32 0.0, %v3174
    %v3176 = vpop.f32.mrb[0].mxu0
    %v3177 = vadd.f32 0.0, %v3176
    %3178 = vdwg.mxu0
    %v3179 = vpack.c.bf16 %v3005, %v3004
    %3180 = vmatprep.subr.bf16.mxu0 %v1729
    %3181 = vmatpush1.bf16.msra.mxu0 %v1728
    %3182 = vmatprep.subr.bf16.mxu0 %v1733
    %3183 = vmatpush1.bf16.msra.mxu0 %v1732
    %3184 = vmatprep.subr.bf16.mxu0 %v1737
    %3185 = vmatpush1.bf16.msra.mxu0 %v1736
    %3186 = vmatprep.subr.bf16.mxu0 %v1741
    %3187 = vmatpush1.bf16.msra.mxu0 %v1740
    %3188 = vmatprep.subr.bf16.mxu0 %v1745
    %3189 = vmatpush1.bf16.msra.mxu0 %v1744
    %3190 = vmatprep.subr.bf16.mxu0 %v1749
    %3191 = vmatpush1.bf16.msra.mxu0 %v1748
    %3192 = vmatprep.subr.bf16.mxu0 %v1753
    %3193 = vmatpush1.bf16.msra.mxu0 %v1752
    %3194 = vmatprep.subr.bf16.mxu0 %v1757
    %3195 = vmatpush1.bf16.msra.mxu0 %v1756
    %3196 = vmatprep.subr.bf16.mxu0 0
    %3197 = vmatpush1.bf16.msra.mxu0 0
    %3198 = vmatprep.subr.bf16.mxu0 0
    %3199 = vmatpush1.bf16.msra.mxu0 0
    %3200 = vmatprep.subr.bf16.mxu0 0
    %3201 = vmatpush1.bf16.msra.mxu0 0
    %3202 = vmatprep.subr.bf16.mxu0 0
    %3203 = vmatpush1.bf16.msra.mxu0 0
    %3204 = vmatprep.subr.bf16.mxu0 0
    %3205 = vmatpush1.bf16.msra.mxu0 0
    %3206 = vmatprep.subr.bf16.mxu0 0
    %3207 = vmatpush1.bf16.msra.mxu0 0
    %3208 = vmatprep.subr.bf16.mxu0 0
    %3209 = vmatpush1.bf16.msra.mxu0 0
    %3210 = vmatprep.subr.bf16.mxu0 0
    %3211 = vmatpush1.bf16.msra.mxu0 0
    %3212 = vmatprep.mubr.bf16.mxu0 0
    %3213 = vmatmul.mubr.bf16.gmra.mrb[0].mxu0 %v3179
    %v3214 = vpop.f32.mrb[0].mxu0
    %v3215 = vadd.f32 0.0, %v3214
    %v3216 = vpop.f32.mrb[0].mxu0
    %v3217 = vadd.f32 0.0, %v3216
    %v3218 = vpop.f32.mrb[0].mxu0
    %v3219 = vadd.f32 0.0, %v3218
    %v3220 = vpop.f32.mrb[0].mxu0
    %v3221 = vadd.f32 0.0, %v3220
    %3222 = vdwg.mxu0
    %3223 = vmatprep.subr.bf16.mxu0 %v1731
    %3224 = vmatpush1.bf16.msra.mxu0 %v1730
    %3225 = vmatprep.subr.bf16.mxu0 %v1735
    %3226 = vmatpush1.bf16.msra.mxu0 %v1734
    %3227 = vmatprep.subr.bf16.mxu0 %v1739
    %3228 = vmatpush1.bf16.msra.mxu0 %v1738
    %3229 = vmatprep.subr.bf16.mxu0 %v1743
    %3230 = vmatpush1.bf16.msra.mxu0 %v1742
    %3231 = vmatprep.subr.bf16.mxu0 %v1747
    %3232 = vmatpush1.bf16.msra.mxu0 %v1746
    %3233 = vmatprep.subr.bf16.mxu0 %v1751
    %3234 = vmatpush1.bf16.msra.mxu0 %v1750
    %3235 = vmatprep.subr.bf16.mxu0 %v1755
    %3236 = vmatpush1.bf16.msra.mxu0 %v1754
    %3237 = vmatprep.subr.bf16.mxu0 %v1759
    %3238 = vmatpush1.bf16.msra.mxu0 %v1758
    %3239 = vmatprep.subr.bf16.mxu0 0
    %3240 = vmatpush1.bf16.msra.mxu0 0
    %3241 = vmatprep.subr.bf16.mxu0 0
    %3242 = vmatpush1.bf16.msra.mxu0 0
    %3243 = vmatprep.subr.bf16.mxu0 0
    %3244 = vmatpush1.bf16.msra.mxu0 0
    %3245 = vmatprep.subr.bf16.mxu0 0
    %3246 = vmatpush1.bf16.msra.mxu0 0
    %3247 = vmatprep.subr.bf16.mxu0 0
    %3248 = vmatpush1.bf16.msra.mxu0 0
    %3249 = vmatprep.subr.bf16.mxu0 0
    %3250 = vmatpush1.bf16.msra.mxu0 0
    %3251 = vmatprep.subr.bf16.mxu0 0
    %3252 = vmatpush1.bf16.msra.mxu0 0
    %3253 = vmatprep.subr.bf16.mxu0 0
    %3254 = vmatpush1.bf16.msra.mxu0 0
    %3255 = vmatprep.mubr.bf16.mxu0 0
    %3256 = vmatmul.mubr.bf16.gmra.mrb[0].mxu0 %v3179
    %v3257 = vpop.f32.mrb[0].mxu0
    %v3258 = vadd.f32 0.0, %v3257
    %v3259 = vpop.f32.mrb[0].mxu0
    %v3260 = vadd.f32 0.0, %v3259
    %v3261 = vpop.f32.mrb[0].mxu0
    %v3262 = vadd.f32 0.0, %v3261
    %v3263 = vpop.f32.mrb[0].mxu0
    %v3264 = vadd.f32 0.0, %v3263
    %3265 = vdwg.mxu0
    %s3266 = smul.u32 10, 4
    %s3267 = smul.addr %s3266, 8
    %s3268 = scalar_lea.vmem [#allocation2], %s3267
    %v3269 = vld [vmem:[%s3268] sm:$0xff]
    %v3270 = vld [vmem:[%s3268 + $0x8] sm:$0xff]
    %v3271 = vld [vmem:[%s3268 + $0x10] sm:$0xff]
    %v3272 = vld [vmem:[%s3268 + $0x18] sm:$0xff]
    %v3273 = vld [vmem:[%s3268 + $0x20] sm:$0xff]
    %v3274 = vld [vmem:[%s3268 + $0x28] sm:$0xff]
    %v3275 = vld [vmem:[%s3268 + $0x30] sm:$0xff]
    %v3276 = vld [vmem:[%s3268 + $0x38] sm:$0xff]
    %v3277 = vadd.f32 %v3269, %v3042
    %v3278 = vadd.f32 %v3270, %v3044
    %v3279 = vadd.f32 %v3271, %v3085
    %v3280 = vadd.f32 %v3272, %v3087
    %v3281 = vadd.f32 %v3273, %v3046
    %v3282 = vadd.f32 %v3274, %v3048
    %v3283 = vadd.f32 %v3275, %v3089
    %v3284 = vadd.f32 %v3276, %v3091
    %v3285 = vadd.f32 %v3128, %v3215
    %v3286 = vadd.f32 %v3130, %v3217
    %v3287 = vadd.f32 %v3171, %v3258
    %v3288 = vadd.f32 %v3173, %v3260
    %v3289 = vadd.f32 %v3132, %v3219
    %v3290 = vadd.f32 %v3134, %v3221
    %v3291 = vadd.f32 %v3175, %v3262
    %v3292 = vadd.f32 %v3177, %v3264
    %v3293 = vadd.f32 %v3285, %v1330
    %v3294 = vadd.f32 %v3286, %v1334
    %v3295 = vadd.f32 %v3287, %v1338
    %v3296 = vadd.f32 %v3288, %v1342
    %v3297 = vadd.f32 %v3289, %v1330
    %v3298 = vadd.f32 %v3290, %v1334
    %v3299 = vadd.f32 %v3291, %v1338
    %v3300 = vadd.f32 %v3292, %v1342
    %v3301 = vtanh.pop %v3277
    %v3302 = vtanh.pop %v3278
    %v3303 = vtanh.pop %v3279
    %v3304 = vtanh.pop %v3280
    %v3305 = vtanh.pop %v3281
    %v3306 = vtanh.pop %v3282
    %v3307 = vtanh.pop %v3283
    %v3308 = vtanh.pop %v3284
    %v3309 = vmul.f32 %v3301, 0.5
    %v3310 = vmul.f32 %v3305, 0.5
    %v3311 = vadd.f32 %v3309, 0.5
    %v3312 = vadd.f32 %v3310, 0.5
    %v3313 = vmul.f32 %v3302, 0.5
    %v3314 = vmul.f32 %v3306, 0.5
    %v3315 = vadd.f32 %v3313, 0.5
    %v3316 = vadd.f32 %v3314, 0.5
    %v3317 = vmul.f32 %v3304, 0.5
    %v3318 = vmul.f32 %v3308, 0.5
    %v3319 = vadd.f32 %v3317, 0.5
    %v3320 = vadd.f32 %v3318, 0.5
    %v3321 = vmul.f32 %v3315, %v2970
    %v3322 = vmul.f32 %v3316, %v2971
    %v3323 = vmul.f32 %v3311, %v3303
    %v3324 = vmul.f32 %v3312, %v3307
    %v3325 = vadd.f32 %v3321, %v3323
    %v3326 = vadd.f32 %v3322, %v3324
    %v3327 = vtanh.pop %v3325
    %v3328 = vtanh.pop %v3326
    %v3329 = vmul.f32 %v3319, %v3327
    %v3330 = vmul.f32 %v3320, %v3328
    %v3331 = vtanh.pop %v3293
    %v3332 = vtanh.pop %v3294
    %v3333 = vtanh.pop %v3295
    %v3334 = vtanh.pop %v3296
    %v3335 = vtanh.pop %v3297
    %v3336 = vtanh.pop %v3298
    %v3337 = vtanh.pop %v3299
    %v3338 = vtanh.pop %v3300
    %v3339 = vmul.f32 %v3331, 0.5
    %v3340 = vmul.f32 %v3335, 0.5
    %v3341 = vadd.f32 %v3339, 0.5
    %v3342 = vadd.f32 %v3340, 0.5
    %v3343 = vmul.f32 %v3332, 0.5
    %v3344 = vmul.f32 %v3336, 0.5
    %v3345 = vadd.f32 %v3343, 0.5
    %v3346 = vadd.f32 %v3344, 0.5
    %v3347 = vmul.f32 %v3334, 0.5
    %v3348 = vmul.f32 %v3338, 0.5
    %v3349 = vadd.f32 %v3347, 0.5
    %v3350 = vadd.f32 %v3348, 0.5
    %v3351 = vmul.f32 %v3345, %v3000
    %v3352 = vmul.f32 %v3346, %v3001
    %v3353 = vmul.f32 %v3341, %v3333
    %v3354 = vmul.f32 %v3342, %v3337
    %v3355 = vadd.f32 %v3351, %v3353
    %v3356 = vadd.f32 %v3352, %v3354
    %v3357 = vtanh.pop %v3355
    %v3358 = vtanh.pop %v3356
    %v3359 = vmul.f32 %v3349, %v3357
    %v3360 = vmul.f32 %v3350, %v3358
    %v3361 = vpack.c.bf16 %v3330, %v3329
    %3362 = vmatprep.subr.bf16.mxu0 %v1351
    %3363 = vmatpush1.bf16.msra.mxu0 %v1350
    %3364 = vmatprep.subr.bf16.mxu0 %v1359
    %3365 = vmatpush1.bf16.msra.mxu0 %v1358
    %3366 = vmatprep.subr.bf16.mxu0 %v1367
    %3367 = vmatpush1.bf16.msra.mxu0 %v1366
    %3368 = vmatprep.subr.bf16.mxu0 %v1375
    %3369 = vmatpush1.bf16.msra.mxu0 %v1374
    %3370 = vmatprep.subr.bf16.mxu0 %v1383
    %3371 = vmatpush1.bf16.msra.mxu0 %v1382
    %3372 = vmatprep.subr.bf16.mxu0 %v1391
    %3373 = vmatpush1.bf16.msra.mxu0 %v1390
    %3374 = vmatprep.subr.bf16.mxu0 %v1399
    %3375 = vmatpush1.bf16.msra.mxu0 %v1398
    %3376 = vmatprep.subr.bf16.mxu0 %v1407
    %3377 = vmatpush1.bf16.msra.mxu0 %v1406
    %3378 = vmatprep.subr.bf16.mxu0 0
    %3379 = vmatpush1.bf16.msra.mxu0 0
    %3380 = vmatprep.subr.bf16.mxu0 0
    %3381 = vmatpush1.bf16.msra.mxu0 0
    %3382 = vmatprep.subr.bf16.mxu0 0
    %3383 = vmatpush1.bf16.msra.mxu0 0
    %3384 = vmatprep.subr.bf16.mxu0 0
    %3385 = vmatpush1.bf16.msra.mxu0 0
    %3386 = vmatprep.subr.bf16.mxu0 0
    %3387 = vmatpush1.bf16.msra.mxu0 0
    %3388 = vmatprep.subr.bf16.mxu0 0
    %3389 = vmatpush1.bf16.msra.mxu0 0
    %3390 = vmatprep.subr.bf16.mxu0 0
    %3391 = vmatpush1.bf16.msra.mxu0 0
    %3392 = vmatprep.subr.bf16.mxu0 0
    %3393 = vmatpush1.bf16.msra.mxu0 0
    %3394 = vmatprep.mubr.bf16.mxu0 0
    %3395 = vmatmul.mubr.bf16.gmra.mrb[0].mxu0 %v3361
    %v3396 = vpop.f32.mrb[0].mxu0
    %v3397 = vadd.f32 0.0, %v3396
    %v3398 = vpop.f32.mrb[0].mxu0
    %v3399 = vadd.f32 0.0, %v3398
    %v3400 = vpop.f32.mrb[0].mxu0
    %v3401 = vadd.f32 0.0, %v3400
    %v3402 = vpop.f32.mrb[0].mxu0
    %v3403 = vadd.f32 0.0, %v3402
    %3404 = vdwg.mxu0
    %3405 = vmatprep.subr.bf16.mxu0 %v1353
    %3406 = vmatpush1.bf16.msra.mxu0 %v1352
    %3407 = vmatprep.subr.bf16.mxu0 %v1361
    %3408 = vmatpush1.bf16.msra.mxu0 %v1360
    %3409 = vmatprep.subr.bf16.mxu0 %v1369
    %3410 = vmatpush1.bf16.msra.mxu0 %v1368
    %3411 = vmatprep.subr.bf16.mxu0 %v1377
    %3412 = vmatpush1.bf16.msra.mxu0 %v1376
    %3413 = vmatprep.subr.bf16.mxu0 %v1385
    %3414 = vmatpush1.bf16.msra.mxu0 %v1384
    %3415 = vmatprep.subr.bf16.mxu0 %v1393
    %3416 = vmatpush1.bf16.msra.mxu0 %v1392
    %3417 = vmatprep.subr.bf16.mxu0 %v1401
    %3418 = vmatpush1.bf16.msra.mxu0 %v1400
    %3419 = vmatprep.subr.bf16.mxu0 %v1409
    %3420 = vmatpush1.bf16.msra.mxu0 %v1408
    %3421 = vmatprep.subr.bf16.mxu0 0
    %3422 = vmatpush1.bf16.msra.mxu0 0
    %3423 = vmatprep.subr.bf16.mxu0 0
    %3424 = vmatpush1.bf16.msra.mxu0 0
    %3425 = vmatprep.subr.bf16.mxu0 0
    %3426 = vmatpush1.bf16.msra.mxu0 0
    %3427 = vmatprep.subr.bf16.mxu0 0
    %3428 = vmatpush1.bf16.msra.mxu0 0
    %3429 = vmatprep.subr.bf16.mxu0 0
    %3430 = vmatpush1.bf16.msra.mxu0 0
    %3431 = vmatprep.subr.bf16.mxu0 0
    %3432 = vmatpush1.bf16.msra.mxu0 0
    %3433 = vmatprep.subr.bf16.mxu0 0
    %3434 = vmatpush1.bf16.msra.mxu0 0
    %3435 = vmatprep.subr.bf16.mxu0 0
    %3436 = vmatpush1.bf16.msra.mxu0 0
    %3437 = vmatprep.mubr.bf16.mxu0 0
    %3438 = vmatmul.mubr.bf16.gmra.mrb[0].mxu0 %v3361
    %v3439 = vpop.f32.mrb[0].mxu0
    %v3440 = vadd.f32 0.0, %v3439
    %v3441 = vpop.f32.mrb[0].mxu0
    %v3442 = vadd.f32 0.0, %v3441
    %v3443 = vpop.f32.mrb[0].mxu0
    %v3444 = vadd.f32 0.0, %v3443
    %v3445 = vpop.f32.mrb[0].mxu0
    %v3446 = vadd.f32 0.0, %v3445
    %3447 = vdwg.mxu0
    %3448 = vmatprep.subr.bf16.mxu0 %v1355
    %3449 = vmatpush1.bf16.msra.mxu0 %v1354
    %3450 = vmatprep.subr.bf16.mxu0 %v1363
    %3451 = vmatpush1.bf16.msra.mxu0 %v1362
    %3452 = vmatprep.subr.bf16.mxu0 %v1371
    %3453 = vmatpush1.bf16.msra.mxu0 %v1370
    %3454 = vmatprep.subr.bf16.mxu0 %v1379
    %3455 = vmatpush1.bf16.msra.mxu0 %v1378
    %3456 = vmatprep.subr.bf16.mxu0 %v1387
    %3457 = vmatpush1.bf16.msra.mxu0 %v1386
    %3458 = vmatprep.subr.bf16.mxu0 %v1395
    %3459 = vmatpush1.bf16.msra.mxu0 %v1394
    %3460 = vmatprep.subr.bf16.mxu0 %v1403
    %3461 = vmatpush1.bf16.msra.mxu0 %v1402
    %3462 = vmatprep.subr.bf16.mxu0 %v1411
    %3463 = vmatpush1.bf16.msra.mxu0 %v1410
    %3464 = vmatprep.subr.bf16.mxu0 0
    %3465 = vmatpush1.bf16.msra.mxu0 0
    %3466 = vmatprep.subr.bf16.mxu0 0
    %3467 = vmatpush1.bf16.msra.mxu0 0
    %3468 = vmatprep.subr.bf16.mxu0 0
    %3469 = vmatpush1.bf16.msra.mxu0 0
    %3470 = vmatprep.subr.bf16.mxu0 0
    %3471 = vmatpush1.bf16.msra.mxu0 0
    %3472 = vmatprep.subr.bf16.mxu0 0
    %3473 = vmatpush1.bf16.msra.mxu0 0
    %3474 = vmatprep.subr.bf16.mxu0 0
    %3475 = vmatpush1.bf16.msra.mxu0 0
    %3476 = vmatprep.subr.bf16.mxu0 0
    %3477 = vmatpush1.bf16.msra.mxu0 0
    %3478 = vmatprep.subr.bf16.mxu0 0
    %3479 = vmatpush1.bf16.msra.mxu0 0
    %3480 = vmatprep.mubr.bf16.mxu0 0
    %3481 = vmatmul.mubr.bf16.gmra.mrb[0].mxu0 %v3361
    %v3482 = vpop.f32.mrb[0].mxu0
    %v3483 = vadd.f32 0.0, %v3482
    %v3484 = vpop.f32.mrb[0].mxu0
    %v3485 = vadd.f32 0.0, %v3484
    %v3486 = vpop.f32.mrb[0].mxu0
    %v3487 = vadd.f32 0.0, %v3486
    %v3488 = vpop.f32.mrb[0].mxu0
    %v3489 = vadd.f32 0.0, %v3488
    %3490 = vdwg.mxu0
    %3491 = vmatprep.subr.bf16.mxu0 %v1357
    %3492 = vmatpush1.bf16.msra.mxu0 %v1356
    %3493 = vmatprep.subr.bf16.mxu0 %v1365
    %3494 = vmatpush1.bf16.msra.mxu0 %v1364
    %3495 = vmatprep.subr.bf16.mxu0 %v1373
    %3496 = vmatpush1.bf16.msra.mxu0 %v1372
    %3497 = vmatprep.subr.bf16.mxu0 %v1381
    %3498 = vmatpush1.bf16.msra.mxu0 %v1380
    %3499 = vmatprep.subr.bf16.mxu0 %v1389
    %3500 = vmatpush1.bf16.msra.mxu0 %v1388
    %3501 = vmatprep.subr.bf16.mxu0 %v1397
    %3502 = vmatpush1.bf16.msra.mxu0 %v1396
    %3503 = vmatprep.subr.bf16.mxu0 %v1405
    %3504 = vmatpush1.bf16.msra.mxu0 %v1404
    %3505 = vmatprep.subr.bf16.mxu0 %v1413
    %3506 = vmatpush1.bf16.msra.mxu0 %v1412
    %3507 = vmatprep.subr.bf16.mxu0 0
    %3508 = vmatpush1.bf16.msra.mxu0 0
    %3509 = vmatprep.subr.bf16.mxu0 0
    %3510 = vmatpush1.bf16.msra.mxu0 0
    %3511 = vmatprep.subr.bf16.mxu0 0
    %3512 = vmatpush1.bf16.msra.mxu0 0
    %3513 = vmatprep.subr.bf16.mxu0 0
    %3514 = vmatpush1.bf16.msra.mxu0 0
    %3515 = vmatprep.subr.bf16.mxu0 0
    %3516 = vmatpush1.bf16.msra.mxu0 0
    %3517 = vmatprep.subr.bf16.mxu0 0
    %3518 = vmatpush1.bf16.msra.mxu0 0
    %3519 = vmatprep.subr.bf16.mxu0 0
    %3520 = vmatpush1.bf16.msra.mxu0 0
    %3521 = vmatprep.subr.bf16.mxu0 0
    %3522 = vmatpush1.bf16.msra.mxu0 0
    %3523 = vmatprep.mubr.bf16.mxu0 0
    %3524 = vmatmul.mubr.bf16.gmra.mrb[0].mxu0 %v3361
    %v3525 = vpop.f32.mrb[0].mxu0
    %v3526 = vadd.f32 0.0, %v3525
    %v3527 = vpop.f32.mrb[0].mxu0
    %v3528 = vadd.f32 0.0, %v3527
    %v3529 = vpop.f32.mrb[0].mxu0
    %v3530 = vadd.f32 0.0, %v3529
    %v3531 = vpop.f32.mrb[0].mxu0
    %v3532 = vadd.f32 0.0, %v3531
    %3533 = vdwg.mxu0
    %v3534 = vpack.c.bf16 %v3360, %v3359
    %3535 = vmatprep.subr.bf16.mxu0 %v1729
    %3536 = vmatpush1.bf16.msra.mxu0 %v1728
    %3537 = vmatprep.subr.bf16.mxu0 %v1733
    %3538 = vmatpush1.bf16.msra.mxu0 %v1732
    %3539 = vmatprep.subr.bf16.mxu0 %v1737
    %3540 = vmatpush1.bf16.msra.mxu0 %v1736
    %3541 = vmatprep.subr.bf16.mxu0 %v1741
    %3542 = vmatpush1.bf16.msra.mxu0 %v1740
    %3543 = vmatprep.subr.bf16.mxu0 %v1745
    %3544 = vmatpush1.bf16.msra.mxu0 %v1744
    %3545 = vmatprep.subr.bf16.mxu0 %v1749
    %3546 = vmatpush1.bf16.msra.mxu0 %v1748
    %3547 = vmatprep.subr.bf16.mxu0 %v1753
    %3548 = vmatpush1.bf16.msra.mxu0 %v1752
    %3549 = vmatprep.subr.bf16.mxu0 %v1757
    %3550 = vmatpush1.bf16.msra.mxu0 %v1756
    %3551 = vmatprep.subr.bf16.mxu0 0
    %3552 = vmatpush1.bf16.msra.mxu0 0
    %3553 = vmatprep.subr.bf16.mxu0 0
    %3554 = vmatpush1.bf16.msra.mxu0 0
    %3555 = vmatprep.subr.bf16.mxu0 0
    %3556 = vmatpush1.bf16.msra.mxu0 0
    %3557 = vmatprep.subr.bf16.mxu0 0
    %3558 = vmatpush1.bf16.msra.mxu0 0
    %3559 = vmatprep.subr.bf16.mxu0 0
    %3560 = vmatpush1.bf16.msra.mxu0 0
    %3561 = vmatprep.subr.bf16.mxu0 0
    %3562 = vmatpush1.bf16.msra.mxu0 0
    %3563 = vmatprep.subr.bf16.mxu0 0
    %3564 = vmatpush1.bf16.msra.mxu0 0
    %3565 = vmatprep.subr.bf16.mxu0 0
    %3566 = vmatpush1.bf16.msra.mxu0 0
    %3567 = vmatprep.mubr.bf16.mxu0 0
    %3568 = vmatmul.mubr.bf16.gmra.mrb[0].mxu0 %v3534
    %v3569 = vpop.f32.mrb[0].mxu0
    %v3570 = vadd.f32 0.0, %v3569
    %v3571 = vpop.f32.mrb[0].mxu0
    %v3572 = vadd.f32 0.0, %v3571
    %v3573 = vpop.f32.mrb[0].mxu0
    %v3574 = vadd.f32 0.0, %v3573
    %v3575 = vpop.f32.mrb[0].mxu0
    %v3576 = vadd.f32 0.0, %v3575
    %3577 = vdwg.mxu0
    %3578 = vmatprep.subr.bf16.mxu0 %v1731
    %3579 = vmatpush1.bf16.msra.mxu0 %v1730
    %3580 = vmatprep.subr.bf16.mxu0 %v1735
    %3581 = vmatpush1.bf16.msra.mxu0 %v1734
    %3582 = vmatprep.subr.bf16.mxu0 %v1739
    %3583 = vmatpush1.bf16.msra.mxu0 %v1738
    %3584 = vmatprep.subr.bf16.mxu0 %v1743
    %3585 = vmatpush1.bf16.msra.mxu0 %v1742
    %3586 = vmatprep.subr.bf16.mxu0 %v1747
    %3587 = vmatpush1.bf16.msra.mxu0 %v1746
    %3588 = vmatprep.subr.bf16.mxu0 %v1751
    %3589 = vmatpush1.bf16.msra.mxu0 %v1750
    %3590 = vmatprep.subr.bf16.mxu0 %v1755
    %3591 = vmatpush1.bf16.msra.mxu0 %v1754
    %3592 = vmatprep.subr.bf16.mxu0 %v1759
    %3593 = vmatpush1.bf16.msra.mxu0 %v1758
    %3594 = vmatprep.subr.bf16.mxu0 0
    %3595 = vmatpush1.bf16.msra.mxu0 0
    %3596 = vmatprep.subr.bf16.mxu0 0
    %3597 = vmatpush1.bf16.msra.mxu0 0
    %3598 = vmatprep.subr.bf16.mxu0 0
    %3599 = vmatpush1.bf16.msra.mxu0 0
    %3600 = vmatprep.subr.bf16.mxu0 0
    %3601 = vmatpush1.bf16.msra.mxu0 0
    %3602 = vmatprep.subr.bf16.mxu0 0
    %3603 = vmatpush1.bf16.msra.mxu0 0
    %3604 = vmatprep.subr.bf16.mxu0 0
    %3605 = vmatpush1.bf16.msra.mxu0 0
    %3606 = vmatprep.subr.bf16.mxu0 0
    %3607 = vmatpush1.bf16.msra.mxu0 0
    %3608 = vmatprep.subr.bf16.mxu0 0
    %3609 = vmatpush1.bf16.msra.mxu0 0
    %3610 = vmatprep.mubr.bf16.mxu0 0
    %3611 = vmatmul.mubr.bf16.gmra.mrb[0].mxu0 %v3534
    %v3612 = vpop.f32.mrb[0].mxu0
    %v3613 = vadd.f32 0.0, %v3612
    %v3614 = vpop.f32.mrb[0].mxu0
    %v3615 = vadd.f32 0.0, %v3614
    %v3616 = vpop.f32.mrb[0].mxu0
    %v3617 = vadd.f32 0.0, %v3616
    %v3618 = vpop.f32.mrb[0].mxu0
    %v3619 = vadd.f32 0.0, %v3618
    %3620 = vdwg.mxu0
    %s3621 = smul.u32 12, 4
    %s3622 = smul.addr %s3621, 8
    %s3623 = scalar_lea.vmem [#allocation2], %s3622
    %v3624 = vld [vmem:[%s3623] sm:$0xff]
    %v3625 = vld [vmem:[%s3623 + $0x8] sm:$0xff]
    %v3626 = vld [vmem:[%s3623 + $0x10] sm:$0xff]
    %v3627 = vld [vmem:[%s3623 + $0x18] sm:$0xff]
    %v3628 = vld [vmem:[%s3623 + $0x20] sm:$0xff]
    %v3629 = vld [vmem:[%s3623 + $0x28] sm:$0xff]
    %v3630 = vld [vmem:[%s3623 + $0x30] sm:$0xff]
    %v3631 = vld [vmem:[%s3623 + $0x38] sm:$0xff]
    %v3632 = vadd.f32 %v3624, %v3397
    %v3633 = vadd.f32 %v3625, %v3399
    %v3634 = vadd.f32 %v3626, %v3440
    %v3635 = vadd.f32 %v3627, %v3442
    %v3636 = vadd.f32 %v3628, %v3401
    %v3637 = vadd.f32 %v3629, %v3403
    %v3638 = vadd.f32 %v3630, %v3444
    %v3639 = vadd.f32 %v3631, %v3446
    %v3640 = vadd.f32 %v3483, %v3570
    %v3641 = vadd.f32 %v3485, %v3572
    %v3642 = vadd.f32 %v3526, %v3613
    %v3643 = vadd.f32 %v3528, %v3615
    %v3644 = vadd.f32 %v3487, %v3574
    %v3645 = vadd.f32 %v3489, %v3576
    %v3646 = vadd.f32 %v3530, %v3617
    %v3647 = vadd.f32 %v3532, %v3619
    %v3648 = vadd.f32 %v3640, %v1330
    %v3649 = vadd.f32 %v3641, %v1334
    %v3650 = vadd.f32 %v3642, %v1338
    %v3651 = vadd.f32 %v3643, %v1342
    %v3652 = vadd.f32 %v3644, %v1330
    %v3653 = vadd.f32 %v3645, %v1334
    %v3654 = vadd.f32 %v3646, %v1338
    %v3655 = vadd.f32 %v3647, %v1342
    %v3656 = vtanh.pop %v3632
    %v3657 = vtanh.pop %v3633
    %v3658 = vtanh.pop %v3634
    %v3659 = vtanh.pop %v3635
    %v3660 = vtanh.pop %v3636
    %v3661 = vtanh.pop %v3637
    %v3662 = vtanh.pop %v3638
    %v3663 = vtanh.pop %v3639
    %v3664 = vmul.f32 %v3656, 0.5
    %v3665 = vmul.f32 %v3660, 0.5
    %v3666 = vadd.f32 %v3664, 0.5
    %v3667 = vadd.f32 %v3665, 0.5
    %v3668 = vmul.f32 %v3657, 0.5
    %v3669 = vmul.f32 %v3661, 0.5
    %v3670 = vadd.f32 %v3668, 0.5
    %v3671 = vadd.f32 %v3669, 0.5
    %v3672 = vmul.f32 %v3659, 0.5
    %v3673 = vmul.f32 %v3663, 0.5
    %v3674 = vadd.f32 %v3672, 0.5
    %v3675 = vadd.f32 %v3673, 0.5
    %v3676 = vmul.f32 %v3670, %v3325
    %v3677 = vmul.f32 %v3671, %v3326
    %v3678 = vmul.f32 %v3666, %v3658
    %v3679 = vmul.f32 %v3667, %v3662
    %v3680 = vadd.f32 %v3676, %v3678
    %v3681 = vadd.f32 %v3677, %v3679
    %v3682 = vtanh.pop %v3680
    %v3683 = vtanh.pop %v3681
    %v3684 = vmul.f32 %v3674, %v3682
    %v3685 = vmul.f32 %v3675, %v3683
    %v3686 = vtanh.pop %v3648
    %v3687 = vtanh.pop %v3649
    %v3688 = vtanh.pop %v3650
    %v3689 = vtanh.pop %v3651
    %v3690 = vtanh.pop %v3652
    %v3691 = vtanh.pop %v3653
    %v3692 = vtanh.pop %v3654
    %v3693 = vtanh.pop %v3655
    %v3694 = vmul.f32 %v3686, 0.5
    %v3695 = vmul.f32 %v3690, 0.5
    %v3696 = vadd.f32 %v3694, 0.5
    %v3697 = vadd.f32 %v3695, 0.5
    %v3698 = vmul.f32 %v3687, 0.5
    %v3699 = vmul.f32 %v3691, 0.5
    %v3700 = vadd.f32 %v3698, 0.5
    %v3701 = vadd.f32 %v3699, 0.5
    %v3702 = vmul.f32 %v3689, 0.5
    %v3703 = vmul.f32 %v3693, 0.5
    %v3704 = vadd.f32 %v3702, 0.5
    %v3705 = vadd.f32 %v3703, 0.5
    %v3706 = vmul.f32 %v3700, %v3355
    %v3707 = vmul.f32 %v3701, %v3356
    %v3708 = vmul.f32 %v3696, %v3688
    %v3709 = vmul.f32 %v3697, %v3692
    %v3710 = vadd.f32 %v3706, %v3708
    %v3711 = vadd.f32 %v3707, %v3709
    %v3712 = vtanh.pop %v3710
    %v3713 = vtanh.pop %v3711
    %v3714 = vmul.f32 %v3704, %v3712
    %v3715 = vmul.f32 %v3705, %v3713
    %v3716 = vpack.c.bf16 %v3685, %v3684
    %3717 = vmatprep.subr.bf16.mxu0 %v1351
    %3718 = vmatpush1.bf16.msra.mxu0 %v1350
    %3719 = vmatprep.subr.bf16.mxu0 %v1359
    %3720 = vmatpush1.bf16.msra.mxu0 %v1358
    %3721 = vmatprep.subr.bf16.mxu0 %v1367
    %3722 = vmatpush1.bf16.msra.mxu0 %v1366
    %3723 = vmatprep.subr.bf16.mxu0 %v1375
    %3724 = vmatpush1.bf16.msra.mxu0 %v1374
    %3725 = vmatprep.subr.bf16.mxu0 %v1383
    %3726 = vmatpush1.bf16.msra.mxu0 %v1382
    %3727 = vmatprep.subr.bf16.mxu0 %v1391
    %3728 = vmatpush1.bf16.msra.mxu0 %v1390
    %3729 = vmatprep.subr.bf16.mxu0 %v1399
    %3730 = vmatpush1.bf16.msra.mxu0 %v1398
    %3731 = vmatprep.subr.bf16.mxu0 %v1407
    %3732 = vmatpush1.bf16.msra.mxu0 %v1406
    %3733 = vmatprep.subr.bf16.mxu0 0
    %3734 = vmatpush1.bf16.msra.mxu0 0
    %3735 = vmatprep.subr.bf16.mxu0 0
    %3736 = vmatpush1.bf16.msra.mxu0 0
    %3737 = vmatprep.subr.bf16.mxu0 0
    %3738 = vmatpush1.bf16.msra.mxu0 0
    %3739 = vmatprep.subr.bf16.mxu0 0
    %3740 = vmatpush1.bf16.msra.mxu0 0
    %3741 = vmatprep.subr.bf16.mxu0 0
    %3742 = vmatpush1.bf16.msra.mxu0 0
    %3743 = vmatprep.subr.bf16.mxu0 0
    %3744 = vmatpush1.bf16.msra.mxu0 0
    %3745 = vmatprep.subr.bf16.mxu0 0
    %3746 = vmatpush1.bf16.msra.mxu0 0
    %3747 = vmatprep.subr.bf16.mxu0 0
    %3748 = vmatpush1.bf16.msra.mxu0 0
    %3749 = vmatprep.mubr.bf16.mxu0 0
    %3750 = vmatmul.mubr.bf16.gmra.mrb[0].mxu0 %v3716
    %v3751 = vpop.f32.mrb[0].mxu0
    %v3752 = vadd.f32 0.0, %v3751
    %v3753 = vpop.f32.mrb[0].mxu0
    %v3754 = vadd.f32 0.0, %v3753
    %v3755 = vpop.f32.mrb[0].mxu0
    %v3756 = vadd.f32 0.0, %v3755
    %v3757 = vpop.f32.mrb[0].mxu0
    %v3758 = vadd.f32 0.0, %v3757
    %3759 = vdwg.mxu0
    %3760 = vmatprep.subr.bf16.mxu0 %v1353
    %3761 = vmatpush1.bf16.msra.mxu0 %v1352
    %3762 = vmatprep.subr.bf16.mxu0 %v1361
    %3763 = vmatpush1.bf16.msra.mxu0 %v1360
    %3764 = vmatprep.subr.bf16.mxu0 %v1369
    %3765 = vmatpush1.bf16.msra.mxu0 %v1368
    %3766 = vmatprep.subr.bf16.mxu0 %v1377
    %3767 = vmatpush1.bf16.msra.mxu0 %v1376
    %3768 = vmatprep.subr.bf16.mxu0 %v1385
    %3769 = vmatpush1.bf16.msra.mxu0 %v1384
    %3770 = vmatprep.subr.bf16.mxu0 %v1393
    %3771 = vmatpush1.bf16.msra.mxu0 %v1392
    %3772 = vmatprep.subr.bf16.mxu0 %v1401
    %3773 = vmatpush1.bf16.msra.mxu0 %v1400
    %3774 = vmatprep.subr.bf16.mxu0 %v1409
    %3775 = vmatpush1.bf16.msra.mxu0 %v1408
    %3776 = vmatprep.subr.bf16.mxu0 0
    %3777 = vmatpush1.bf16.msra.mxu0 0
    %3778 = vmatprep.subr.bf16.mxu0 0
    %3779 = vmatpush1.bf16.msra.mxu0 0
    %3780 = vmatprep.subr.bf16.mxu0 0
    %3781 = vmatpush1.bf16.msra.mxu0 0
    %3782 = vmatprep.subr.bf16.mxu0 0
    %3783 = vmatpush1.bf16.msra.mxu0 0
    %3784 = vmatprep.subr.bf16.mxu0 0
    %3785 = vmatpush1.bf16.msra.mxu0 0
    %3786 = vmatprep.subr.bf16.mxu0 0
    %3787 = vmatpush1.bf16.msra.mxu0 0
    %3788 = vmatprep.subr.bf16.mxu0 0
    %3789 = vmatpush1.bf16.msra.mxu0 0
    %3790 = vmatprep.subr.bf16.mxu0 0
    %3791 = vmatpush1.bf16.msra.mxu0 0
    %3792 = vmatprep.mubr.bf16.mxu0 0
    %3793 = vmatmul.mubr.bf16.gmra.mrb[0].mxu0 %v3716
    %v3794 = vpop.f32.mrb[0].mxu0
    %v3795 = vadd.f32 0.0, %v3794
    %v3796 = vpop.f32.mrb[0].mxu0
    %v3797 = vadd.f32 0.0, %v3796
    %v3798 = vpop.f32.mrb[0].mxu0
    %v3799 = vadd.f32 0.0, %v3798
    %v3800 = vpop.f32.mrb[0].mxu0
    %v3801 = vadd.f32 0.0, %v3800
    %3802 = vdwg.mxu0
    %3803 = vmatprep.subr.bf16.mxu0 %v1355
    %3804 = vmatpush1.bf16.msra.mxu0 %v1354
    %3805 = vmatprep.subr.bf16.mxu0 %v1363
    %3806 = vmatpush1.bf16.msra.mxu0 %v1362
    %3807 = vmatprep.subr.bf16.mxu0 %v1371
    %3808 = vmatpush1.bf16.msra.mxu0 %v1370
    %3809 = vmatprep.subr.bf16.mxu0 %v1379
    %3810 = vmatpush1.bf16.msra.mxu0 %v1378
    %3811 = vmatprep.subr.bf16.mxu0 %v1387
    %3812 = vmatpush1.bf16.msra.mxu0 %v1386
    %3813 = vmatprep.subr.bf16.mxu0 %v1395
    %3814 = vmatpush1.bf16.msra.mxu0 %v1394
    %3815 = vmatprep.subr.bf16.mxu0 %v1403
    %3816 = vmatpush1.bf16.msra.mxu0 %v1402
    %3817 = vmatprep.subr.bf16.mxu0 %v1411
    %3818 = vmatpush1.bf16.msra.mxu0 %v1410
    %3819 = vmatprep.subr.bf16.mxu0 0
    %3820 = vmatpush1.bf16.msra.mxu0 0
    %3821 = vmatprep.subr.bf16.mxu0 0
    %3822 = vmatpush1.bf16.msra.mxu0 0
    %3823 = vmatprep.subr.bf16.mxu0 0
    %3824 = vmatpush1.bf16.msra.mxu0 0
    %3825 = vmatprep.subr.bf16.mxu0 0
    %3826 = vmatpush1.bf16.msra.mxu0 0
    %3827 = vmatprep.subr.bf16.mxu0 0
    %3828 = vmatpush1.bf16.msra.mxu0 0
    %3829 = vmatprep.subr.bf16.mxu0 0
    %3830 = vmatpush1.bf16.msra.mxu0 0
    %3831 = vmatprep.subr.bf16.mxu0 0
    %3832 = vmatpush1.bf16.msra.mxu0 0
    %3833 = vmatprep.subr.bf16.mxu0 0
    %3834 = vmatpush1.bf16.msra.mxu0 0
    %3835 = vmatprep.mubr.bf16.mxu0 0
    %3836 = vmatmul.mubr.bf16.gmra.mrb[0].mxu0 %v3716
    %v3837 = vpop.f32.mrb[0].mxu0
    %v3838 = vadd.f32 0.0, %v3837
    %v3839 = vpop.f32.mrb[0].mxu0
    %v3840 = vadd.f32 0.0, %v3839
    %v3841 = vpop.f32.mrb[0].mxu0
    %v3842 = vadd.f32 0.0, %v3841
    %v3843 = vpop.f32.mrb[0].mxu0
    %v3844 = vadd.f32 0.0, %v3843
    %3845 = vdwg.mxu0
    %3846 = vmatprep.subr.bf16.mxu0 %v1357
    %3847 = vmatpush1.bf16.msra.mxu0 %v1356
    %3848 = vmatprep.subr.bf16.mxu0 %v1365
    %3849 = vmatpush1.bf16.msra.mxu0 %v1364
    %3850 = vmatprep.subr.bf16.mxu0 %v1373
    %3851 = vmatpush1.bf16.msra.mxu0 %v1372
    %3852 = vmatprep.subr.bf16.mxu0 %v1381
    %3853 = vmatpush1.bf16.msra.mxu0 %v1380
    %3854 = vmatprep.subr.bf16.mxu0 %v1389
    %3855 = vmatpush1.bf16.msra.mxu0 %v1388
    %3856 = vmatprep.subr.bf16.mxu0 %v1397
    %3857 = vmatpush1.bf16.msra.mxu0 %v1396
    %3858 = vmatprep.subr.bf16.mxu0 %v1405
    %3859 = vmatpush1.bf16.msra.mxu0 %v1404
    %3860 = vmatprep.subr.bf16.mxu0 %v1413
    %3861 = vmatpush1.bf16.msra.mxu0 %v1412
    %3862 = vmatprep.subr.bf16.mxu0 0
    %3863 = vmatpush1.bf16.msra.mxu0 0
    %3864 = vmatprep.subr.bf16.mxu0 0
    %3865 = vmatpush1.bf16.msra.mxu0 0
    %3866 = vmatprep.subr.bf16.mxu0 0
    %3867 = vmatpush1.bf16.msra.mxu0 0
    %3868 = vmatprep.subr.bf16.mxu0 0
    %3869 = vmatpush1.bf16.msra.mxu0 0
    %3870 = vmatprep.subr.bf16.mxu0 0
    %3871 = vmatpush1.bf16.msra.mxu0 0
    %3872 = vmatprep.subr.bf16.mxu0 0
    %3873 = vmatpush1.bf16.msra.mxu0 0
    %3874 = vmatprep.subr.bf16.mxu0 0
    %3875 = vmatpush1.bf16.msra.mxu0 0
    %3876 = vmatprep.subr.bf16.mxu0 0
    %3877 = vmatpush1.bf16.msra.mxu0 0
    %3878 = vmatprep.mubr.bf16.mxu0 0
    %3879 = vmatmul.mubr.bf16.gmra.mrb[0].mxu0 %v3716
    %v3880 = vpop.f32.mrb[0].mxu0
    %v3881 = vadd.f32 0.0, %v3880
    %v3882 = vpop.f32.mrb[0].mxu0
    %v3883 = vadd.f32 0.0, %v3882
    %v3884 = vpop.f32.mrb[0].mxu0
    %v3885 = vadd.f32 0.0, %v3884
    %v3886 = vpop.f32.mrb[0].mxu0
    %v3887 = vadd.f32 0.0, %v3886
    %3888 = vdwg.mxu0
    %v3889 = vpack.c.bf16 %v3715, %v3714
    %3890 = vmatprep.subr.bf16.mxu0 %v1729
    %3891 = vmatpush1.bf16.msra.mxu0 %v1728
    %3892 = vmatprep.subr.bf16.mxu0 %v1733
    %3893 = vmatpush1.bf16.msra.mxu0 %v1732
    %3894 = vmatprep.subr.bf16.mxu0 %v1737
    %3895 = vmatpush1.bf16.msra.mxu0 %v1736
    %3896 = vmatprep.subr.bf16.mxu0 %v1741
    %3897 = vmatpush1.bf16.msra.mxu0 %v1740
    %3898 = vmatprep.subr.bf16.mxu0 %v1745
    %3899 = vmatpush1.bf16.msra.mxu0 %v1744
    %3900 = vmatprep.subr.bf16.mxu0 %v1749
    %3901 = vmatpush1.bf16.msra.mxu0 %v1748
    %3902 = vmatprep.subr.bf16.mxu0 %v1753
    %3903 = vmatpush1.bf16.msra.mxu0 %v1752
    %3904 = vmatprep.subr.bf16.mxu0 %v1757
    %3905 = vmatpush1.bf16.msra.mxu0 %v1756
    %3906 = vmatprep.subr.bf16.mxu0 0
    %3907 = vmatpush1.bf16.msra.mxu0 0
    %3908 = vmatprep.subr.bf16.mxu0 0
    %3909 = vmatpush1.bf16.msra.mxu0 0
    %3910 = vmatprep.subr.bf16.mxu0 0
    %3911 = vmatpush1.bf16.msra.mxu0 0
    %3912 = vmatprep.subr.bf16.mxu0 0
    %3913 = vmatpush1.bf16.msra.mxu0 0
    %3914 = vmatprep.subr.bf16.mxu0 0
    %3915 = vmatpush1.bf16.msra.mxu0 0
    %3916 = vmatprep.subr.bf16.mxu0 0
    %3917 = vmatpush1.bf16.msra.mxu0 0
    %3918 = vmatprep.subr.bf16.mxu0 0
    %3919 = vmatpush1.bf16.msra.mxu0 0
    %3920 = vmatprep.subr.bf16.mxu0 0
    %3921 = vmatpush1.bf16.msra.mxu0 0
    %3922 = vmatprep.mubr.bf16.mxu0 0
    %3923 = vmatmul.mubr.bf16.gmra.mrb[0].mxu0 %v3889
    %v3924 = vpop.f32.mrb[0].mxu0
    %v3925 = vadd.f32 0.0, %v3924
    %v3926 = vpop.f32.mrb[0].mxu0
    %v3927 = vadd.f32 0.0, %v3926
    %v3928 = vpop.f32.mrb[0].mxu0
    %v3929 = vadd.f32 0.0, %v3928
    %v3930 = vpop.f32.mrb[0].mxu0
    %v3931 = vadd.f32 0.0, %v3930
    %3932 = vdwg.mxu0
    %3933 = vmatprep.subr.bf16.mxu0 %v1731
    %3934 = vmatpush1.bf16.msra.mxu0 %v1730
    %3935 = vmatprep.subr.bf16.mxu0 %v1735
    %3936 = vmatpush1.bf16.msra.mxu0 %v1734
    %3937 = vmatprep.subr.bf16.mxu0 %v1739
    %3938 = vmatpush1.bf16.msra.mxu0 %v1738
    %3939 = vmatprep.subr.bf16.mxu0 %v1743
    %3940 = vmatpush1.bf16.msra.mxu0 %v1742
    %3941 = vmatprep.subr.bf16.mxu0 %v1747
    %3942 = vmatpush1.bf16.msra.mxu0 %v1746
    %3943 = vmatprep.subr.bf16.mxu0 %v1751
    %3944 = vmatpush1.bf16.msra.mxu0 %v1750
    %3945 = vmatprep.subr.bf16.mxu0 %v1755
    %3946 = vmatpush1.bf16.msra.mxu0 %v1754
    %3947 = vmatprep.subr.bf16.mxu0 %v1759
    %3948 = vmatpush1.bf16.msra.mxu0 %v1758
    %3949 = vmatprep.subr.bf16.mxu0 0
    %3950 = vmatpush1.bf16.msra.mxu0 0
    %3951 = vmatprep.subr.bf16.mxu0 0
    %3952 = vmatpush1.bf16.msra.mxu0 0
    %3953 = vmatprep.subr.bf16.mxu0 0
    %3954 = vmatpush1.bf16.msra.mxu0 0
    %3955 = vmatprep.subr.bf16.mxu0 0
    %3956 = vmatpush1.bf16.msra.mxu0 0
    %3957 = vmatprep.subr.bf16.mxu0 0
    %3958 = vmatpush1.bf16.msra.mxu0 0
    %3959 = vmatprep.subr.bf16.mxu0 0
    %3960 = vmatpush1.bf16.msra.mxu0 0
    %3961 = vmatprep.subr.bf16.mxu0 0
    %3962 = vmatpush1.bf16.msra.mxu0 0
    %3963 = vmatprep.subr.bf16.mxu0 0
    %3964 = vmatpush1.bf16.msra.mxu0 0
    %3965 = vmatprep.mubr.bf16.mxu0 0
    %3966 = vmatmul.mubr.bf16.gmra.mrb[0].mxu0 %v3889
    %v3967 = vpop.f32.mrb[0].mxu0
    %v3968 = vadd.f32 0.0, %v3967
    %v3969 = vpop.f32.mrb[0].mxu0
    %v3970 = vadd.f32 0.0, %v3969
    %v3971 = vpop.f32.mrb[0].mxu0
    %v3972 = vadd.f32 0.0, %v3971
    %v3973 = vpop.f32.mrb[0].mxu0
    %v3974 = vadd.f32 0.0, %v3973
    %3975 = vdwg.mxu0
    %s3976 = smul.u32 14, 4
    %s3977 = smul.addr %s3976, 8
    %s3978 = scalar_lea.vmem [#allocation2], %s3977
    %v3979 = vld [vmem:[%s3978] sm:$0xff]
    %v3980 = vld [vmem:[%s3978 + $0x8] sm:$0xff]
    %v3981 = vld [vmem:[%s3978 + $0x10] sm:$0xff]
    %v3982 = vld [vmem:[%s3978 + $0x18] sm:$0xff]
    %v3983 = vld [vmem:[%s3978 + $0x20] sm:$0xff]
    %v3984 = vld [vmem:[%s3978 + $0x28] sm:$0xff]
    %v3985 = vld [vmem:[%s3978 + $0x30] sm:$0xff]
    %v3986 = vld [vmem:[%s3978 + $0x38] sm:$0xff]
    %v3987 = vadd.f32 %v3979, %v3752
    %v3988 = vadd.f32 %v3980, %v3754
    %v3989 = vadd.f32 %v3981, %v3795
    %v3990 = vadd.f32 %v3982, %v3797
    %v3991 = vadd.f32 %v3983, %v3756
    %v3992 = vadd.f32 %v3984, %v3758
    %v3993 = vadd.f32 %v3985, %v3799
    %v3994 = vadd.f32 %v3986, %v3801
    %v3995 = vadd.f32 %v3838, %v3925
    %v3996 = vadd.f32 %v3840, %v3927
    %v3997 = vadd.f32 %v3881, %v3968
    %v3998 = vadd.f32 %v3883, %v3970
    %v3999 = vadd.f32 %v3842, %v3929
    %v4000 = vadd.f32 %v3844, %v3931
    %v4001 = vadd.f32 %v3885, %v3972
    %v4002 = vadd.f32 %v3887, %v3974
    %v4003 = vadd.f32 %v3995, %v1330
    %v4004 = vadd.f32 %v3996, %v1334
    %v4005 = vadd.f32 %v3997, %v1338
    %v4006 = vadd.f32 %v3998, %v1342
    %v4007 = vadd.f32 %v3999, %v1330
    %v4008 = vadd.f32 %v4000, %v1334
    %v4009 = vadd.f32 %v4001, %v1338
    %v4010 = vadd.f32 %v4002, %v1342
    %v4011 = vtanh.pop %v3987
    %v4012 = vtanh.pop %v3988
    %v4013 = vtanh.pop %v3989
    %v4014 = vtanh.pop %v3990
    %v4015 = vtanh.pop %v3991
    %v4016 = vtanh.pop %v3992
    %v4017 = vtanh.pop %v3993
    %v4018 = vtanh.pop %v3994
    %v4019 = vmul.f32 %v4011, 0.5
    %v4020 = vmul.f32 %v4015, 0.5
    %v4021 = vadd.f32 %v4019, 0.5
    %v4022 = vadd.f32 %v4020, 0.5
    %v4023 = vmul.f32 %v4012, 0.5
    %v4024 = vmul.f32 %v4016, 0.5
    %v4025 = vadd.f32 %v4023, 0.5
    %v4026 = vadd.f32 %v4024, 0.5
    %v4027 = vmul.f32 %v4014, 0.5
    %v4028 = vmul.f32 %v4018, 0.5
    %v4029 = vadd.f32 %v4027, 0.5
    %v4030 = vadd.f32 %v4028, 0.5
    %v4031 = vmul.f32 %v4025, %v3680
    %v4032 = vmul.f32 %v4026, %v3681
    %v4033 = vmul.f32 %v4021, %v4013
    %v4034 = vmul.f32 %v4022, %v4017
    %v4035 = vadd.f32 %v4031, %v4033
    %v4036 = vadd.f32 %v4032, %v4034
    %v4037 = vtanh.pop %v4035
    %v4038 = vtanh.pop %v4036
    %v4039 = vmul.f32 %v4029, %v4037
    %v4040 = vmul.f32 %v4030, %v4038
    %v4041 = vtanh.pop %v4003
    %v4042 = vtanh.pop %v4004
    %v4043 = vtanh.pop %v4005
    %v4044 = vtanh.pop %v4006
    %v4045 = vtanh.pop %v4007
    %v4046 = vtanh.pop %v4008
    %v4047 = vtanh.pop %v4009
    %v4048 = vtanh.pop %v4010
    %v4049 = vmul.f32 %v4041, 0.5
    %v4050 = vmul.f32 %v4045, 0.5
    %v4051 = vadd.f32 %v4049, 0.5
    %v4052 = vadd.f32 %v4050, 0.5
    %v4053 = vmul.f32 %v4042, 0.5
    %v4054 = vmul.f32 %v4046, 0.5
    %v4055 = vadd.f32 %v4053, 0.5
    %v4056 = vadd.f32 %v4054, 0.5
    %v4057 = vmul.f32 %v4044, 0.5
    %v4058 = vmul.f32 %v4048, 0.5
    %v4059 = vadd.f32 %v4057, 0.5
    %v4060 = vadd.f32 %v4058, 0.5
    %v4061 = vmul.f32 %v4055, %v3710
    %v4062 = vmul.f32 %v4056, %v3711
    %v4063 = vmul.f32 %v4051, %v4043
    %v4064 = vmul.f32 %v4052, %v4047
    %v4065 = vadd.f32 %v4061, %v4063
    %v4066 = vadd.f32 %v4062, %v4064
    %v4067 = vtanh.pop %v4065
    %v4068 = vtanh.pop %v4066
    %v4069 = vmul.f32 %v4059, %v4067
    %v4070 = vmul.f32 %v4060, %v4068
    %v4071 = vpack.c.bf16 %v4040, %v4039
    %4072 = vmatprep.subr.bf16.mxu0 %v1355
    %4073 = vmatpush1.bf16.msra.mxu0 %v1354
    %4074 = vmatprep.subr.bf16.mxu0 %v1363
    %4075 = vmatpush1.bf16.msra.mxu0 %v1362
    %4076 = vmatprep.subr.bf16.mxu0 %v1371
    %4077 = vmatpush1.bf16.msra.mxu0 %v1370
    %4078 = vmatprep.subr.bf16.mxu0 %v1379
    %4079 = vmatpush1.bf16.msra.mxu0 %v1378
    %4080 = vmatprep.subr.bf16.mxu0 %v1387
    %4081 = vmatpush1.bf16.msra.mxu0 %v1386
    %4082 = vmatprep.subr.bf16.mxu0 %v1395
    %4083 = vmatpush1.bf16.msra.mxu0 %v1394
    %4084 = vmatprep.subr.bf16.mxu0 %v1403
    %4085 = vmatpush1.bf16.msra.mxu0 %v1402
    %4086 = vmatprep.subr.bf16.mxu0 %v1411
    %4087 = vmatpush1.bf16.msra.mxu0 %v1410
    %4088 = vmatprep.subr.bf16.mxu0 0
    %4089 = vmatpush1.bf16.msra.mxu0 0
    %4090 = vmatprep.subr.bf16.mxu0 0
    %4091 = vmatpush1.bf16.msra.mxu0 0
    %4092 = vmatprep.subr.bf16.mxu0 0
    %4093 = vmatpush1.bf16.msra.mxu0 0
    %4094 = vmatprep.subr.bf16.mxu0 0
    %4095 = vmatpush1.bf16.msra.mxu0 0
    %4096 = vmatprep.subr.bf16.mxu0 0
    %4097 = vmatpush1.bf16.msra.mxu0 0
    %4098 = vmatprep.subr.bf16.mxu0 0
    %4099 = vmatpush1.bf16.msra.mxu0 0
    %4100 = vmatprep.subr.bf16.mxu0 0
    %4101 = vmatpush1.bf16.msra.mxu0 0
    %4102 = vmatprep.subr.bf16.mxu0 0
    %4103 = vmatpush1.bf16.msra.mxu0 0
    %4104 = vmatprep.mubr.bf16.mxu0 0
    %4105 = vmatmul.mubr.bf16.gmra.mrb[0].mxu0 %v4071
    %v4106 = vpop.f32.mrb[0].mxu0
    %v4107 = vadd.f32 0.0, %v4106
    %v4108 = vpop.f32.mrb[0].mxu0
    %v4109 = vadd.f32 0.0, %v4108
    %v4110 = vpop.f32.mrb[0].mxu0
    %v4111 = vadd.f32 0.0, %v4110
    %v4112 = vpop.f32.mrb[0].mxu0
    %v4113 = vadd.f32 0.0, %v4112
    %4114 = vdwg.mxu0
    %4115 = vmatprep.subr.bf16.mxu0 %v1357
    %4116 = vmatpush1.bf16.msra.mxu0 %v1356
    %4117 = vmatprep.subr.bf16.mxu0 %v1365
    %4118 = vmatpush1.bf16.msra.mxu0 %v1364
    %4119 = vmatprep.subr.bf16.mxu0 %v1373
    %4120 = vmatpush1.bf16.msra.mxu0 %v1372
    %4121 = vmatprep.subr.bf16.mxu0 %v1381
    %4122 = vmatpush1.bf16.msra.mxu0 %v1380
    %4123 = vmatprep.subr.bf16.mxu0 %v1389
    %4124 = vmatpush1.bf16.msra.mxu0 %v1388
    %4125 = vmatprep.subr.bf16.mxu0 %v1397
    %4126 = vmatpush1.bf16.msra.mxu0 %v1396
    %4127 = vmatprep.subr.bf16.mxu0 %v1405
    %4128 = vmatpush1.bf16.msra.mxu0 %v1404
    %4129 = vmatprep.subr.bf16.mxu0 %v1413
    %4130 = vmatpush1.bf16.msra.mxu0 %v1412
    %4131 = vmatprep.subr.bf16.mxu0 0
    %4132 = vmatpush1.bf16.msra.mxu0 0
    %4133 = vmatprep.subr.bf16.mxu0 0
    %4134 = vmatpush1.bf16.msra.mxu0 0
    %4135 = vmatprep.subr.bf16.mxu0 0
    %4136 = vmatpush1.bf16.msra.mxu0 0
    %4137 = vmatprep.subr.bf16.mxu0 0
    %4138 = vmatpush1.bf16.msra.mxu0 0
    %4139 = vmatprep.subr.bf16.mxu0 0
    %4140 = vmatpush1.bf16.msra.mxu0 0
    %4141 = vmatprep.subr.bf16.mxu0 0
    %4142 = vmatpush1.bf16.msra.mxu0 0
    %4143 = vmatprep.subr.bf16.mxu0 0
    %4144 = vmatpush1.bf16.msra.mxu0 0
    %4145 = vmatprep.subr.bf16.mxu0 0
    %4146 = vmatpush1.bf16.msra.mxu0 0
    %4147 = vmatprep.mubr.bf16.mxu0 0
    %4148 = vmatmul.mubr.bf16.gmra.mrb[0].mxu0 %v4071
    %v4149 = vpop.f32.mrb[0].mxu0
    %v4150 = vadd.f32 0.0, %v4149
    %v4151 = vpop.f32.mrb[0].mxu0
    %v4152 = vadd.f32 0.0, %v4151
    %v4153 = vpop.f32.mrb[0].mxu0
    %v4154 = vadd.f32 0.0, %v4153
    %v4155 = vpop.f32.mrb[0].mxu0
    %v4156 = vadd.f32 0.0, %v4155
    %4157 = vdwg.mxu0
    %v4158 = vpack.c.bf16 %v4070, %v4069
    %4159 = vmatprep.subr.bf16.mxu0 %v1729
    %4160 = vmatpush1.bf16.msra.mxu0 %v1728
    %4161 = vmatprep.subr.bf16.mxu0 %v1733
    %4162 = vmatpush1.bf16.msra.mxu0 %v1732
    %4163 = vmatprep.subr.bf16.mxu0 %v1737
    %4164 = vmatpush1.bf16.msra.mxu0 %v1736
    %4165 = vmatprep.subr.bf16.mxu0 %v1741
    %4166 = vmatpush1.bf16.msra.mxu0 %v1740
    %4167 = vmatprep.subr.bf16.mxu0 %v1745
    %4168 = vmatpush1.bf16.msra.mxu0 %v1744
    %4169 = vmatprep.subr.bf16.mxu0 %v1749
    %4170 = vmatpush1.bf16.msra.mxu0 %v1748
    %4171 = vmatprep.subr.bf16.mxu0 %v1753
    %4172 = vmatpush1.bf16.msra.mxu0 %v1752
    %4173 = vmatprep.subr.bf16.mxu0 %v1757
    %4174 = vmatpush1.bf16.msra.mxu0 %v1756
    %4175 = vmatprep.subr.bf16.mxu0 0
    %4176 = vmatpush1.bf16.msra.mxu0 0
    %4177 = vmatprep.subr.bf16.mxu0 0
    %4178 = vmatpush1.bf16.msra.mxu0 0
    %4179 = vmatprep.subr.bf16.mxu0 0
    %4180 = vmatpush1.bf16.msra.mxu0 0
    %4181 = vmatprep.subr.bf16.mxu0 0
    %4182 = vmatpush1.bf16.msra.mxu0 0
    %4183 = vmatprep.subr.bf16.mxu0 0
    %4184 = vmatpush1.bf16.msra.mxu0 0
    %4185 = vmatprep.subr.bf16.mxu0 0
    %4186 = vmatpush1.bf16.msra.mxu0 0
    %4187 = vmatprep.subr.bf16.mxu0 0
    %4188 = vmatpush1.bf16.msra.mxu0 0
    %4189 = vmatprep.subr.bf16.mxu0 0
    %4190 = vmatpush1.bf16.msra.mxu0 0
    %4191 = vmatprep.mubr.bf16.mxu0 0
    %4192 = vmatmul.mubr.bf16.gmra.mrb[0].mxu0 %v4158
    %v4193 = vpop.f32.mrb[0].mxu0
    %v4194 = vadd.f32 0.0, %v4193
    %v4195 = vpop.f32.mrb[0].mxu0
    %v4196 = vadd.f32 0.0, %v4195
    %v4197 = vpop.f32.mrb[0].mxu0
    %v4198 = vadd.f32 0.0, %v4197
    %v4199 = vpop.f32.mrb[0].mxu0
    %v4200 = vadd.f32 0.0, %v4199
    %4201 = vdwg.mxu0
    %4202 = vmatprep.subr.bf16.mxu0 %v1731
    %4203 = vmatpush1.bf16.msra.mxu0 %v1730
    %4204 = vmatprep.subr.bf16.mxu0 %v1735
    %4205 = vmatpush1.bf16.msra.mxu0 %v1734
    %4206 = vmatprep.subr.bf16.mxu0 %v1739
    %4207 = vmatpush1.bf16.msra.mxu0 %v1738
    %4208 = vmatprep.subr.bf16.mxu0 %v1743
    %4209 = vmatpush1.bf16.msra.mxu0 %v1742
    %4210 = vmatprep.subr.bf16.mxu0 %v1747
    %4211 = vmatpush1.bf16.msra.mxu0 %v1746
    %4212 = vmatprep.subr.bf16.mxu0 %v1751
    %4213 = vmatpush1.bf16.msra.mxu0 %v1750
    %4214 = vmatprep.subr.bf16.mxu0 %v1755
    %4215 = vmatpush1.bf16.msra.mxu0 %v1754
    %4216 = vmatprep.subr.bf16.mxu0 %v1759
    %4217 = vmatpush1.bf16.msra.mxu0 %v1758
    %4218 = vmatprep.subr.bf16.mxu0 0
    %4219 = vmatpush1.bf16.msra.mxu0 0
    %4220 = vmatprep.subr.bf16.mxu0 0
    %4221 = vmatpush1.bf16.msra.mxu0 0
    %4222 = vmatprep.subr.bf16.mxu0 0
    %4223 = vmatpush1.bf16.msra.mxu0 0
    %4224 = vmatprep.subr.bf16.mxu0 0
    %4225 = vmatpush1.bf16.msra.mxu0 0
    %4226 = vmatprep.subr.bf16.mxu0 0
    %4227 = vmatpush1.bf16.msra.mxu0 0
    %4228 = vmatprep.subr.bf16.mxu0 0
    %4229 = vmatpush1.bf16.msra.mxu0 0
    %4230 = vmatprep.subr.bf16.mxu0 0
    %4231 = vmatpush1.bf16.msra.mxu0 0
    %4232 = vmatprep.subr.bf16.mxu0 0
    %4233 = vmatpush1.bf16.msra.mxu0 0
    %4234 = vmatprep.mubr.bf16.mxu0 0
    %4235 = vmatmul.mubr.bf16.gmra.mrb[0].mxu0 %v4158
    %v4236 = vpop.f32.mrb[0].mxu0
    %v4237 = vadd.f32 0.0, %v4236
    %v4238 = vpop.f32.mrb[0].mxu0
    %v4239 = vadd.f32 0.0, %v4238
    %v4240 = vpop.f32.mrb[0].mxu0
    %v4241 = vadd.f32 0.0, %v4240
    %v4242 = vpop.f32.mrb[0].mxu0
    %v4243 = vadd.f32 0.0, %v4242
    %4244 = vdwg.mxu0
    %v4245 = vadd.f32 %v4107, %v4194
    %v4246 = vadd.f32 %v4109, %v4196
    %v4247 = vadd.f32 %v4150, %v4237
    %v4248 = vadd.f32 %v4152, %v4239
    %v4249 = vadd.f32 %v4111, %v4198
    %v4250 = vadd.f32 %v4113, %v4200
    %v4251 = vadd.f32 %v4154, %v4241
    %v4252 = vadd.f32 %v4156, %v4243
    %v4253 = vadd.f32 %v4245, %v1330
    %v4254 = vadd.f32 %v4246, %v1334
    %v4255 = vadd.f32 %v4247, %v1338
    %v4256 = vadd.f32 %v4248, %v1342
    %v4257 = vadd.f32 %v4249, %v1330
    %v4258 = vadd.f32 %v4250, %v1334
    %v4259 = vadd.f32 %v4251, %v1338
    %v4260 = vadd.f32 %v4252, %v1342
    %v4261 = vtanh.pop %v4253
    %v4262 = vtanh.pop %v4254
    %v4263 = vtanh.pop %v4255
    %v4264 = vtanh.pop %v4256
    %v4265 = vtanh.pop %v4257
    %v4266 = vtanh.pop %v4258
    %v4267 = vtanh.pop %v4259
    %v4268 = vtanh.pop %v4260
    %v4269 = vmul.f32 %v4261, 0.5
    %v4270 = vmul.f32 %v4265, 0.5
    %v4271 = vadd.f32 %v4269, 0.5
    %v4272 = vadd.f32 %v4270, 0.5
    %v4273 = vmul.f32 %v4262, 0.5
    %v4274 = vmul.f32 %v4266, 0.5
    %v4275 = vadd.f32 %v4273, 0.5
    %v4276 = vadd.f32 %v4274, 0.5
    %v4277 = vmul.f32 %v4264, 0.5
    %v4278 = vmul.f32 %v4268, 0.5
    %v4279 = vadd.f32 %v4277, 0.5
    %v4280 = vadd.f32 %v4278, 0.5
    %v4281 = vmul.f32 %v4275, %v4065
    %v4282 = vmul.f32 %v4276, %v4066
    %v4283 = vmul.f32 %v4271, %v4263
    %v4284 = vmul.f32 %v4272, %v4267
    %v4285 = vadd.f32 %v4281, %v4283
    %v4286 = vadd.f32 %v4282, %v4284
    %v4287 = vtanh.pop %v4285
    %v4288 = vtanh.pop %v4286
    %v4289 = vmul.f32 %v4279, %v4287
    %v4290 = vmul.f32 %v4280, %v4288
    %4291 = vst [vmem:[%s8] sm:$0xff] %v4039
    %4292 = vst [vmem:[%s8 + $0x8] sm:$0xff] %v4040
    %s4293 = scalar_lea.vmem %s8, 16
    %4294 = vst [vmem:[%s4293] sm:$0xff] %v4289
    %4295 = vst [vmem:[%s4293 + $0x8] sm:$0xff] %v4290
    // Predicated region
    $region153: #{state_refactor_forward.1} parent=1 // pred_check
      _
    $region154: #{state_refactor_forward.1} parent=1 // pred_check_branch
      %4297 = sbr.rel (0) target = $region156
    $region155: #{state_refactor_forward.1} parent=1 // pred_region
      _
    $region156: #{state_refactor_forward.1} parent=1 // pred_fallthru
      _
    // Predicated region
    $region157: #{state_refactor_forward.1} parent=1 // pred_check
      _
    $region158: #{state_refactor_forward.1} parent=1 // pred_check_branch
      %4299 = sbr.rel (0) target = $region160
    $region159: #{state_refactor_forward.1} parent=1 // pred_region
      _
    $region160: #{state_refactor_forward.1} parent=1 // pred_fallthru
      _
    %4300 = vsyncpa [#allocation10], 1
  %4301 = vsyncmov [#allocation8]
  %s4302 = vpop.sfrf %4301
  %p4303 = scmp.eq.s32.totalorder %s4302, 0
  %p4304 = pneg %p4303
  %4306 = shalt.err (%p4304)
  %s4307 = scalar_lea.sflag [#allocation8], 1
  %4308 = vsyncmov %s4307
  %s4309 = vpop.sfrf %4308
  %p4310 = scmp.eq.s32.totalorder %s4309, 0
  %p4311 = pneg %p4310
  %4313 = shalt.err (%p4311)
  %s4314 = scalar_lea.sflag [#allocation8], 2
  %4315 = vsyncmov %s4314
  %s4316 = vpop.sfrf %4315
  %p4317 = scmp.eq.s32.totalorder %s4316, 0
  %p4318 = pneg %p4317
  %4320 = shalt.err (%p4318)
  %s4321 = scalar_lea.sflag [#allocation8], 3
  %4322 = vsyncmov %s4321
  %s4323 = vpop.sfrf %4322
  %p4324 = scmp.eq.s32.totalorder %s4323, 0
  %p4325 = pneg %p4324
  %4327 = shalt.err (%p4325)
  %s4328 = scalar_lea.sflag [#allocation8], 4
  %4329 = vsyncmov %s4328
  %s4330 = vpop.sfrf %4329
  %p4331 = scmp.eq.s32.totalorder %s4330, 0
  %p4332 = pneg %p4331
  %4334 = shalt.err (%p4332)

</llo_original>
